<compile_context>
chip_gen: v7x
topology: tpu7x:2x2x1
jax: 0.10.0
libtpu: 0.0.40
codegen_flags: <defaults>
</compile_context>

<pallas_src>
import jax
import jax.numpy as jnp
from jax import lax
from jax.experimental import pallas as pl
from jax.experimental.pallas import tpu as pltpu

EPS = 1e-5
LANE = 128


def _conv3x3_im2col(y_hwc, pad_ref, w_mat, H, W, Cp):
    """y_hwc: (H, W, Cp) bf16; pad_ref: (H+2, W+2, Cp) bf16 VMEM scratch;
    w_mat: (9*Cp, Cp) bf16.

    Zeroes only the 1-px halo ring (interior fully overwritten every step),
    builds one (H*W, 9*Cp) tap matrix and performs a SINGLE MXU matmul with
    f32 accumulation.  Returns (H*W, Cp) f32.
    """
    Hp, Wp = H + 2, W + 2
    zrow = jnp.zeros((1, Wp, Cp), pad_ref.dtype)
    zcol = jnp.zeros((Hp, 1, Cp), pad_ref.dtype)
    pad_ref[0:1, :, :] = zrow
    pad_ref[Hp - 1:Hp, :, :] = zrow
    pad_ref[:, 0:1, :] = zcol
    pad_ref[:, Wp - 1:Wp, :] = zcol
    pad_ref[1:H + 1, 1:W + 1, :] = y_hwc

    xp = pad_ref[...]
    # TODO(synk): for H=W=14/7 feature maps, pick row blocks so the flattened
    #             sublane dim stays 8-aligned to avoid an extra tapmat copy.
    taps = [xp[kh:kh + H, kw:kw + W, :] for kh in range(3) for kw in range(3)]
    tapmat = jnp.concatenate(taps, axis=-1).reshape(H * W, 9 * Cp)
    return jnp.dot(tapmat, w_mat, preferred_element_type=jnp.float32)


def conv1_kernel(x_ref, w_ref, out_ref, stats_ref, pad_ref):
    """conv1 on one batch element + per-channel partial sum / sumsq."""
    _, H, W, Cp = x_ref.shape
    acc = _conv3x3_im2col(x_ref[0], pad_ref, w_ref[...], H, W, Cp)   # (H*W, Cp) f32
    stats_ref[0, 0:1, :] = jnp.sum(acc, axis=0, keepdims=True)
    stats_ref[0, 1:2, :] = jnp.sum(acc * acc, axis=0, keepdims=True)
    out_ref[0] = acc.reshape(H, W, Cp).astype(out_ref.dtype)         # bf16 writeback


def bn_relu_conv2_kernel(c1_ref, scale_ref, shift_ref, w_ref,
                         out_ref, stats_ref, pad_ref):
    """BN1 affine + ReLU + conv2 on one batch element + partial stats."""
    _, H, W, Cp = c1_ref.shape
    scale = scale_ref[...].reshape(1, 1, Cp)
    shift = shift_ref[...].reshape(1, 1, Cp)
    y1 = jnp.maximum(c1_ref[0].astype(jnp.float32) * scale + shift, 0.0)
    acc = _conv3x3_im2col(y1.astype(pad_ref.dtype), pad_ref, w_ref[...], H, W, Cp)
    stats_ref[0, 0:1, :] = jnp.sum(acc, axis=0, keepdims=True)
    stats_ref[0, 1:2, :] = jnp.sum(acc * acc, axis=0, keepdims=True)
    out_ref[0] = acc.reshape(H, W, Cp).astype(out_ref.dtype)         # bf16 writeback


def bn_add_relu_kernel(c2_ref, scale_ref, shift_ref, res_ref, out_ref):
    """BN2 affine + residual add + ReLU on a flat lane-dense (rows, Cp) tile."""
    Cp = scale_ref.shape[-1]
    scale = scale_ref[...].reshape(1, Cp)
    shift = shift_ref[...].reshape(1, Cp)
    y = c2_ref[...].astype(jnp.float32) * scale + shift \
        + res_ref[...].astype(jnp.float32)
    out_ref[...] = jnp.maximum(y, 0.0)


def _pick_row_tile(M):
    """Largest lane-dense row tile that divides M and still yields >=2 grid steps."""
    for tr in (2048, 1024, 512, 256, 128, 64, 32, 16, 8):
        if M % tr == 0 and M // tr >= 2:
            return tr
    return M


def basic_block_forward(x_nchw, w1, g1, b1, w2, g2, b2):
    """NCHW in / NCHW out wrapper. Layout glue (one transpose+pad+cast, weight
    packing) and the tiny BN-statistic finalization live in plain JAX."""
    N, C, H, W = x_nchw.shape
    Cout = w1.shape[0]
    assert C == Cout, "BasicBlock with downsample=None requires in_chn == inter_chn"
    # TODO(synk): benchmark unpadded C=64 (half-masked lanes) vs padding to 128
    #             for the MXU-bound v5e path; padding kept here for lane density.
    Cp = ((C + LANE - 1) // LANE) * LANE          # lane-dense channel padding
    M = N * H * W

    cparams = pltpu.CompilerParams(
        dimension_semantics=("parallel",),        # shards the grid over v7x's 2 TCs
        vmem_limit_bytes=32 * 1024 * 1024,        # fits v7x's 64 MiB physical VMEM
    )
    vmem_resident = pl.BlockSpec(memory_space=pltpu.MemorySpace.VMEM)

    # ---- layout glue: ONE bf16 HBM materialization of the input -------------
    x_cp = jnp.pad(jnp.transpose(x_nchw, (0, 2, 3, 1)),
                   ((0, 0), (0, 0), (0, 0), (0, Cp - C))).astype(jnp.bfloat16)

    def pack_w(w):
        # (Cout, Cin, kh, kw) -> (kh, kw, Cin, Cout) -> zero-pad channels -> (9*Cp, Cp)
        wk = jnp.transpose(w, (2, 3, 1, 0))
        wk = jnp.pad(wk, ((0, 0), (0, 0), (0, Cp - C), (0, Cp - Cout)))
        return wk.reshape(9 * Cp, Cp).astype(jnp.bfloat16)

    w1k, w2k = pack_w(w1), pack_w(w2)

    def bn_affine(stats, gamma, beta):
        s = jnp.sum(stats, axis=0)                # (2, Cp): [sum, sumsq]
        mean = s[0] / M
        # NOTE: E[x^2]-E[x]^2 in f32 can cancel if |mean| >> std; fine at these
        # magnitudes (fresh conv outputs), consider a shifted accumulation for
        # very large activations.
        var = s[1] / M - mean * mean              # biased variance (training mode)
        g = jnp.pad(gamma.astype(jnp.float32), (0, Cp - C))   # pad gamma with 0
        b = jnp.pad(beta.astype(jnp.float32), (0, Cp - C))
        scale = g * lax.rsqrt(var + EPS)
        shift = b - mean * scale
        return scale.reshape(1, Cp), shift.reshape(1, Cp)

    # ---- stage 1: conv1 + partial stats --------------------------------------
    conv1_out, stats1 = pl.pallas_call(
        conv1_kernel,
        out_shape=(jax.ShapeDtypeStruct((N, H, W, Cp), jnp.bfloat16),
                   jax.ShapeDtypeStruct((N, 2, Cp), jnp.float32)),
        grid=(N,),
        in_specs=[pl.BlockSpec((1, H, W, Cp), lambda n: (n, 0, 0, 0)),
                  vmem_resident],                       # w1k: resident, not pipelined
        out_specs=[pl.BlockSpec((1, H, W, Cp), lambda n: (n, 0, 0, 0)),
                   pl.BlockSpec((1, 2, Cp), lambda n: (n, 0, 0))],
        scratch_shapes=[pltpu.VMEM((H + 2, W + 2, Cp), jnp.bfloat16)],
        compiler_params=cparams,
    )(x_cp, w1k)

    scale1, shift1 = bn_affine(stats1, g1, b1)

    # ---- stage 2: BN1 + ReLU + conv2 + partial stats --------------------------
    conv2_out, stats2 = pl.pallas_call(
        bn_relu_conv2_kernel,
        out_shape=(jax.ShapeDtypeStruct((N, H, W, Cp), jnp.bfloat16),
                   jax.ShapeDtypeStruct((N, 2, Cp), jnp.float32)),
        grid=(N,),
        in_specs=[pl.BlockSpec((1, H, W, Cp), lambda n: (n, 0, 0, 0)),
                  vmem_resident,                        # scale1
                  vmem_resident,                        # shift1
                  vmem_resident],                       # w2k
        out_specs=[pl.BlockSpec((1, H, W, Cp), lambda n: (n, 0, 0, 0)),
                   pl.BlockSpec((1, 2, Cp), lambda n: (n, 0, 0))],
        scratch_shapes=[pltpu.VMEM((H + 2, W + 2, Cp), jnp.bfloat16)],
        compiler_params=cparams,
    )(conv1_out, scale1, shift1, w2k)

    scale2, shift2 = bn_affine(stats2, g2, b2)

    # ---- stage 3: BN2 + residual + ReLU (flat, lane-dense, row-tiled) ---------
    TR = _pick_row_tile(M)
    out_flat = pl.pallas_call(
        bn_add_relu_kernel,
        out_shape=jax.ShapeDtypeStruct((M, Cp), jnp.float32),
        grid=(M // TR,),
        in_specs=[pl.BlockSpec((TR, Cp), lambda i: (i, 0)),
                  vmem_resident,                        # scale2
                  vmem_resident,                        # shift2
                  pl.BlockSpec((TR, Cp), lambda i: (i, 0))],
        out_specs=pl.BlockSpec((TR, Cp), lambda i: (i, 0)),
        compiler_params=cparams,
    )(conv2_out.reshape(M, Cp), scale2, shift2, x_cp.reshape(M, Cp))

    out_nhwc = out_flat.reshape(N, H, W, Cp)[..., :C]
    return jnp.transpose(out_nhwc, (0, 3, 1, 2))        # back to NCHW


def _reference_forward(x, w1, g1, b1, w2, g2, b2):
    """Pure-JAX f32 reference (NCHW), mirrors the PyTorch module in training mode."""
    def conv(h, w):
        return lax.conv_general_dilated(h, w, window_strides=(1, 1),
                                        padding=((1, 1), (1, 1)),
                                        dimension_numbers=("NCHW", "OIHW", "NCHW"))

    def bn(h, g, b):
        mean = jnp.mean(h, axis=(0, 2, 3), keepdims=True)
        var = jnp.mean((h - mean) ** 2, axis=(0, 2, 3), keepdims=True)
        return (h - mean) * lax.rsqrt(var + EPS) * g.reshape(1, -1, 1, 1) \
               + b.reshape(1, -1, 1, 1)

    out = jnp.maximum(bn(conv(x, w1), g1, b1), 0.0)
    out = bn(conv(out, w2), g2, b2)
    return jnp.maximum(out + x, 0.0)


if __name__ == "__main__":
    # Small shapes consistent with BasicBlock(in_chn=4, inter_chn=4, stride=1)
    N, C, H, W = 2, 4, 16, 16
    key = jax.random.PRNGKey(0)
    kx, kw1, kw2 = jax.random.split(key, 3)

    x = jax.random.normal(kx, (N, C, H, W), jnp.float32)
    fan_in = C * 3 * 3
    w1 = jax.random.normal(kw1, (C, C, 3, 3), jnp.float32) / jnp.sqrt(fan_in)
    w2 = jax.random.normal(kw2, (C, C, 3, 3), jnp.float32) / jnp.sqrt(fan_in)
    g1 = jnp.ones((C,), jnp.float32)
    b1 = jnp.zeros((C,), jnp.float32)
    g2 = jnp.ones((C,), jnp.float32)
    b2 = jnp.zeros((C,), jnp.float32)

    fwd = jax.jit(basic_block_forward)
    out = jax.block_until_ready(fwd(x, w1, g1, b1, w2, g2, b2))
    ref = jax.block_until_ready(_reference_forward(x, w1, g1, b1, w2, g2, b2))

    assert out.shape == (N, C, H, W)
    # bf16 MXU operands + bf16 intermediates/residual (f32 accumulation and BN math)
    # -> slightly looser tolerance vs the pure-f32 reference.
    max_err = jnp.max(jnp.abs(out - ref))
    assert jnp.allclose(out, ref, atol=5e-2, rtol=5e-2), f"max abs err {max_err}"

    print("KERNEL_OK")
</pallas_src>

<mosaic_0001>
module attributes {stable_mosaic.version = 11 : i64} {
  func.func @conv1_kernel(%arg0: i32, %arg1: memref<1x16x16x128xbf16, #tpu.memory_space<vmem>>, %arg2: memref<1152x128xbf16, #tpu.memory_space<vmem>>, %arg3: memref<1x16x16x128xbf16, #tpu.memory_space<vmem>>, %arg4: memref<1x2x128xf32, #tpu.memory_space<vmem>>, %arg5: memref<18x18x128xbf16, #tpu.memory_space<vmem>>) attributes {dimension_semantics = [#tpu.dimension_semantics<parallel>], iteration_bounds = array<i64: 2>, scalar_prefetch = 0 : i64, scratch_operands = 1 : i64, tpu.core_type = #tpu.core_type<tc>, window_params = [{transform_indices = @transform_0, window_bounds = array<i64: 1, 16, 16, 128>}, {pipeline_mode = #tpu.pipeline_mode<synchronous>, transform_indices = @transform_1, window_bounds = array<i64: 1152, 128>}, {transform_indices = @transform_2, window_bounds = array<i64: 1, 16, 16, 128>}, {transform_indices = @transform_3, window_bounds = array<i64: 1, 2, 128>}]} {
    %c0 = arith.constant 0 : index
    %c0_0 = arith.constant 0 : index
    %c0_1 = arith.constant 0 : index
    %c0_2 = arith.constant 0 : index
    %0 = vector.load %arg1[%c0, %c0_0, %c0_1, %c0_2] : memref<1x16x16x128xbf16, #tpu.memory_space<vmem>>, vector<1x16x16x128xbf16>
    %1 = vector.shape_cast %0 : vector<1x16x16x128xbf16> to vector<16x16x128xbf16>
    %c0_3 = arith.constant 0 : index
    %c0_4 = arith.constant 0 : index
    %2 = vector.load %arg2[%c0_3, %c0_4] : memref<1152x128xbf16, #tpu.memory_space<vmem>>, vector<1152x128xbf16>
    %cst = arith.constant 0.000000e+00 : bf16
    %3 = vector.broadcast %cst : bf16 to vector<1x18x128xbf16>
    %cst_5 = arith.constant 0.000000e+00 : bf16
    %4 = vector.broadcast %cst_5 : bf16 to vector<18x1x128xbf16>
    %c0_6 = arith.constant 0 : index
    %c0_7 = arith.constant 0 : index
    %c0_8 = arith.constant 0 : index
    %5 = vector.load %arg5[%c0_6, %c0_7, %c0_8] : memref<18x18x128xbf16, #tpu.memory_space<vmem>>, vector<1x18x128xbf16>
    tpu.vector_store %arg5[%c0_6, %c0_7, %c0_8], %3 {strides = array<i32>} : memref<18x18x128xbf16, #tpu.memory_space<vmem>>, vector<1x18x128xbf16>,
    %c17 = arith.constant 17 : index
    %c0_9 = arith.constant 0 : index
    %c0_10 = arith.constant 0 : index
    %6 = vector.load %arg5[%c17, %c0_9, %c0_10] : memref<18x18x128xbf16, #tpu.memory_space<vmem>>, vector<1x18x128xbf16>
    tpu.vector_store %arg5[%c17, %c0_9, %c0_10], %3 {strides = array<i32>} : memref<18x18x128xbf16, #tpu.memory_space<vmem>>, vector<1x18x128xbf16>,
    %c0_11 = arith.constant 0 : index
    %c0_12 = arith.constant 0 : index
    %c0_13 = arith.constant 0 : index
    %7 = vector.load %arg5[%c0_11, %c0_12, %c0_13] : memref<18x18x128xbf16, #tpu.memory_space<vmem>>, vector<18x1x128xbf16>
    tpu.vector_store %arg5[%c0_11, %c0_12, %c0_13], %4 {strides = array<i32>} : memref<18x18x128xbf16, #tpu.memory_space<vmem>>, vector<18x1x128xbf16>,
    %c0_14 = arith.constant 0 : index
    %c17_15 = arith.constant 17 : index
    %c0_16 = arith.constant 0 : index
    %8 = vector.load %arg5[%c0_14, %c17_15, %c0_16] : memref<18x18x128xbf16, #tpu.memory_space<vmem>>, vector<18x1x128xbf16>
    tpu.vector_store %arg5[%c0_14, %c17_15, %c0_16], %4 {strides = array<i32>} : memref<18x18x128xbf16, #tpu.memory_space<vmem>>, vector<18x1x128xbf16>,
    %c1 = arith.constant 1 : index
    %c1_17 = arith.constant 1 : index
    %c0_18 = arith.constant 0 : index
    %9 = vector.load %arg5[%c1, %c1_17, %c0_18] : memref<18x18x128xbf16, #tpu.memory_space<vmem>>, vector<16x16x128xbf16>
    tpu.vector_store %arg5[%c1, %c1_17, %c0_18], %1 {strides = array<i32>} : memref<18x18x128xbf16, #tpu.memory_space<vmem>>, vector<16x16x128xbf16>,
    %c0_19 = arith.constant 0 : index
    %c0_20 = arith.constant 0 : index
    %c0_21 = arith.constant 0 : index
    %10 = vector.load %arg5[%c0_19, %c0_20, %c0_21] : memref<18x18x128xbf16, #tpu.memory_space<vmem>>, vector<18x18x128xbf16>
    %11 = vector.extract_strided_slice %10 {offsets = [0, 0, 0], sizes = [16, 16, 128], strides = [1, 1, 1]} : vector<18x18x128xbf16> to vector<16x16x128xbf16>
    %12 = vector.extract_strided_slice %10 {offsets = [0, 1, 0], sizes = [16, 16, 128], strides = [1, 1, 1]} : vector<18x18x128xbf16> to vector<16x16x128xbf16>
    %13 = vector.extract_strided_slice %10 {offsets = [0, 2, 0], sizes = [16, 16, 128], strides = [1, 1, 1]} : vector<18x18x128xbf16> to vector<16x16x128xbf16>
    %14 = vector.extract_strided_slice %10 {offsets = [1, 0, 0], sizes = [16, 16, 128], strides = [1, 1, 1]} : vector<18x18x128xbf16> to vector<16x16x128xbf16>
    %15 = vector.extract_strided_slice %10 {offsets = [1, 1, 0], sizes = [16, 16, 128], strides = [1, 1, 1]} : vector<18x18x128xbf16> to vector<16x16x128xbf16>
    %16 = vector.extract_strided_slice %10 {offsets = [1, 2, 0], sizes = [16, 16, 128], strides = [1, 1, 1]} : vector<18x18x128xbf16> to vector<16x16x128xbf16>
    %17 = vector.extract_strided_slice %10 {offsets = [2, 0, 0], sizes = [16, 16, 128], strides = [1, 1, 1]} : vector<18x18x128xbf16> to vector<16x16x128xbf16>
    %18 = vector.extract_strided_slice %10 {offsets = [2, 1, 0], sizes = [16, 16, 128], strides = [1, 1, 1]} : vector<18x18x128xbf16> to vector<16x16x128xbf16>
    %19 = vector.extract_strided_slice %10 {offsets = [2, 2, 0], sizes = [16, 16, 128], strides = [1, 1, 1]} : vector<18x18x128xbf16> to vector<16x16x128xbf16>
    %20 = tpu.concatenate %11, %12, %13, %14, %15, %16, %17, %18, %19 in 2 : vector<16x16x128xbf16>, vector<16x16x128xbf16>, vector<16x16x128xbf16>, vector<16x16x128xbf16>, vector<16x16x128xbf16>, vector<16x16x128xbf16>, vector<16x16x128xbf16>, vector<16x16x128xbf16>, vector<16x16x128xbf16> -> vector<16x16x1152xbf16>
    %21 = vector.shape_cast %20 : vector<16x16x1152xbf16> to vector<256x1152xbf16>
    %cst_22 = arith.constant dense<0.000000e+00> : vector<256x128xf32>
    %22 = tpu.matmul %21, %2, %cst_22 {dimension_numbers = #tpu.dot_dimension_numbers<[1], [0], [0], [1], [0, 0, 1, 1], [], []>} : vector<256x1152xbf16>, vector<1152x128xbf16>, vector<256x128xf32> -> vector<256x128xf32>
    %cst_23 = arith.constant dense<0.000000e+00> : vector<128xf32>
    %23 = vector.multi_reduction <add>, %22, %cst_23 [0] : vector<256x128xf32> to vector<128xf32>
    %24 = vector.shape_cast %23 : vector<128xf32> to vector<1x128xf32>
    %c0_24 = arith.constant 0 : index
    %c0_25 = arith.constant 0 : index
    %c0_26 = arith.constant 0 : index
    %25 = vector.load %arg4[%c0_24, %c0_25, %c0_26] : memref<1x2x128xf32, #tpu.memory_space<vmem>>, vector<1x1x128xf32>
    %26 = vector.shape_cast %25 : vector<1x1x128xf32> to vector<1x128xf32>
    %27 = vector.shape_cast %24 : vector<1x128xf32> to vector<1x1x128xf32>
    tpu.vector_store %arg4[%c0_24, %c0_25, %c0_26], %27 {strides = array<i32>} : memref<1x2x128xf32, #tpu.memory_space<vmem>>, vector<1x1x128xf32>,
    %28 = arith.mulf %22, %22 : vector<256x128xf32>
    %cst_27 = arith.constant dense<0.000000e+00> : vector<128xf32>
    %29 = vector.multi_reduction <add>, %28, %cst_27 [0] : vector<256x128xf32> to vector<128xf32>
    %30 = vector.shape_cast %29 : vector<128xf32> to vector<1x128xf32>
    %c0_28 = arith.constant 0 : index
    %c1_29 = arith.constant 1 : index
    %c0_30 = arith.constant 0 : index
    %31 = vector.load %arg4[%c0_28, %c1_29, %c0_30] : memref<1x2x128xf32, #tpu.memory_space<vmem>>, vector<1x1x128xf32>
    %32 = vector.shape_cast %31 : vector<1x1x128xf32> to vector<1x128xf32>
    %33 = vector.shape_cast %30 : vector<1x128xf32> to vector<1x1x128xf32>
    tpu.vector_store %arg4[%c0_28, %c1_29, %c0_30], %33 {strides = array<i32>} : memref<1x2x128xf32, #tpu.memory_space<vmem>>, vector<1x1x128xf32>,
    %34 = vector.shape_cast %22 : vector<256x128xf32> to vector<16x16x128xf32>
    %35 = arith.truncf %34 : vector<16x16x128xf32> to vector<16x16x128xbf16>
    %c0_31 = arith.constant 0 : index
    %c0_32 = arith.constant 0 : index
    %c0_33 = arith.constant 0 : index
    %c0_34 = arith.constant 0 : index
    %36 = vector.load %arg3[%c0_31, %c0_32, %c0_33, %c0_34] : memref<1x16x16x128xbf16, #tpu.memory_space<vmem>>, vector<1x16x16x128xbf16>
    %37 = vector.shape_cast %36 : vector<1x16x16x128xbf16> to vector<16x16x128xbf16>
    %38 = vector.shape_cast %35 : vector<16x16x128xbf16> to vector<1x16x16x128xbf16>
    tpu.vector_store %arg3[%c0_31, %c0_32, %c0_33, %c0_34], %38 {strides = array<i32>} : memref<1x16x16x128xbf16, #tpu.memory_space<vmem>>, vector<1x16x16x128xbf16>,
    return
  }
  func.func @transform_0(%arg0: i32) -> (i32, i32, i32, i32) {
    %c0_i32 = arith.constant 0 : i32
    %c0_i32_0 = arith.constant 0 : i32
    %c0_i32_1 = arith.constant 0 : i32
    %c0_i32_2 = arith.constant 0 : i32
    return %arg0, %c0_i32, %c0_i32_0, %c0_i32_1 : i32, i32, i32, i32
  }
  func.func @transform_1(%arg0: i32) -> (i32, i32) {
    %c0_i32 = arith.constant 0 : i32
    %c0_i32_0 = arith.constant 0 : i32
    %c0_i32_1 = arith.constant 0 : i32
    return %c0_i32, %c0_i32_0 : i32, i32
  }
  func.func @transform_2(%arg0: i32) -> (i32, i32, i32, i32) {
    %c0_i32 = arith.constant 0 : i32
    %c0_i32_0 = arith.constant 0 : i32
    %c0_i32_1 = arith.constant 0 : i32
    %c0_i32_2 = arith.constant 0 : i32
    return %arg0, %c0_i32, %c0_i32_0, %c0_i32_1 : i32, i32, i32, i32
  }
  func.func @transform_3(%arg0: i32) -> (i32, i32, i32) {
    %c0_i32 = arith.constant 0 : i32
    %c0_i32_0 = arith.constant 0 : i32
    %c0_i32_1 = arith.constant 0 : i32
    return %arg0, %c0_i32, %c0_i32_0 : i32, i32, i32
  }
}

module attributes {stable_mosaic.version = 11 : i64} {
  func.func @bn_add_relu_kernel(%arg0: i32, %arg1: memref<256x128xbf16, #tpu.memory_space<vmem>>, %arg2: memref<1x128xf32, #tpu.memory_space<vmem>>, %arg3: memref<1x128xf32, #tpu.memory_space<vmem>>, %arg4: memref<256x128xbf16, #tpu.memory_space<vmem>>, %arg5: memref<256x128xf32, #tpu.memory_space<vmem>>) attributes {dimension_semantics = [#tpu.dimension_semantics<parallel>], iteration_bounds = array<i64: 2>, scalar_prefetch = 0 : i64, scratch_operands = 0 : i64, tpu.core_type = #tpu.core_type<tc>, window_params = [{transform_indices = @transform_0, window_bounds = array<i64: 256, 128>}, {pipeline_mode = #tpu.pipeline_mode<synchronous>, transform_indices = @transform_1, window_bounds = array<i64: 1, 128>}, {pipeline_mode = #tpu.pipeline_mode<synchronous>, transform_indices = @transform_2, window_bounds = array<i64: 1, 128>}, {transform_indices = @transform_3, window_bounds = array<i64: 256, 128>}, {transform_indices = @transform_4, window_bounds = array<i64: 256, 128>}]} {
    %c0 = arith.constant 0 : index
    %c0_0 = arith.constant 0 : index
    %0 = vector.load %arg2[%c0, %c0_0] : memref<1x128xf32, #tpu.memory_space<vmem>>, vector<1x128xf32>
    %c0_1 = arith.constant 0 : index
    %c0_2 = arith.constant 0 : index
    %1 = vector.load %arg3[%c0_1, %c0_2] : memref<1x128xf32, #tpu.memory_space<vmem>>, vector<1x128xf32>
    %c0_3 = arith.constant 0 : index
    %c0_4 = arith.constant 0 : index
    %2 = vector.load %arg1[%c0_3, %c0_4] : memref<256x128xbf16, #tpu.memory_space<vmem>>, vector<256x128xbf16>
    %3 = arith.extf %2 : vector<256x128xbf16> to vector<256x128xf32>
    %4 = vector.broadcast %0 : vector<1x128xf32> to vector<256x128xf32>
    %5 = arith.mulf %3, %4 : vector<256x128xf32>
    %6 = vector.broadcast %1 : vector<1x128xf32> to vector<256x128xf32>
    %7 = arith.addf %5, %6 : vector<256x128xf32>
    %c0_5 = arith.constant 0 : index
    %c0_6 = arith.constant 0 : index
    %8 = vector.load %arg4[%c0_5, %c0_6] : memref<256x128xbf16, #tpu.memory_space<vmem>>, vector<256x128xbf16>
    %9 = arith.extf %8 : vector<256x128xbf16> to vector<256x128xf32>
    %10 = arith.addf %7, %9 : vector<256x128xf32>
    %cst = arith.constant 0.000000e+00 : f32
    %11 = vector.broadcast %cst : f32 to vector<256x128xf32>
    %12 = arith.maximumf %10, %11 : vector<256x128xf32>
    %c0_7 = arith.constant 0 : index
    %c0_8 = arith.constant 0 : index
    %13 = vector.load %arg5[%c0_7, %c0_8] : memref<256x128xf32, #tpu.memory_space<vmem>>, vector<256x128xf32>
    tpu.vector_store %arg5[%c0_7, %c0_8], %12 {strides = array<i32>} : memref<256x128xf32, #tpu.memory_space<vmem>>, vector<256x128xf32>,
    return
  }
  func.func @transform_0(%arg0: i32) -> (i32, i32) {
    %c0_i32 = arith.constant 0 : i32
    %c0_i32_0 = arith.constant 0 : i32
    return %arg0, %c0_i32 : i32, i32
  }
  func.func @transform_1(%arg0: i32) -> (i32, i32) {
    %c0_i32 = arith.constant 0 : i32
    %c0_i32_0 = arith.constant 0 : i32
    %c0_i32_1 = arith.constant 0 : i32
    return %c0_i32, %c0_i32_0 : i32, i32
  }
  func.func @transform_2(%arg0: i32) -> (i32, i32) {
    %c0_i32 = arith.constant 0 : i32
    %c0_i32_0 = arith.constant 0 : i32
    %c0_i32_1 = arith.constant 0 : i32
    return %c0_i32, %c0_i32_0 : i32, i32
  }
  func.func @transform_3(%arg0: i32) -> (i32, i32) {
    %c0_i32 = arith.constant 0 : i32
    %c0_i32_0 = arith.constant 0 : i32
    return %arg0, %c0_i32 : i32, i32
  }
  func.func @transform_4(%arg0: i32) -> (i32, i32) {
    %c0_i32 = arith.constant 0 : i32
    %c0_i32_0 = arith.constant 0 : i32
    return %arg0, %c0_i32 : i32, i32
  }
}

module attributes {stable_mosaic.version = 11 : i64} {
  func.func @bn_relu_conv2_kernel(%arg0: i32, %arg1: memref<1x16x16x128xbf16, #tpu.memory_space<vmem>>, %arg2: memref<1x128xf32, #tpu.memory_space<vmem>>, %arg3: memref<1x128xf32, #tpu.memory_space<vmem>>, %arg4: memref<1152x128xbf16, #tpu.memory_space<vmem>>, %arg5: memref<1x16x16x128xbf16, #tpu.memory_space<vmem>>, %arg6: memref<1x2x128xf32, #tpu.memory_space<vmem>>, %arg7: memref<18x18x128xbf16, #tpu.memory_space<vmem>>) attributes {dimension_semantics = [#tpu.dimension_semantics<parallel>], iteration_bounds = array<i64: 2>, scalar_prefetch = 0 : i64, scratch_operands = 1 : i64, tpu.core_type = #tpu.core_type<tc>, window_params = [{transform_indices = @transform_0, window_bounds = array<i64: 1, 16, 16, 128>}, {pipeline_mode = #tpu.pipeline_mode<synchronous>, transform_indices = @transform_1, window_bounds = array<i64: 1, 128>}, {pipeline_mode = #tpu.pipeline_mode<synchronous>, transform_indices = @transform_2, window_bounds = array<i64: 1, 128>}, {pipeline_mode = #tpu.pipeline_mode<synchronous>, transform_indices = @transform_3, window_bounds = array<i64: 1152, 128>}, {transform_indices = @transform_4, window_bounds = array<i64: 1, 16, 16, 128>}, {transform_indices = @transform_5, window_bounds = array<i64: 1, 2, 128>}]} {
    %c0 = arith.constant 0 : index
    %c0_0 = arith.constant 0 : index
    %0 = vector.load %arg2[%c0, %c0_0] : memref<1x128xf32, #tpu.memory_space<vmem>>, vector<1x128xf32>
    %1 = vector.shape_cast %0 : vector<1x128xf32> to vector<1x1x128xf32>
    %c0_1 = arith.constant 0 : index
    %c0_2 = arith.constant 0 : index
    %2 = vector.load %arg3[%c0_1, %c0_2] : memref<1x128xf32, #tpu.memory_space<vmem>>, vector<1x128xf32>
    %3 = vector.shape_cast %2 : vector<1x128xf32> to vector<1x1x128xf32>
    %c0_3 = arith.constant 0 : index
    %c0_4 = arith.constant 0 : index
    %c0_5 = arith.constant 0 : index
    %c0_6 = arith.constant 0 : index
    %4 = vector.load %arg1[%c0_3, %c0_4, %c0_5, %c0_6] : memref<1x16x16x128xbf16, #tpu.memory_space<vmem>>, vector<1x16x16x128xbf16>
    %5 = vector.shape_cast %4 : vector<1x16x16x128xbf16> to vector<16x16x128xbf16>
    %6 = arith.extf %5 : vector<16x16x128xbf16> to vector<16x16x128xf32>
    %7 = vector.broadcast %1 : vector<1x1x128xf32> to vector<16x16x128xf32>
    %8 = arith.mulf %6, %7 : vector<16x16x128xf32>
    %9 = vector.broadcast %3 : vector<1x1x128xf32> to vector<16x16x128xf32>
    %10 = arith.addf %8, %9 : vector<16x16x128xf32>
    %cst = arith.constant 0.000000e+00 : f32
    %11 = vector.broadcast %cst : f32 to vector<16x16x128xf32>
    %12 = arith.maximumf %10, %11 : vector<16x16x128xf32>
    %13 = arith.truncf %12 : vector<16x16x128xf32> to vector<16x16x128xbf16>
    %c0_7 = arith.constant 0 : index
    %c0_8 = arith.constant 0 : index
    %14 = vector.load %arg4[%c0_7, %c0_8] : memref<1152x128xbf16, #tpu.memory_space<vmem>>, vector<1152x128xbf16>
    %cst_9 = arith.constant 0.000000e+00 : bf16
    %15 = vector.broadcast %cst_9 : bf16 to vector<1x18x128xbf16>
    %cst_10 = arith.constant 0.000000e+00 : bf16
    %16 = vector.broadcast %cst_10 : bf16 to vector<18x1x128xbf16>
    %c0_11 = arith.constant 0 : index
    %c0_12 = arith.constant 0 : index
    %c0_13 = arith.constant 0 : index
    %17 = vector.load %arg7[%c0_11, %c0_12, %c0_13] : memref<18x18x128xbf16, #tpu.memory_space<vmem>>, vector<1x18x128xbf16>
    tpu.vector_store %arg7[%c0_11, %c0_12, %c0_13], %15 {strides = array<i32>} : memref<18x18x128xbf16, #tpu.memory_space<vmem>>, vector<1x18x128xbf16>,
    %c17 = arith.constant 17 : index
    %c0_14 = arith.constant 0 : index
    %c0_15 = arith.constant 0 : index
    %18 = vector.load %arg7[%c17, %c0_14, %c0_15] : memref<18x18x128xbf16, #tpu.memory_space<vmem>>, vector<1x18x128xbf16>
    tpu.vector_store %arg7[%c17, %c0_14, %c0_15], %15 {strides = array<i32>} : memref<18x18x128xbf16, #tpu.memory_space<vmem>>, vector<1x18x128xbf16>,
    %c0_16 = arith.constant 0 : index
    %c0_17 = arith.constant 0 : index
    %c0_18 = arith.constant 0 : index
    %19 = vector.load %arg7[%c0_16, %c0_17, %c0_18] : memref<18x18x128xbf16, #tpu.memory_space<vmem>>, vector<18x1x128xbf16>
    tpu.vector_store %arg7[%c0_16, %c0_17, %c0_18], %16 {strides = array<i32>} : memref<18x18x128xbf16, #tpu.memory_space<vmem>>, vector<18x1x128xbf16>,
    %c0_19 = arith.constant 0 : index
    %c17_20 = arith.constant 17 : index
    %c0_21 = arith.constant 0 : index
    %20 = vector.load %arg7[%c0_19, %c17_20, %c0_21] : memref<18x18x128xbf16, #tpu.memory_space<vmem>>, vector<18x1x128xbf16>
    tpu.vector_store %arg7[%c0_19, %c17_20, %c0_21], %16 {strides = array<i32>} : memref<18x18x128xbf16, #tpu.memory_space<vmem>>, vector<18x1x128xbf16>,
    %c1 = arith.constant 1 : index
    %c1_22 = arith.constant 1 : index
    %c0_23 = arith.constant 0 : index
    %21 = vector.load %arg7[%c1, %c1_22, %c0_23] : memref<18x18x128xbf16, #tpu.memory_space<vmem>>, vector<16x16x128xbf16>
    tpu.vector_store %arg7[%c1, %c1_22, %c0_23], %13 {strides = array<i32>} : memref<18x18x128xbf16, #tpu.memory_space<vmem>>, vector<16x16x128xbf16>,
    %c0_24 = arith.constant 0 : index
    %c0_25 = arith.constant 0 : index
    %c0_26 = arith.constant 0 : index
    %22 = vector.load %arg7[%c0_24, %c0_25, %c0_26] : memref<18x18x128xbf16, #tpu.memory_space<vmem>>, vector<18x18x128xbf16>
    %23 = vector.extract_strided_slice %22 {offsets = [0, 0, 0], sizes = [16, 16, 128], strides = [1, 1, 1]} : vector<18x18x128xbf16> to vector<16x16x128xbf16>
    %24 = vector.extract_strided_slice %22 {offsets = [0, 1, 0], sizes = [16, 16, 128], strides = [1, 1, 1]} : vector<18x18x128xbf16> to vector<16x16x128xbf16>
    %25 = vector.extract_strided_slice %22 {offsets = [0, 2, 0], sizes = [16, 16, 128], strides = [1, 1, 1]} : vector<18x18x128xbf16> to vector<16x16x128xbf16>
    %26 = vector.extract_strided_slice %22 {offsets = [1, 0, 0], sizes = [16, 16, 128], strides = [1, 1, 1]} : vector<18x18x128xbf16> to vector<16x16x128xbf16>
    %27 = vector.extract_strided_slice %22 {offsets = [1, 1, 0], sizes = [16, 16, 128], strides = [1, 1, 1]} : vector<18x18x128xbf16> to vector<16x16x128xbf16>
    %28 = vector.extract_strided_slice %22 {offsets = [1, 2, 0], sizes = [16, 16, 128], strides = [1, 1, 1]} : vector<18x18x128xbf16> to vector<16x16x128xbf16>
    %29 = vector.extract_strided_slice %22 {offsets = [2, 0, 0], sizes = [16, 16, 128], strides = [1, 1, 1]} : vector<18x18x128xbf16> to vector<16x16x128xbf16>
    %30 = vector.extract_strided_slice %22 {offsets = [2, 1, 0], sizes = [16, 16, 128], strides = [1, 1, 1]} : vector<18x18x128xbf16> to vector<16x16x128xbf16>
    %31 = vector.extract_strided_slice %22 {offsets = [2, 2, 0], sizes = [16, 16, 128], strides = [1, 1, 1]} : vector<18x18x128xbf16> to vector<16x16x128xbf16>
    %32 = tpu.concatenate %23, %24, %25, %26, %27, %28, %29, %30, %31 in 2 : vector<16x16x128xbf16>, vector<16x16x128xbf16>, vector<16x16x128xbf16>, vector<16x16x128xbf16>, vector<16x16x128xbf16>, vector<16x16x128xbf16>, vector<16x16x128xbf16>, vector<16x16x128xbf16>, vector<16x16x128xbf16> -> vector<16x16x1152xbf16>
    %33 = vector.shape_cast %32 : vector<16x16x1152xbf16> to vector<256x1152xbf16>
    %cst_27 = arith.constant dense<0.000000e+00> : vector<256x128xf32>
    %34 = tpu.matmul %33, %14, %cst_27 {dimension_numbers = #tpu.dot_dimension_numbers<[1], [0], [0], [1], [0, 0, 1, 1], [], []>} : vector<256x1152xbf16>, vector<1152x128xbf16>, vector<256x128xf32> -> vector<256x128xf32>
    %cst_28 = arith.constant dense<0.000000e+00> : vector<128xf32>
    %35 = vector.multi_reduction <add>, %34, %cst_28 [0] : vector<256x128xf32> to vector<128xf32>
    %36 = vector.shape_cast %35 : vector<128xf32> to vector<1x128xf32>
    %c0_29 = arith.constant 0 : index
    %c0_30 = arith.constant 0 : index
    %c0_31 = arith.constant 0 : index
    %37 = vector.load %arg6[%c0_29, %c0_30, %c0_31] : memref<1x2x128xf32, #tpu.memory_space<vmem>>, vector<1x1x128xf32>
    %38 = vector.shape_cast %37 : vector<1x1x128xf32> to vector<1x128xf32>
    %39 = vector.shape_cast %36 : vector<1x128xf32> to vector<1x1x128xf32>
    tpu.vector_store %arg6[%c0_29, %c0_30, %c0_31], %39 {strides = array<i32>} : memref<1x2x128xf32, #tpu.memory_space<vmem>>, vector<1x1x128xf32>,
    %40 = arith.mulf %34, %34 : vector<256x128xf32>
    %cst_32 = arith.constant dense<0.000000e+00> : vector<128xf32>
    %41 = vector.multi_reduction <add>, %40, %cst_32 [0] : vector<256x128xf32> to vector<128xf32>
    %42 = vector.shape_cast %41 : vector<128xf32> to vector<1x128xf32>
    %c0_33 = arith.constant 0 : index
    %c1_34 = arith.constant 1 : index
    %c0_35 = arith.constant 0 : index
    %43 = vector.load %arg6[%c0_33, %c1_34, %c0_35] : memref<1x2x128xf32, #tpu.memory_space<vmem>>, vector<1x1x128xf32>
    %44 = vector.shape_cast %43 : vector<1x1x128xf32> to vector<1x128xf32>
    %45 = vector.shape_cast %42 : vector<1x128xf32> to vector<1x1x128xf32>
    tpu.vector_store %arg6[%c0_33, %c1_34, %c0_35], %45 {strides = array<i32>} : memref<1x2x128xf32, #tpu.memory_space<vmem>>, vector<1x1x128xf32>,
    %46 = vector.shape_cast %34 : vector<256x128xf32> to vector<16x16x128xf32>
    %47 = arith.truncf %46 : vector<16x16x128xf32> to vector<16x16x128xbf16>
    %c0_36 = arith.constant 0 : index
    %c0_37 = arith.constant 0 : index
    %c0_38 = arith.constant 0 : index
    %c0_39 = arith.constant 0 : index
    %48 = vector.load %arg5[%c0_36, %c0_37, %c0_38, %c0_39] : memref<1x16x16x128xbf16, #tpu.memory_space<vmem>>, vector<1x16x16x128xbf16>
    %49 = vector.shape_cast %48 : vector<1x16x16x128xbf16> to vector<16x16x128xbf16>
    %50 = vector.shape_cast %47 : vector<16x16x128xbf16> to vector<1x16x16x128xbf16>
    tpu.vector_store %arg5[%c0_36, %c0_37, %c0_38, %c0_39], %50 {strides = array<i32>} : memref<1x16x16x128xbf16, #tpu.memory_space<vmem>>, vector<1x16x16x128xbf16>,
    return
  }
  func.func @transform_0(%arg0: i32) -> (i32, i32, i32, i32) {
    %c0_i32 = arith.constant 0 : i32
    %c0_i32_0 = arith.constant 0 : i32
    %c0_i32_1 = arith.constant 0 : i32
    %c0_i32_2 = arith.constant 0 : i32
    return %arg0, %c0_i32, %c0_i32_0, %c0_i32_1 : i32, i32, i32, i32
  }
  func.func @transform_1(%arg0: i32) -> (i32, i32) {
    %c0_i32 = arith.constant 0 : i32
    %c0_i32_0 = arith.constant 0 : i32
    %c0_i32_1 = arith.constant 0 : i32
    return %c0_i32, %c0_i32_0 : i32, i32
  }
  func.func @transform_2(%arg0: i32) -> (i32, i32) {
    %c0_i32 = arith.constant 0 : i32
    %c0_i32_0 = arith.constant 0 : i32
    %c0_i32_1 = arith.constant 0 : i32
    return %c0_i32, %c0_i32_0 : i32, i32
  }
  func.func @transform_3(%arg0: i32) -> (i32, i32) {
    %c0_i32 = arith.constant 0 : i32
    %c0_i32_0 = arith.constant 0 : i32
    %c0_i32_1 = arith.constant 0 : i32
    return %c0_i32, %c0_i32_0 : i32, i32
  }
  func.func @transform_4(%arg0: i32) -> (i32, i32, i32, i32) {
    %c0_i32 = arith.constant 0 : i32
    %c0_i32_0 = arith.constant 0 : i32
    %c0_i32_1 = arith.constant 0 : i32
    %c0_i32_2 = arith.constant 0 : i32
    return %arg0, %c0_i32, %c0_i32_0, %c0_i32_1 : i32, i32, i32, i32
  }
  func.func @transform_5(%arg0: i32) -> (i32, i32, i32) {
    %c0_i32 = arith.constant 0 : i32
    %c0_i32_0 = arith.constant 0 : i32
    %c0_i32_1 = arith.constant 0 : i32
    return %arg0, %c0_i32, %c0_i32_0 : i32, i32, i32
  }
}

</mosaic_0001>

<llo_original>
// kernel: basic_block_forward.5
$region0: #{basic_block_forward.5}
  #allocation0 [shape = 'u32[]', space=smem, size = 0x4, offset = 0x4, fixed_abs, tag = 'smem constant byte address 0x4 - core index']
  #allocation1 [shape = 'u32[144,128]{1,0:T(1,128)}', space=vmem, size = 0x12000, scoped, tag = 'internal scratch']
  %s0 = inlined_call_operand.vmem [shape: bf16[512,128], index: 0, kind: input, shape index: {}]
  %s1 = inlined_call_operand.vmem [shape: f32[1,128], index: 1, kind: input, shape index: {}]
  %s2 = inlined_call_operand.vmem [shape: f32[1,128], index: 2, kind: input, shape index: {}]
  %s3 = inlined_call_operand.vmem [shape: bf16[512,128], index: 3, kind: input, shape index: {}]
  %s4 = inlined_call_operand.vmem [shape: f32[512,128], index: 4, kind: output, shape index: {}]
  %s5 = sld [smem:[#allocation0]]
  $region49: #{basic_block_forward.5} parent=0
    _
  %s7 = ssub.s32 1, %s5
  %s8 = scalar_select 0, %s7, %s5
  loop: start=0, step=1, limit=4
  $region2: #{basic_block_forward.5} parent=0 // loop_pre_header
    _
  $region3: #{basic_block_forward.5} parent=0 // loop_header
    %s10 = sphi 0, %s14
    %p11 = scmp.ge.s32.totalorder %s10, 4
    %s20 = sphi 0, %s22
    %s23 = sphi 0, %s20
    %s24 = sphi 0, %s23
    %s40 = sphi 0, %s24
    %s44 = sphi 0, %s44
    %s46 = sphi 0, %s44
    %s47 = sphi 0, %s46
    %s61 = sphi 0, %s47
    %s65 = sphi 0, %s65
    %s67 = sphi 0, %s65
    %s68 = sphi 0, %s67
    %s82 = sphi 0, %s68
    %s88 = sphi 0, %s90
    %s91 = sphi 0, %s88
    %s92 = sphi 0, %s91
    %s108 = sphi 0, %s92
    %s114 = sphi 0, %s116
    %s117 = sphi 0, %s114
    %s118 = sphi 0, %s117
    %s134 = sphi 0, %s118
  $region4: #{basic_block_forward.5} parent=0 // loop_header_branch
    %13 = sbr.rel (%p11) target = $region8
  $region5: #{basic_block_forward.5} parent=0 // loop_body
    %s15 = ssub.s32 %s10, 1
    %s16 = ssub.s32 %s10, 2
    %s17 = sadd.s32 %s10, 1
    %s18 = ssub.s32 %s10, %s17
    %p19 = scmp.eq.s32.totalorder %s18, 0
    %s21 = sadd.s32 %s20, 1
    %s22 = scalar_select %p19, %s20, %s21
    %p25 = pneg %p19
    %p26 = scmp.eq.s32.totalorder %s10, 1
    %p27 = por %p25, %p26
    %p28 = scmp.ne.s32.totalorder %s20, %s23
    %p29 = scmp.eq.s32.totalorder %s10, 0
    %p30 = por %p28, %p29
    %p31 = scmp.ne.s32.totalorder %s20, %s23
    %p32 = scmp.eq.s32.totalorder %s15, 1
    %p33 = por %p31, %p32
    %p34 = scmp.ne.s32.totalorder %s23, %s24
    %p35 = scmp.eq.s32.totalorder %s15, 0
    %p36 = por %p34, %p35
    %p37 = scmp.ne.s32.totalorder %s23, %s24
    %p38 = scmp.eq.s32.totalorder %s16, 1
    %p39 = por %p37, %p38
    %p41 = scmp.ne.s32.totalorder %s24, %s40
    %p42 = scmp.eq.s32.totalorder %s16, 0
    %p43 = por %p41, %p42
    %s45 = sadd.s32 %s44, 1
    %p48 = scmp.eq.s32.totalorder %s10, 1
    %p49 = scmp.ne.s32.totalorder %s44, %s46
    %p50 = scmp.eq.s32.totalorder %s10, 0
    %p51 = por %p49, %p50
    %p52 = scmp.ne.s32.totalorder %s44, %s46
    %p53 = scmp.eq.s32.totalorder %s15, 1
    %p54 = por %p52, %p53
    %p55 = scmp.ne.s32.totalorder %s46, %s47
    %p56 = scmp.eq.s32.totalorder %s15, 0
    %p57 = por %p55, %p56
    %p58 = scmp.ne.s32.totalorder %s46, %s47
    %p59 = scmp.eq.s32.totalorder %s16, 1
    %p60 = por %p58, %p59
    %p62 = scmp.ne.s32.totalorder %s47, %s61
    %p63 = scmp.eq.s32.totalorder %s16, 0
    %p64 = por %p62, %p63
    %s66 = sadd.s32 %s65, 1
    %p69 = scmp.eq.s32.totalorder %s10, 1
    %p70 = scmp.ne.s32.totalorder %s65, %s67
    %p71 = scmp.eq.s32.totalorder %s10, 0
    %p72 = por %p70, %p71
    %p73 = scmp.ne.s32.totalorder %s65, %s67
    %p74 = scmp.eq.s32.totalorder %s15, 1
    %p75 = por %p73, %p74
    %p76 = scmp.ne.s32.totalorder %s67, %s68
    %p77 = scmp.eq.s32.totalorder %s15, 0
    %p78 = por %p76, %p77
    %p79 = scmp.ne.s32.totalorder %s67, %s68
    %p80 = scmp.eq.s32.totalorder %s16, 1
    %p81 = por %p79, %p80
    %p83 = scmp.ne.s32.totalorder %s68, %s82
    %p84 = scmp.eq.s32.totalorder %s16, 0
    %p85 = por %p83, %p84
    %s86 = ssub.s32 %s10, %s17
    %p87 = scmp.eq.s32.totalorder %s86, 0
    %s89 = sadd.s32 %s88, 1
    %s90 = scalar_select %p87, %s88, %s89
    %p93 = pneg %p87
    %p94 = scmp.eq.s32.totalorder %s10, 1
    %p95 = por %p93, %p94
    %p96 = scmp.ne.s32.totalorder %s88, %s91
    %p97 = scmp.eq.s32.totalorder %s10, 0
    %p98 = por %p96, %p97
    %p99 = scmp.ne.s32.totalorder %s88, %s91
    %p100 = scmp.eq.s32.totalorder %s15, 1
    %p101 = por %p99, %p100
    %p102 = scmp.ne.s32.totalorder %s91, %s92
    %p103 = scmp.eq.s32.totalorder %s15, 0
    %p104 = por %p102, %p103
    %p105 = scmp.ne.s32.totalorder %s91, %s92
    %p106 = scmp.eq.s32.totalorder %s16, 1
    %p107 = por %p105, %p106
    %p109 = scmp.ne.s32.totalorder %s92, %s108
    %p110 = scmp.eq.s32.totalorder %s16, 0
    %p111 = por %p109, %p110
    %s112 = ssub.s32 %s10, %s17
    %p113 = scmp.eq.s32.totalorder %s112, 0
    %s115 = sadd.s32 %s114, 1
    %s116 = scalar_select %p113, %s114, %s115
    %p119 = pneg %p113
    %p120 = scmp.eq.s32.totalorder %s10, 1
    %p121 = por %p119, %p120
    %p122 = scmp.ne.s32.totalorder %s114, %s117
    %p123 = scmp.eq.s32.totalorder %s10, 0
    %p124 = por %p122, %p123
    %p125 = scmp.ne.s32.totalorder %s114, %s117
    %p126 = scmp.eq.s32.totalorder %s15, 1
    %p127 = por %p125, %p126
    %p128 = scmp.ne.s32.totalorder %s117, %s118
    %p129 = scmp.eq.s32.totalorder %s15, 0
    %p130 = por %p128, %p129
    %p131 = scmp.ne.s32.totalorder %s117, %s118
    %p132 = scmp.eq.s32.totalorder %s16, 1
    %p133 = por %p131, %p132
    %p135 = scmp.ne.s32.totalorder %s118, %s134
    %p136 = scmp.eq.s32.totalorder %s16, 0
    %p137 = por %p135, %p136
    %p138 = scmp.le.s32.totalorder 1, %s10
    %p139 = scmp.lt.s32.totalorder %s10, 3
    %p140 = pnand %p138, %p139
    %p141 = pneg %p140
    // Predicated region
    $region9: #{basic_block_forward.5} parent=5 // pred_check
      _
    $region10: #{basic_block_forward.5} parent=5 // pred_check_branch
      %143 = sbr.rel (%p140) target = $region12
    $region11: #{basic_block_forward.5} parent=5 // pred_region
      %s144 = ssub.s32 %s10, 1
      // Predicated region
      $region13: #{basic_block_forward.5} parent=11 // pred_check
        %p145 = pneg %p57
      $region14: #{basic_block_forward.5} parent=11 // pred_check_branch
        %147 = sbr.rel (%p145) target = $region16
      $region15: #{basic_block_forward.5} parent=11 // pred_region
        _
      $region16: #{basic_block_forward.5} parent=11 // pred_fallthru
        _
      // Predicated region
      $region17: #{basic_block_forward.5} parent=11 // pred_check
        %p148 = pneg %p78
      $region18: #{basic_block_forward.5} parent=11 // pred_check_branch
        %150 = sbr.rel (%p148) target = $region20
      $region19: #{basic_block_forward.5} parent=11 // pred_region
        _
      $region20: #{basic_block_forward.5} parent=11 // pred_fallthru
        _
    $region12: #{basic_block_forward.5} parent=5 // pred_fallthru
      _
    %p151 = scmp.lt.s32.totalorder %s10, 2
    // Predicated region
    $region21: #{basic_block_forward.5} parent=5 // pred_check
      %p152 = pneg %p151
    $region22: #{basic_block_forward.5} parent=5 // pred_check_branch
      %154 = sbr.rel (%p152) target = $region24
    $region23: #{basic_block_forward.5} parent=5 // pred_region
      // Predicated region
      $region25: #{basic_block_forward.5} parent=23 // pred_check
        %p155 = pneg %p30
      $region26: #{basic_block_forward.5} parent=23 // pred_check_branch
        %157 = sbr.rel (%p155) target = $region28
      $region27: #{basic_block_forward.5} parent=23 // pred_region
        %s158 = smul.u32 32, %s10
        %p159 = scmp.lt.s32.totalorder %s158, 63
        %s160 = scalar_select %p159, %s158, 63
        %s161 = smul.addr %s160, 4
        %s162 = scalar_lea.vmem %s0, %s161
        %s163 = smul.u32 32, %s10
      $region28: #{basic_block_forward.5} parent=23 // pred_fallthru
        _
      // Predicated region
      $region29: #{basic_block_forward.5} parent=23 // pred_check
        %p164 = pneg %p98
      $region30: #{basic_block_forward.5} parent=23 // pred_check_branch
        %166 = sbr.rel (%p164) target = $region32
      $region31: #{basic_block_forward.5} parent=23 // pred_region
        %s167 = smul.u32 32, %s10
        %p168 = scmp.lt.s32.totalorder %s167, 63
        %s169 = scalar_select %p168, %s167, 63
        %s170 = smul.addr %s169, 4
        %s171 = scalar_lea.vmem %s3, %s170
        %s172 = smul.u32 32, %s10
      $region32: #{basic_block_forward.5} parent=23 // pred_fallthru
        _
    $region24: #{basic_block_forward.5} parent=5 // pred_fallthru
      _
    %p173 = scmp.le.s32.totalorder 1, %s10
    %p174 = scmp.lt.s32.totalorder %s10, 3
    %p175 = pnand %p173, %p174
    %p176 = pneg %p175
    // Predicated region
    $region33: #{basic_block_forward.5} parent=5 // pred_check
      _
    $region34: #{basic_block_forward.5} parent=5 // pred_check_branch
      %178 = sbr.rel (%p175) target = $region36
    $region35: #{basic_block_forward.5} parent=5 // pred_region
      %s179 = ssub.s32 %s10, 1
      %s180 = smul.u32 32, %s15
      %p181 = scmp.lt.s32.totalorder %s180, 63
      %s182 = scalar_select %p181, %s180, 63
      %s183 = smul.addr %s182, 4
      %s184 = scalar_lea.vmem %s0, %s183
      %p185 = pneg %p36
      %p186 = pneg %p33
      %p187 = pneg %p57
      %p188 = pneg %p54
      %p189 = pneg %p78
      %p190 = pneg %p75
      %s191 = smul.u32 32, %s15
      %p192 = scmp.lt.s32.totalorder %s191, 63
      %s193 = scalar_select %p192, %s191, 63
      %s194 = smul.addr %s193, 4
      %s195 = scalar_lea.vmem %s3, %s194
      %p196 = pneg %p104
      %p197 = pneg %p101
      %p198 = pneg %p130
      %p199 = pneg %p127
      %s200 = smul.u32 32, %s15
      %p201 = scmp.lt.s32.totalorder %s200, 63
      %s202 = scalar_select %p201, %s200, 63
      %s203 = smul.addr %s202, 8
      %s204 = scalar_lea.vmem %s4, %s203
      %s205 = smul.u32 32, %s15
      %p206 = scmp.lt.s32.totalorder %s205, 63
      %s207 = scalar_select %p206, %s205, 63
      %s208 = smul.addr %s207, 4
      %s209 = scalar_lea.vmem %s0, %s208
      %s210 = smul.u32 32, %s15
      %s211 = smul.u32 32, %s15
      %p212 = scmp.lt.s32.totalorder %s211, 63
      %s213 = scalar_select %p212, %s211, 63
      %s214 = smul.addr %s213, 4
      %s215 = scalar_lea.vmem %s3, %s214
      %s216 = smul.u32 32, %s15
      %s217 = smul.u32 32, %s15
      %p218 = scmp.lt.s32.totalorder %s217, 63
      %s219 = scalar_select %p218, %s217, 63
      %s220 = smul.addr %s219, 8
      %s221 = scalar_lea.vmem %s4, %s220
      %s222 = smul.u32 32, %s15
      %v223 = vld [vmem:[%s1] sm:$0x1]
      %v224 = vld [vmem:[%s2] sm:$0x1]
      %v225 = vld [vmem:[%s209] sm:$0xf]
      %v226 = vld [vmem:[%s209 + $0x4] sm:$0xf]
      %v227 = vld [vmem:[%s209 + $0x8] sm:$0xf]
      %v228 = vld [vmem:[%s209 + $0xc] sm:$0xf]
      %v229 = vld [vmem:[%s209 + $0x10] sm:$0xf]
      %v230 = vld [vmem:[%s209 + $0x14] sm:$0xf]
      %v231 = vld [vmem:[%s209 + $0x18] sm:$0xf]
      %v232 = vld [vmem:[%s209 + $0x1c] sm:$0xf]
      %v233 = vld [vmem:[%s209 + $0x20] sm:$0xf]
      %v234 = vld [vmem:[%s209 + $0x24] sm:$0xf]
      %v235 = vld [vmem:[%s209 + $0x28] sm:$0xf]
      %v236 = vld [vmem:[%s209 + $0x2c] sm:$0xf]
      %v237 = vld [vmem:[%s209 + $0x30] sm:$0xf]
      %v238 = vld [vmem:[%s209 + $0x34] sm:$0xf]
      %v239 = vld [vmem:[%s209 + $0x38] sm:$0xf]
      %v240 = vld [vmem:[%s209 + $0x3c] sm:$0xf]
      %v241 = vld [vmem:[%s209 + $0x40] sm:$0xf]
      %v242 = vld [vmem:[%s209 + $0x44] sm:$0xf]
      %v243 = vld [vmem:[%s209 + $0x48] sm:$0xf]
      %v244 = vld [vmem:[%s209 + $0x4c] sm:$0xf]
      %v245 = vld [vmem:[%s209 + $0x50] sm:$0xf]
      %v246 = vld [vmem:[%s209 + $0x54] sm:$0xf]
      %v247 = vld [vmem:[%s209 + $0x58] sm:$0xf]
      %v248 = vld [vmem:[%s209 + $0x5c] sm:$0xf]
      %v249 = vld [vmem:[%s209 + $0x60] sm:$0xf]
      %v250 = vld [vmem:[%s209 + $0x64] sm:$0xf]
      %v251 = vld [vmem:[%s209 + $0x68] sm:$0xf]
      %v252 = vld [vmem:[%s209 + $0x6c] sm:$0xf]
      %v253 = vld [vmem:[%s209 + $0x70] sm:$0xf]
      %v254 = vld [vmem:[%s209 + $0x74] sm:$0xf]
      %v255 = vld [vmem:[%s209 + $0x78] sm:$0xf]
      %v256 = vld [vmem:[%s209 + $0x7c] sm:$0xf]
      %v257 = vunpack.c.l.bf16 %v225
      %v258 = vunpack.c.l.bf16 %v226
      %v259 = vunpack.c.l.bf16 %v227
      %v260 = vunpack.c.l.bf16 %v228
      %v261 = vunpack.c.l.bf16 %v229
      %v262 = vunpack.c.l.bf16 %v230
      %v263 = vunpack.c.l.bf16 %v231
      %v264 = vunpack.c.l.bf16 %v232
      %v265 = vunpack.c.l.bf16 %v233
      %v266 = vunpack.c.l.bf16 %v234
      %v267 = vunpack.c.l.bf16 %v235
      %v268 = vunpack.c.l.bf16 %v236
      %v269 = vunpack.c.l.bf16 %v237
      %v270 = vunpack.c.l.bf16 %v238
      %v271 = vunpack.c.l.bf16 %v239
      %v272 = vunpack.c.l.bf16 %v240
      %v273 = vunpack.c.l.bf16 %v241
      %v274 = vunpack.c.l.bf16 %v242
      %v275 = vunpack.c.l.bf16 %v243
      %v276 = vunpack.c.l.bf16 %v244
      %v277 = vunpack.c.l.bf16 %v245
      %v278 = vunpack.c.l.bf16 %v246
      %v279 = vunpack.c.l.bf16 %v247
      %v280 = vunpack.c.l.bf16 %v248
      %v281 = vunpack.c.l.bf16 %v249
      %v282 = vunpack.c.l.bf16 %v250
      %v283 = vunpack.c.l.bf16 %v251
      %v284 = vunpack.c.l.bf16 %v252
      %v285 = vunpack.c.l.bf16 %v253
      %v286 = vunpack.c.l.bf16 %v254
      %v287 = vunpack.c.l.bf16 %v255
      %v288 = vunpack.c.l.bf16 %v256
      %v290 = vlaneseq
      %v291 = vshrl.u32 %v290, 7
      %v292 = vsub.s32 0, %v291
      %v293 = vrot.slane %v223, %v292
      %v295 = vmul.f32 %v257, %v293
      %v296 = vmul.f32 %v258, %v293
      %v297 = vmul.f32 %v259, %v293
      %v298 = vmul.f32 %v260, %v293
      %v299 = vmul.f32 %v261, %v293
      %v300 = vmul.f32 %v262, %v293
      %v301 = vmul.f32 %v263, %v293
      %v302 = vmul.f32 %v264, %v293
      %v303 = vmul.f32 %v265, %v293
      %v304 = vmul.f32 %v266, %v293
      %v305 = vmul.f32 %v267, %v293
      %v306 = vmul.f32 %v268, %v293
      %v307 = vmul.f32 %v269, %v293
      %v308 = vmul.f32 %v270, %v293
      %v309 = vmul.f32 %v271, %v293
      %v310 = vmul.f32 %v272, %v293
      %v311 = vmul.f32 %v273, %v293
      %v312 = vmul.f32 %v274, %v293
      %v313 = vmul.f32 %v275, %v293
      %v314 = vmul.f32 %v276, %v293
      %v315 = vmul.f32 %v277, %v293
      %v316 = vmul.f32 %v278, %v293
      %v317 = vmul.f32 %v279, %v293
      %v318 = vmul.f32 %v280, %v293
      %v319 = vmul.f32 %v281, %v293
      %v320 = vmul.f32 %v282, %v293
      %v321 = vmul.f32 %v283, %v293
      %v322 = vmul.f32 %v284, %v293
      %v323 = vmul.f32 %v285, %v293
      %v324 = vmul.f32 %v286, %v293
      %v325 = vmul.f32 %v287, %v293
      %v326 = vmul.f32 %v288, %v293
      %v328 = vlaneseq
      %v329 = vshrl.u32 %v328, 7
      %v330 = vsub.s32 0, %v329
      %v331 = vrot.slane %v224, %v330
      %v333 = vadd.f32 %v295, %v331
      %v334 = vadd.f32 %v296, %v331
      %v335 = vadd.f32 %v297, %v331
      %v336 = vadd.f32 %v298, %v331
      %v337 = vadd.f32 %v299, %v331
      %v338 = vadd.f32 %v300, %v331
      %v339 = vadd.f32 %v301, %v331
      %v340 = vadd.f32 %v302, %v331
      %v341 = vadd.f32 %v303, %v331
      %v342 = vadd.f32 %v304, %v331
      %v343 = vadd.f32 %v305, %v331
      %v344 = vadd.f32 %v306, %v331
      %v345 = vadd.f32 %v307, %v331
      %v346 = vadd.f32 %v308, %v331
      %v347 = vadd.f32 %v309, %v331
      %v348 = vadd.f32 %v310, %v331
      %v349 = vadd.f32 %v311, %v331
      %v350 = vadd.f32 %v312, %v331
      %v351 = vadd.f32 %v313, %v331
      %v352 = vadd.f32 %v314, %v331
      %v353 = vadd.f32 %v315, %v331
      %v354 = vadd.f32 %v316, %v331
      %v355 = vadd.f32 %v317, %v331
      %v356 = vadd.f32 %v318, %v331
      %v357 = vadd.f32 %v319, %v331
      %v358 = vadd.f32 %v320, %v331
      %v359 = vadd.f32 %v321, %v331
      %v360 = vadd.f32 %v322, %v331
      %v361 = vadd.f32 %v323, %v331
      %v362 = vadd.f32 %v324, %v331
      %v363 = vadd.f32 %v325, %v331
      %v364 = vadd.f32 %v326, %v331
      %v365 = vld [vmem:[%s215] sm:$0xf]
      %v366 = vld [vmem:[%s215 + $0x4] sm:$0xf]
      %v367 = vld [vmem:[%s215 + $0x8] sm:$0xf]
      %v368 = vld [vmem:[%s215 + $0xc] sm:$0xf]
      %v369 = vld [vmem:[%s215 + $0x10] sm:$0xf]
      %v370 = vld [vmem:[%s215 + $0x14] sm:$0xf]
      %v371 = vld [vmem:[%s215 + $0x18] sm:$0xf]
      %v372 = vld [vmem:[%s215 + $0x1c] sm:$0xf]
      %v373 = vld [vmem:[%s215 + $0x20] sm:$0xf]
      %v374 = vld [vmem:[%s215 + $0x24] sm:$0xf]
      %v375 = vld [vmem:[%s215 + $0x28] sm:$0xf]
      %v376 = vld [vmem:[%s215 + $0x2c] sm:$0xf]
      %v377 = vld [vmem:[%s215 + $0x30] sm:$0xf]
      %v378 = vld [vmem:[%s215 + $0x34] sm:$0xf]
      %v379 = vld [vmem:[%s215 + $0x38] sm:$0xf]
      %v380 = vld [vmem:[%s215 + $0x3c] sm:$0xf]
      %v381 = vld [vmem:[%s215 + $0x40] sm:$0xf]
      %v382 = vld [vmem:[%s215 + $0x44] sm:$0xf]
      %v383 = vld [vmem:[%s215 + $0x48] sm:$0xf]
      %v384 = vld [vmem:[%s215 + $0x4c] sm:$0xf]
      %v385 = vld [vmem:[%s215 + $0x50] sm:$0xf]
      %v386 = vld [vmem:[%s215 + $0x54] sm:$0xf]
      %v387 = vld [vmem:[%s215 + $0x58] sm:$0xf]
      %v388 = vld [vmem:[%s215 + $0x5c] sm:$0xf]
      %v389 = vld [vmem:[%s215 + $0x60] sm:$0xf]
      %v390 = vld [vmem:[%s215 + $0x64] sm:$0xf]
      %v391 = vld [vmem:[%s215 + $0x68] sm:$0xf]
      %v392 = vld [vmem:[%s215 + $0x6c] sm:$0xf]
      %v393 = vld [vmem:[%s215 + $0x70] sm:$0xf]
      %v394 = vld [vmem:[%s215 + $0x74] sm:$0xf]
      %v395 = vld [vmem:[%s215 + $0x78] sm:$0xf]
      %v396 = vld [vmem:[%s215 + $0x7c] sm:$0xf]
      %v397 = vunpack.c.l.bf16 %v365
      %v398 = vunpack.c.l.bf16 %v366
      %v399 = vunpack.c.l.bf16 %v367
      %v400 = vunpack.c.l.bf16 %v368
      %v401 = vunpack.c.l.bf16 %v369
      %v402 = vunpack.c.l.bf16 %v370
      %v403 = vunpack.c.l.bf16 %v371
      %v404 = vunpack.c.l.bf16 %v372
      %v405 = vunpack.c.l.bf16 %v373
      %v406 = vunpack.c.l.bf16 %v374
      %v407 = vunpack.c.l.bf16 %v375
      %v408 = vunpack.c.l.bf16 %v376
      %v409 = vunpack.c.l.bf16 %v377
      %v410 = vunpack.c.l.bf16 %v378
      %v411 = vunpack.c.l.bf16 %v379
      %v412 = vunpack.c.l.bf16 %v380
      %v413 = vunpack.c.l.bf16 %v381
      %v414 = vunpack.c.l.bf16 %v382
      %v415 = vunpack.c.l.bf16 %v383
      %v416 = vunpack.c.l.bf16 %v384
      %v417 = vunpack.c.l.bf16 %v385
      %v418 = vunpack.c.l.bf16 %v386
      %v419 = vunpack.c.l.bf16 %v387
      %v420 = vunpack.c.l.bf16 %v388
      %v421 = vunpack.c.l.bf16 %v389
      %v422 = vunpack.c.l.bf16 %v390
      %v423 = vunpack.c.l.bf16 %v391
      %v424 = vunpack.c.l.bf16 %v392
      %v425 = vunpack.c.l.bf16 %v393
      %v426 = vunpack.c.l.bf16 %v394
      %v427 = vunpack.c.l.bf16 %v395
      %v428 = vunpack.c.l.bf16 %v396
      %v429 = vadd.f32 %v333, %v397
      %v430 = vadd.f32 %v334, %v398
      %v431 = vadd.f32 %v335, %v399
      %v432 = vadd.f32 %v336, %v400
      %v433 = vadd.f32 %v337, %v401
      %v434 = vadd.f32 %v338, %v402
      %v435 = vadd.f32 %v339, %v403
      %v436 = vadd.f32 %v340, %v404
      %v437 = vadd.f32 %v341, %v405
      %v438 = vadd.f32 %v342, %v406
      %v439 = vadd.f32 %v343, %v407
      %v440 = vadd.f32 %v344, %v408
      %v441 = vadd.f32 %v345, %v409
      %v442 = vadd.f32 %v346, %v410
      %v443 = vadd.f32 %v347, %v411
      %v444 = vadd.f32 %v348, %v412
      %v445 = vadd.f32 %v349, %v413
      %v446 = vadd.f32 %v350, %v414
      %v447 = vadd.f32 %v351, %v415
      %v448 = vadd.f32 %v352, %v416
      %v449 = vadd.f32 %v353, %v417
      %v450 = vadd.f32 %v354, %v418
      %v451 = vadd.f32 %v355, %v419
      %v452 = vadd.f32 %v356, %v420
      %v453 = vadd.f32 %v357, %v421
      %v454 = vadd.f32 %v358, %v422
      %v455 = vadd.f32 %v359, %v423
      %v456 = vadd.f32 %v360, %v424
      %v457 = vadd.f32 %v361, %v425
      %v458 = vadd.f32 %v362, %v426
      %v459 = vadd.f32 %v363, %v427
      %v460 = vadd.f32 %v364, %v428
      %v461 = vmax.f32 %v429, 0.0
      %v462 = vmax.f32 %v430, 0.0
      %v463 = vmax.f32 %v431, 0.0
      %v464 = vmax.f32 %v432, 0.0
      %v465 = vmax.f32 %v433, 0.0
      %v466 = vmax.f32 %v434, 0.0
      %v467 = vmax.f32 %v435, 0.0
      %v468 = vmax.f32 %v436, 0.0
      %v469 = vmax.f32 %v437, 0.0
      %v470 = vmax.f32 %v438, 0.0
      %v471 = vmax.f32 %v439, 0.0
      %v472 = vmax.f32 %v440, 0.0
      %v473 = vmax.f32 %v441, 0.0
      %v474 = vmax.f32 %v442, 0.0
      %v475 = vmax.f32 %v443, 0.0
      %v476 = vmax.f32 %v444, 0.0
      %v477 = vmax.f32 %v445, 0.0
      %v478 = vmax.f32 %v446, 0.0
      %v479 = vmax.f32 %v447, 0.0
      %v480 = vmax.f32 %v448, 0.0
      %v481 = vmax.f32 %v449, 0.0
      %v482 = vmax.f32 %v450, 0.0
      %v483 = vmax.f32 %v451, 0.0
      %v484 = vmax.f32 %v452, 0.0
      %v485 = vmax.f32 %v453, 0.0
      %v486 = vmax.f32 %v454, 0.0
      %v487 = vmax.f32 %v455, 0.0
      %v488 = vmax.f32 %v456, 0.0
      %v489 = vmax.f32 %v457, 0.0
      %v490 = vmax.f32 %v458, 0.0
      %v491 = vmax.f32 %v459, 0.0
      %v492 = vmax.f32 %v460, 0.0
      %493 = vst [vmem:[%s221] sm:$0xff] %v461
      %494 = vst [vmem:[%s221 + $0x8] sm:$0xff] %v462
      %495 = vst [vmem:[%s221 + $0x10] sm:$0xff] %v463
      %496 = vst [vmem:[%s221 + $0x18] sm:$0xff] %v464
      %497 = vst [vmem:[%s221 + $0x20] sm:$0xff] %v465
      %498 = vst [vmem:[%s221 + $0x28] sm:$0xff] %v466
      %499 = vst [vmem:[%s221 + $0x30] sm:$0xff] %v467
      %500 = vst [vmem:[%s221 + $0x38] sm:$0xff] %v468
      %501 = vst [vmem:[%s221 + $0x40] sm:$0xff] %v469
      %502 = vst [vmem:[%s221 + $0x48] sm:$0xff] %v470
      %503 = vst [vmem:[%s221 + $0x50] sm:$0xff] %v471
      %504 = vst [vmem:[%s221 + $0x58] sm:$0xff] %v472
      %505 = vst [vmem:[%s221 + $0x60] sm:$0xff] %v473
      %506 = vst [vmem:[%s221 + $0x68] sm:$0xff] %v474
      %507 = vst [vmem:[%s221 + $0x70] sm:$0xff] %v475
      %508 = vst [vmem:[%s221 + $0x78] sm:$0xff] %v476
      %509 = vst [vmem:[%s221 + $0x80] sm:$0xff] %v477
      %510 = vst [vmem:[%s221 + $0x88] sm:$0xff] %v478
      %511 = vst [vmem:[%s221 + $0x90] sm:$0xff] %v479
      %512 = vst [vmem:[%s221 + $0x98] sm:$0xff] %v480
      %513 = vst [vmem:[%s221 + $0xa0] sm:$0xff] %v481
      %514 = vst [vmem:[%s221 + $0xa8] sm:$0xff] %v482
      %515 = vst [vmem:[%s221 + $0xb0] sm:$0xff] %v483
      %516 = vst [vmem:[%s221 + $0xb8] sm:$0xff] %v484
      %517 = vst [vmem:[%s221 + $0xc0] sm:$0xff] %v485
      %518 = vst [vmem:[%s221 + $0xc8] sm:$0xff] %v486
      %519 = vst [vmem:[%s221 + $0xd0] sm:$0xff] %v487
      %520 = vst [vmem:[%s221 + $0xd8] sm:$0xff] %v488
      %521 = vst [vmem:[%s221 + $0xe0] sm:$0xff] %v489
      %522 = vst [vmem:[%s221 + $0xe8] sm:$0xff] %v490
      %523 = vst [vmem:[%s221 + $0xf0] sm:$0xff] %v491
      %524 = vst [vmem:[%s221 + $0xf8] sm:$0xff] %v492
      %s525 = smul.u32 32, %s15
      %p526 = scmp.lt.s32.totalorder %s525, 63
      %s527 = scalar_select %p526, %s525, 63
      %s528 = smul.addr %s527, 8
      %s529 = scalar_lea.vmem %s4, %s528
      // Predicated region
      $region37: #{basic_block_forward.5} parent=35 // pred_check
        %p530 = pneg %p127
      $region38: #{basic_block_forward.5} parent=35 // pred_check_branch
        %532 = sbr.rel (%p530) target = $region40
      $region39: #{basic_block_forward.5} parent=35 // pred_region
        %s533 = smul.u32 32, %s15
      $region40: #{basic_block_forward.5} parent=35 // pred_fallthru
        _
    $region36: #{basic_block_forward.5} parent=5 // pred_fallthru
      _
    %p534 = scmp.le.s32.totalorder 2, %s10
    // Predicated region
    $region41: #{basic_block_forward.5} parent=5 // pred_check
      %p535 = pneg %p534
    $region42: #{basic_block_forward.5} parent=5 // pred_check_branch
      %537 = sbr.rel (%p535) target = $region44
    $region43: #{basic_block_forward.5} parent=5 // pred_region
      %s538 = ssub.s32 %s10, 2
      // Predicated region
      $region45: #{basic_block_forward.5} parent=43 // pred_check
        %p539 = pneg %p133
      $region46: #{basic_block_forward.5} parent=43 // pred_check_branch
        %541 = sbr.rel (%p539) target = $region48
      $region47: #{basic_block_forward.5} parent=43 // pred_region
        %s542 = smul.u32 32, %s16
        %p543 = scmp.lt.s32.totalorder %s542, 63
        %s544 = scalar_select %p543, %s542, 63
        %s545 = smul.addr %s544, 8
        %s546 = scalar_lea.vmem %s4, %s545
      $region48: #{basic_block_forward.5} parent=43 // pred_fallthru
        _
    $region44: #{basic_block_forward.5} parent=5 // pred_fallthru
      _
  $region6: #{basic_block_forward.5} parent=0 // loop_footer
    %s14 = sadd.s32 1, %s10
  $region7: #{basic_block_forward.5} parent=0 // loop_footer_branch
    %9 = sbr.rel target = $region3
  $region8: #{basic_block_forward.5} parent=0 // loop_exit
    _

// kernel: basic_block_forward.3
$region0: #{basic_block_forward.3}
  #allocation0 [shape = 'u32[]', space=smem, size = 0x4, offset = 0x4, fixed_abs, tag = 'smem constant byte address 0x4 - core index']
  #allocation1 [shape = 'u32[144,128]{1,0:T(1,128)}', space=vmem, size = 0x12000, scoped, tag = 'internal scratch']
  #allocation2 [shape = 'bf16[18,18,128]{2,1,0:T(8,128)(2,1)}', space=vmem, size = 0x1b000, scoped, tag = 'scratch operand']
  %s0 = inlined_call_operand.vmem [shape: bf16[2,16,16,128], index: 0, kind: input, shape index: {}]
  %s1 = inlined_call_operand.vmem [shape: bf16[1152,128], index: 1, kind: input, shape index: {}]
  %s2 = inlined_call_operand.vmem [shape: bf16[2,16,16,128], index: 2, kind: output, shape index: {0}]
  %s3 = inlined_call_operand.vmem [shape: f32[2,2,128], index: 3, kind: output, shape index: {1}]
  %4 = xla_tuple %s2, %s3
  %s5 = sld [smem:[#allocation0]]
  $region49: #{basic_block_forward.3} parent=0
    _
  %s7 = ssub.s32 1, %s5
  %s8 = scalar_select 0, %s7, %s5
  loop: start=0, step=1, limit=4
  $region2: #{basic_block_forward.3} parent=0 // loop_pre_header
    _
  $region3: #{basic_block_forward.3} parent=0 // loop_header
    %s10 = sphi 0, %s14
    %p11 = scmp.ge.s32.totalorder %s10, 4
    %s20 = sphi 0, %s22
    %s23 = sphi 0, %s20
    %s24 = sphi 0, %s23
    %s40 = sphi 0, %s24
    %s44 = sphi 0, %s44
    %s46 = sphi 0, %s44
    %s47 = sphi 0, %s46
    %s61 = sphi 0, %s47
    %s67 = sphi 0, %s69
    %s70 = sphi 0, %s67
    %s71 = sphi 0, %s70
    %s87 = sphi 0, %s71
    %s93 = sphi 0, %s95
    %s96 = sphi 0, %s93
    %s97 = sphi 0, %s96
    %s113 = sphi 0, %s97
  $region4: #{basic_block_forward.3} parent=0 // loop_header_branch
    %13 = sbr.rel (%p11) target = $region8
  $region5: #{basic_block_forward.3} parent=0 // loop_body
    %s15 = ssub.s32 %s10, 1
    %s16 = ssub.s32 %s10, 2
    %s17 = sadd.s32 %s10, 1
    %s18 = ssub.s32 %s10, %s17
    %p19 = scmp.eq.s32.totalorder %s18, 0
    %s21 = sadd.s32 %s20, 1
    %s22 = scalar_select %p19, %s20, %s21
    %p25 = pneg %p19
    %p26 = scmp.eq.s32.totalorder %s10, 1
    %p27 = por %p25, %p26
    %p28 = scmp.ne.s32.totalorder %s20, %s23
    %p29 = scmp.eq.s32.totalorder %s10, 0
    %p30 = por %p28, %p29
    %p31 = scmp.ne.s32.totalorder %s20, %s23
    %p32 = scmp.eq.s32.totalorder %s15, 1
    %p33 = por %p31, %p32
    %p34 = scmp.ne.s32.totalorder %s23, %s24
    %p35 = scmp.eq.s32.totalorder %s15, 0
    %p36 = por %p34, %p35
    %p37 = scmp.ne.s32.totalorder %s23, %s24
    %p38 = scmp.eq.s32.totalorder %s16, 1
    %p39 = por %p37, %p38
    %p41 = scmp.ne.s32.totalorder %s24, %s40
    %p42 = scmp.eq.s32.totalorder %s16, 0
    %p43 = por %p41, %p42
    %s45 = sadd.s32 %s44, 1
    %p48 = scmp.eq.s32.totalorder %s10, 1
    %p49 = scmp.ne.s32.totalorder %s44, %s46
    %p50 = scmp.eq.s32.totalorder %s10, 0
    %p51 = por %p49, %p50
    %p52 = scmp.ne.s32.totalorder %s44, %s46
    %p53 = scmp.eq.s32.totalorder %s15, 1
    %p54 = por %p52, %p53
    %p55 = scmp.ne.s32.totalorder %s46, %s47
    %p56 = scmp.eq.s32.totalorder %s15, 0
    %p57 = por %p55, %p56
    %p58 = scmp.ne.s32.totalorder %s46, %s47
    %p59 = scmp.eq.s32.totalorder %s16, 1
    %p60 = por %p58, %p59
    %p62 = scmp.ne.s32.totalorder %s47, %s61
    %p63 = scmp.eq.s32.totalorder %s16, 0
    %p64 = por %p62, %p63
    %s65 = ssub.s32 %s10, %s17
    %p66 = scmp.eq.s32.totalorder %s65, 0
    %s68 = sadd.s32 %s67, 1
    %s69 = scalar_select %p66, %s67, %s68
    %p72 = pneg %p66
    %p73 = scmp.eq.s32.totalorder %s10, 1
    %p74 = por %p72, %p73
    %p75 = scmp.ne.s32.totalorder %s67, %s70
    %p76 = scmp.eq.s32.totalorder %s10, 0
    %p77 = por %p75, %p76
    %p78 = scmp.ne.s32.totalorder %s67, %s70
    %p79 = scmp.eq.s32.totalorder %s15, 1
    %p80 = por %p78, %p79
    %p81 = scmp.ne.s32.totalorder %s70, %s71
    %p82 = scmp.eq.s32.totalorder %s15, 0
    %p83 = por %p81, %p82
    %p84 = scmp.ne.s32.totalorder %s70, %s71
    %p85 = scmp.eq.s32.totalorder %s16, 1
    %p86 = por %p84, %p85
    %p88 = scmp.ne.s32.totalorder %s71, %s87
    %p89 = scmp.eq.s32.totalorder %s16, 0
    %p90 = por %p88, %p89
    %s91 = ssub.s32 %s10, %s17
    %p92 = scmp.eq.s32.totalorder %s91, 0
    %s94 = sadd.s32 %s93, 1
    %s95 = scalar_select %p92, %s93, %s94
    %p98 = pneg %p92
    %p99 = scmp.eq.s32.totalorder %s10, 1
    %p100 = por %p98, %p99
    %p101 = scmp.ne.s32.totalorder %s93, %s96
    %p102 = scmp.eq.s32.totalorder %s10, 0
    %p103 = por %p101, %p102
    %p104 = scmp.ne.s32.totalorder %s93, %s96
    %p105 = scmp.eq.s32.totalorder %s15, 1
    %p106 = por %p104, %p105
    %p107 = scmp.ne.s32.totalorder %s96, %s97
    %p108 = scmp.eq.s32.totalorder %s15, 0
    %p109 = por %p107, %p108
    %p110 = scmp.ne.s32.totalorder %s96, %s97
    %p111 = scmp.eq.s32.totalorder %s16, 1
    %p112 = por %p110, %p111
    %p114 = scmp.ne.s32.totalorder %s97, %s113
    %p115 = scmp.eq.s32.totalorder %s16, 0
    %p116 = por %p114, %p115
    %p117 = scmp.le.s32.totalorder 1, %s10
    %p118 = scmp.lt.s32.totalorder %s10, 3
    %p119 = pnand %p117, %p118
    %p120 = pneg %p119
    // Predicated region
    $region9: #{basic_block_forward.3} parent=5 // pred_check
      _
    $region10: #{basic_block_forward.3} parent=5 // pred_check_branch
      %122 = sbr.rel (%p119) target = $region12
    $region11: #{basic_block_forward.3} parent=5 // pred_region
      %s123 = ssub.s32 %s10, 1
      // Predicated region
      $region13: #{basic_block_forward.3} parent=11 // pred_check
        %p124 = pneg %p57
      $region14: #{basic_block_forward.3} parent=11 // pred_check_branch
        %126 = sbr.rel (%p124) target = $region16
      $region15: #{basic_block_forward.3} parent=11 // pred_region
        _
      $region16: #{basic_block_forward.3} parent=11 // pred_fallthru
        _
    $region12: #{basic_block_forward.3} parent=5 // pred_fallthru
      _
    %p127 = scmp.lt.s32.totalorder %s10, 2
    // Predicated region
    $region17: #{basic_block_forward.3} parent=5 // pred_check
      %p128 = pneg %p127
    $region18: #{basic_block_forward.3} parent=5 // pred_check_branch
      %130 = sbr.rel (%p128) target = $region20
    $region19: #{basic_block_forward.3} parent=5 // pred_region
      // Predicated region
      $region21: #{basic_block_forward.3} parent=19 // pred_check
        %p131 = pneg %p30
      $region22: #{basic_block_forward.3} parent=19 // pred_check_branch
        %133 = sbr.rel (%p131) target = $region24
      $region23: #{basic_block_forward.3} parent=19 // pred_region
        %p134 = scmp.lt.s32.totalorder %s10, 1
        %s135 = scalar_select %p134, %s10, 1
        %s136 = smul.addr %s135, 32
        %s137 = smul.addr %s136, 4
        %s138 = scalar_lea.vmem %s0, %s137
      $region24: #{basic_block_forward.3} parent=19 // pred_fallthru
        _
    $region20: #{basic_block_forward.3} parent=5 // pred_fallthru
      _
    %p139 = scmp.le.s32.totalorder 1, %s10
    %p140 = scmp.lt.s32.totalorder %s10, 3
    %p141 = pnand %p139, %p140
    %p142 = pneg %p141
    // Predicated region
    $region25: #{basic_block_forward.3} parent=5 // pred_check
      _
    $region26: #{basic_block_forward.3} parent=5 // pred_check_branch
      %144 = sbr.rel (%p141) target = $region28
    $region27: #{basic_block_forward.3} parent=5 // pred_region
      %s145 = ssub.s32 %s10, 1
      %p146 = scmp.lt.s32.totalorder %s15, 1
      %s147 = scalar_select %p146, %s15, 1
      %s148 = smul.addr %s147, 32
      %s149 = smul.addr %s148, 4
      %s150 = scalar_lea.vmem %s0, %s149
      %p151 = pneg %p36
      %p152 = pneg %p33
      %p153 = pneg %p57
      %p154 = pneg %p54
      %p155 = pneg %p83
      %p156 = pneg %p80
      %p157 = scmp.lt.s32.totalorder %s15, 1
      %s158 = scalar_select %p157, %s15, 1
      %s159 = smul.addr %s158, 32
      %s160 = smul.addr %s159, 4
      %s161 = scalar_lea.vmem %s2, %s160
      %p162 = pneg %p109
      %p163 = pneg %p106
      %p164 = scmp.lt.s32.totalorder %s15, 1
      %s165 = scalar_select %p164, %s15, 1
      %s166 = smul.addr %s165, 2
      %s167 = scalar_lea.vmem %s3, %s166
      %p168 = scmp.lt.s32.totalorder %s15, 1
      %s169 = scalar_select %p168, %s15, 1
      %s170 = smul.addr %s169, 32
      %s171 = smul.addr %s170, 4
      %s172 = scalar_lea.vmem %s0, %s171
      %p173 = scmp.lt.s32.totalorder %s15, 1
      %s174 = scalar_select %p173, %s15, 1
      %s175 = smul.addr %s174, 32
      %s176 = smul.addr %s175, 4
      %s177 = scalar_lea.vmem %s2, %s176
      %p178 = scmp.lt.s32.totalorder %s15, 1
      %s179 = scalar_select %p178, %s15, 1
      %s180 = smul.addr %s179, 2
      %s181 = scalar_lea.vmem %s3, %s180
      %v183 = vld [vmem:[%s172] sm:$0xf]
      %v184 = vld [vmem:[%s172 + $0x4] sm:$0xf]
      %v185 = vld [vmem:[%s172 + $0x8] sm:$0xf]
      %v186 = vld [vmem:[%s172 + $0xc] sm:$0xf]
      %v187 = vld [vmem:[%s172 + $0x10] sm:$0xf]
      %v188 = vld [vmem:[%s172 + $0x14] sm:$0xf]
      %v189 = vld [vmem:[%s172 + $0x18] sm:$0xf]
      %v190 = vld [vmem:[%s172 + $0x1c] sm:$0xf]
      %v191 = vld [vmem:[%s172 + $0x20] sm:$0xf]
      %v192 = vld [vmem:[%s172 + $0x24] sm:$0xf]
      %v193 = vld [vmem:[%s172 + $0x28] sm:$0xf]
      %v194 = vld [vmem:[%s172 + $0x2c] sm:$0xf]
      %v195 = vld [vmem:[%s172 + $0x30] sm:$0xf]
      %v196 = vld [vmem:[%s172 + $0x34] sm:$0xf]
      %v197 = vld [vmem:[%s172 + $0x38] sm:$0xf]
      %v198 = vld [vmem:[%s172 + $0x3c] sm:$0xf]
      %v199 = vld [vmem:[%s172 + $0x40] sm:$0xf]
      %v200 = vld [vmem:[%s172 + $0x44] sm:$0xf]
      %v201 = vld [vmem:[%s172 + $0x48] sm:$0xf]
      %v202 = vld [vmem:[%s172 + $0x4c] sm:$0xf]
      %v203 = vld [vmem:[%s172 + $0x50] sm:$0xf]
      %v204 = vld [vmem:[%s172 + $0x54] sm:$0xf]
      %v205 = vld [vmem:[%s172 + $0x58] sm:$0xf]
      %v206 = vld [vmem:[%s172 + $0x5c] sm:$0xf]
      %v207 = vld [vmem:[%s172 + $0x60] sm:$0xf]
      %v208 = vld [vmem:[%s172 + $0x64] sm:$0xf]
      %v209 = vld [vmem:[%s172 + $0x68] sm:$0xf]
      %v210 = vld [vmem:[%s172 + $0x6c] sm:$0xf]
      %v211 = vld [vmem:[%s172 + $0x70] sm:$0xf]
      %v212 = vld [vmem:[%s172 + $0x74] sm:$0xf]
      %v213 = vld [vmem:[%s172 + $0x78] sm:$0xf]
      %v214 = vld [vmem:[%s172 + $0x7c] sm:$0xf]
      %v215 = vld [vmem:[%s1] sm:$0xf]
      %v216 = vld [vmem:[%s1 + $0x4] sm:$0xf]
      %v217 = vld [vmem:[%s1 + $0x8] sm:$0xf]
      %v218 = vld [vmem:[%s1 + $0xc] sm:$0xf]
      %v219 = vld [vmem:[%s1 + $0x10] sm:$0xf]
      %v220 = vld [vmem:[%s1 + $0x14] sm:$0xf]
      %v221 = vld [vmem:[%s1 + $0x18] sm:$0xf]
      %v222 = vld [vmem:[%s1 + $0x1c] sm:$0xf]
      %v223 = vld [vmem:[%s1 + $0x20] sm:$0xf]
      %v224 = vld [vmem:[%s1 + $0x24] sm:$0xf]
      %v225 = vld [vmem:[%s1 + $0x28] sm:$0xf]
      %v226 = vld [vmem:[%s1 + $0x2c] sm:$0xf]
      %v227 = vld [vmem:[%s1 + $0x30] sm:$0xf]
      %v228 = vld [vmem:[%s1 + $0x34] sm:$0xf]
      %v229 = vld [vmem:[%s1 + $0x38] sm:$0xf]
      %v230 = vld [vmem:[%s1 + $0x3c] sm:$0xf]
      %v231 = vld [vmem:[%s1 + $0x40] sm:$0xf]
      %v232 = vld [vmem:[%s1 + $0x44] sm:$0xf]
      %v233 = vld [vmem:[%s1 + $0x48] sm:$0xf]
      %v234 = vld [vmem:[%s1 + $0x4c] sm:$0xf]
      %v235 = vld [vmem:[%s1 + $0x50] sm:$0xf]
      %v236 = vld [vmem:[%s1 + $0x54] sm:$0xf]
      %v237 = vld [vmem:[%s1 + $0x58] sm:$0xf]
      %v238 = vld [vmem:[%s1 + $0x5c] sm:$0xf]
      %v239 = vld [vmem:[%s1 + $0x60] sm:$0xf]
      %v240 = vld [vmem:[%s1 + $0x64] sm:$0xf]
      %v241 = vld [vmem:[%s1 + $0x68] sm:$0xf]
      %v242 = vld [vmem:[%s1 + $0x6c] sm:$0xf]
      %v243 = vld [vmem:[%s1 + $0x70] sm:$0xf]
      %v244 = vld [vmem:[%s1 + $0x74] sm:$0xf]
      %v245 = vld [vmem:[%s1 + $0x78] sm:$0xf]
      %v246 = vld [vmem:[%s1 + $0x7c] sm:$0xf]
      %v247 = vld [vmem:[%s1 + $0x80] sm:$0xf]
      %v248 = vld [vmem:[%s1 + $0x84] sm:$0xf]
      %v249 = vld [vmem:[%s1 + $0x88] sm:$0xf]
      %v250 = vld [vmem:[%s1 + $0x8c] sm:$0xf]
      %v251 = vld [vmem:[%s1 + $0x90] sm:$0xf]
      %v252 = vld [vmem:[%s1 + $0x94] sm:$0xf]
      %v253 = vld [vmem:[%s1 + $0x98] sm:$0xf]
      %v254 = vld [vmem:[%s1 + $0x9c] sm:$0xf]
      %v255 = vld [vmem:[%s1 + $0xa0] sm:$0xf]
      %v256 = vld [vmem:[%s1 + $0xa4] sm:$0xf]
      %v257 = vld [vmem:[%s1 + $0xa8] sm:$0xf]
      %v258 = vld [vmem:[%s1 + $0xac] sm:$0xf]
      %v259 = vld [vmem:[%s1 + $0xb0] sm:$0xf]
      %v260 = vld [vmem:[%s1 + $0xb4] sm:$0xf]
      %v261 = vld [vmem:[%s1 + $0xb8] sm:$0xf]
      %v262 = vld [vmem:[%s1 + $0xbc] sm:$0xf]
      %v263 = vld [vmem:[%s1 + $0xc0] sm:$0xf]
      %v264 = vld [vmem:[%s1 + $0xc4] sm:$0xf]
      %v265 = vld [vmem:[%s1 + $0xc8] sm:$0xf]
      %v266 = vld [vmem:[%s1 + $0xcc] sm:$0xf]
      %v267 = vld [vmem:[%s1 + $0xd0] sm:$0xf]
      %v268 = vld [vmem:[%s1 + $0xd4] sm:$0xf]
      %v269 = vld [vmem:[%s1 + $0xd8] sm:$0xf]
      %v270 = vld [vmem:[%s1 + $0xdc] sm:$0xf]
      %v271 = vld [vmem:[%s1 + $0xe0] sm:$0xf]
      %v272 = vld [vmem:[%s1 + $0xe4] sm:$0xf]
      %v273 = vld [vmem:[%s1 + $0xe8] sm:$0xf]
      %v274 = vld [vmem:[%s1 + $0xec] sm:$0xf]
      %v275 = vld [vmem:[%s1 + $0xf0] sm:$0xf]
      %v276 = vld [vmem:[%s1 + $0xf4] sm:$0xf]
      %v277 = vld [vmem:[%s1 + $0xf8] sm:$0xf]
      %v278 = vld [vmem:[%s1 + $0xfc] sm:$0xf]
      %v279 = vld [vmem:[%s1 + $0x100] sm:$0xf]
      %v280 = vld [vmem:[%s1 + $0x104] sm:$0xf]
      %v281 = vld [vmem:[%s1 + $0x108] sm:$0xf]
      %v282 = vld [vmem:[%s1 + $0x10c] sm:$0xf]
      %v283 = vld [vmem:[%s1 + $0x110] sm:$0xf]
      %v284 = vld [vmem:[%s1 + $0x114] sm:$0xf]
      %v285 = vld [vmem:[%s1 + $0x118] sm:$0xf]
      %v286 = vld [vmem:[%s1 + $0x11c] sm:$0xf]
      %v287 = vld [vmem:[%s1 + $0x120] sm:$0xf]
      %v288 = vld [vmem:[%s1 + $0x124] sm:$0xf]
      %v289 = vld [vmem:[%s1 + $0x128] sm:$0xf]
      %v290 = vld [vmem:[%s1 + $0x12c] sm:$0xf]
      %v291 = vld [vmem:[%s1 + $0x130] sm:$0xf]
      %v292 = vld [vmem:[%s1 + $0x134] sm:$0xf]
      %v293 = vld [vmem:[%s1 + $0x138] sm:$0xf]
      %v294 = vld [vmem:[%s1 + $0x13c] sm:$0xf]
      %v295 = vld [vmem:[%s1 + $0x140] sm:$0xf]
      %v296 = vld [vmem:[%s1 + $0x144] sm:$0xf]
      %v297 = vld [vmem:[%s1 + $0x148] sm:$0xf]
      %v298 = vld [vmem:[%s1 + $0x14c] sm:$0xf]
      %v299 = vld [vmem:[%s1 + $0x150] sm:$0xf]
      %v300 = vld [vmem:[%s1 + $0x154] sm:$0xf]
      %v301 = vld [vmem:[%s1 + $0x158] sm:$0xf]
      %v302 = vld [vmem:[%s1 + $0x15c] sm:$0xf]
      %v303 = vld [vmem:[%s1 + $0x160] sm:$0xf]
      %v304 = vld [vmem:[%s1 + $0x164] sm:$0xf]
      %v305 = vld [vmem:[%s1 + $0x168] sm:$0xf]
      %v306 = vld [vmem:[%s1 + $0x16c] sm:$0xf]
      %v307 = vld [vmem:[%s1 + $0x170] sm:$0xf]
      %v308 = vld [vmem:[%s1 + $0x174] sm:$0xf]
      %v309 = vld [vmem:[%s1 + $0x178] sm:$0xf]
      %v310 = vld [vmem:[%s1 + $0x17c] sm:$0xf]
      %v311 = vld [vmem:[%s1 + $0x180] sm:$0xf]
      %v312 = vld [vmem:[%s1 + $0x184] sm:$0xf]
      %v313 = vld [vmem:[%s1 + $0x188] sm:$0xf]
      %v314 = vld [vmem:[%s1 + $0x18c] sm:$0xf]
      %v315 = vld [vmem:[%s1 + $0x190] sm:$0xf]
      %v316 = vld [vmem:[%s1 + $0x194] sm:$0xf]
      %v317 = vld [vmem:[%s1 + $0x198] sm:$0xf]
      %v318 = vld [vmem:[%s1 + $0x19c] sm:$0xf]
      %v319 = vld [vmem:[%s1 + $0x1a0] sm:$0xf]
      %v320 = vld [vmem:[%s1 + $0x1a4] sm:$0xf]
      %v321 = vld [vmem:[%s1 + $0x1a8] sm:$0xf]
      %v322 = vld [vmem:[%s1 + $0x1ac] sm:$0xf]
      %v323 = vld [vmem:[%s1 + $0x1b0] sm:$0xf]
      %v324 = vld [vmem:[%s1 + $0x1b4] sm:$0xf]
      %v325 = vld [vmem:[%s1 + $0x1b8] sm:$0xf]
      %v326 = vld [vmem:[%s1 + $0x1bc] sm:$0xf]
      %v327 = vld [vmem:[%s1 + $0x1c0] sm:$0xf]
      %v328 = vld [vmem:[%s1 + $0x1c4] sm:$0xf]
      %v329 = vld [vmem:[%s1 + $0x1c8] sm:$0xf]
      %v330 = vld [vmem:[%s1 + $0x1cc] sm:$0xf]
      %v331 = vld [vmem:[%s1 + $0x1d0] sm:$0xf]
      %v332 = vld [vmem:[%s1 + $0x1d4] sm:$0xf]
      %v333 = vld [vmem:[%s1 + $0x1d8] sm:$0xf]
      %v334 = vld [vmem:[%s1 + $0x1dc] sm:$0xf]
      %v335 = vld [vmem:[%s1 + $0x1e0] sm:$0xf]
      %v336 = vld [vmem:[%s1 + $0x1e4] sm:$0xf]
      %v337 = vld [vmem:[%s1 + $0x1e8] sm:$0xf]
      %v338 = vld [vmem:[%s1 + $0x1ec] sm:$0xf]
      %v339 = vld [vmem:[%s1 + $0x1f0] sm:$0xf]
      %v340 = vld [vmem:[%s1 + $0x1f4] sm:$0xf]
      %v341 = vld [vmem:[%s1 + $0x1f8] sm:$0xf]
      %v342 = vld [vmem:[%s1 + $0x1fc] sm:$0xf]
      %v343 = vld [vmem:[%s1 + $0x200] sm:$0xf]
      %v344 = vld [vmem:[%s1 + $0x204] sm:$0xf]
      %v345 = vld [vmem:[%s1 + $0x208] sm:$0xf]
      %v346 = vld [vmem:[%s1 + $0x20c] sm:$0xf]
      %v347 = vld [vmem:[%s1 + $0x210] sm:$0xf]
      %v348 = vld [vmem:[%s1 + $0x214] sm:$0xf]
      %v349 = vld [vmem:[%s1 + $0x218] sm:$0xf]
      %v350 = vld [vmem:[%s1 + $0x21c] sm:$0xf]
      %v351 = vld [vmem:[%s1 + $0x220] sm:$0xf]
      %v352 = vld [vmem:[%s1 + $0x224] sm:$0xf]
      %v353 = vld [vmem:[%s1 + $0x228] sm:$0xf]
      %v354 = vld [vmem:[%s1 + $0x22c] sm:$0xf]
      %v355 = vld [vmem:[%s1 + $0x230] sm:$0xf]
      %v356 = vld [vmem:[%s1 + $0x234] sm:$0xf]
      %v357 = vld [vmem:[%s1 + $0x238] sm:$0xf]
      %v358 = vld [vmem:[%s1 + $0x23c] sm:$0xf]
      %359 = vst [vmem:[#allocation2] sm:$0xf] 0
      %360 = vst [vmem:[#allocation2 + $0x4] sm:$0xf] 0
      %361 = vst [vmem:[#allocation2 + $0x8] sm:$0x1] 0
      %s362 = scalar_lea.vmem [#allocation2], 204
      %363 = vst [vmem:[%s362] sm:$0xf] 0
      %364 = vst [vmem:[%s362 + $0x4] sm:$0xf] 0
      %365 = vst [vmem:[%s362 + $0x8] sm:$0x1] 0
      %vm366 = vcmask 1040384
      %vm367 = vsmask.f32 256
      %vm368 = vmand %vm366, %vm367
      %v369 = vld [vmem:[#allocation2] sm:$0x1]
      %v370 = vsel %vm368, 0, %v369
      %371 = vst [vmem:[#allocation2] sm:$0x1] %v370
      %v372 = vld [vmem:[#allocation2 + $0xc] sm:$0x1]
      %v373 = vsel %vm368, 0, %v372
      %374 = vst [vmem:[#allocation2 + $0xc] sm:$0x1] %v373
      %v375 = vld [vmem:[#allocation2 + $0x18] sm:$0x1]
      %v376 = vsel %vm368, 0, %v375
      %377 = vst [vmem:[#allocation2 + $0x18] sm:$0x1] %v376
      %v378 = vld [vmem:[#allocation2 + $0x24] sm:$0x1]
      %v379 = vsel %vm368, 0, %v378
      %380 = vst [vmem:[#allocation2 + $0x24] sm:$0x1] %v379
      %v381 = vld [vmem:[#allocation2 + $0x30] sm:$0x1]
      %v382 = vsel %vm368, 0, %v381
      %383 = vst [vmem:[#allocation2 + $0x30] sm:$0x1] %v382
      %v384 = vld [vmem:[#allocation2 + $0x3c] sm:$0x1]
      %v385 = vsel %vm368, 0, %v384
      %386 = vst [vmem:[#allocation2 + $0x3c] sm:$0x1] %v385
      %v387 = vld [vmem:[#allocation2 + $0x48] sm:$0x1]
      %v388 = vsel %vm368, 0, %v387
      %389 = vst [vmem:[#allocation2 + $0x48] sm:$0x1] %v388
      %v390 = vld [vmem:[#allocation2 + $0x54] sm:$0x1]
      %v391 = vsel %vm368, 0, %v390
      %392 = vst [vmem:[#allocation2 + $0x54] sm:$0x1] %v391
      %v393 = vld [vmem:[#allocation2 + $0x60] sm:$0x1]
      %v394 = vsel %vm368, 0, %v393
      %395 = vst [vmem:[#allocation2 + $0x60] sm:$0x1] %v394
      %v396 = vld [vmem:[#allocation2 + $0x6c] sm:$0x1]
      %v397 = vsel %vm368, 0, %v396
      %398 = vst [vmem:[#allocation2 + $0x6c] sm:$0x1] %v397
      %v399 = vld [vmem:[#allocation2 + $0x78] sm:$0x1]
      %v400 = vsel %vm368, 0, %v399
      %401 = vst [vmem:[#allocation2 + $0x78] sm:$0x1] %v400
      %v402 = vld [vmem:[#allocation2 + $0x84] sm:$0x1]
      %v403 = vsel %vm368, 0, %v402
      %404 = vst [vmem:[#allocation2 + $0x84] sm:$0x1] %v403
      %v405 = vld [vmem:[#allocation2 + $0x90] sm:$0x1]
      %v406 = vsel %vm368, 0, %v405
      %407 = vst [vmem:[#allocation2 + $0x90] sm:$0x1] %v406
      %v408 = vld [vmem:[#allocation2 + $0x9c] sm:$0x1]
      %v409 = vsel %vm368, 0, %v408
      %410 = vst [vmem:[#allocation2 + $0x9c] sm:$0x1] %v409
      %v411 = vld [vmem:[#allocation2 + $0xa8] sm:$0x1]
      %v412 = vsel %vm368, 0, %v411
      %413 = vst [vmem:[#allocation2 + $0xa8] sm:$0x1] %v412
      %v414 = vld [vmem:[#allocation2 + $0xb4] sm:$0x1]
      %v415 = vsel %vm368, 0, %v414
      %416 = vst [vmem:[#allocation2 + $0xb4] sm:$0x1] %v415
      %v417 = vld [vmem:[#allocation2 + $0xc0] sm:$0x1]
      %v418 = vsel %vm368, 0, %v417
      %419 = vst [vmem:[#allocation2 + $0xc0] sm:$0x1] %v418
      %v420 = vld [vmem:[#allocation2 + $0xcc] sm:$0x1]
      %v421 = vsel %vm368, 0, %v420
      %422 = vst [vmem:[#allocation2 + $0xcc] sm:$0x1] %v421
      %vm423 = vsmask.f32 7938
      %vm424 = vmand %vm366, %vm423
      %v425 = vld [vmem:[#allocation2 + $0x8] sm:$0x1]
      %v426 = vsel %vm424, 0, %v425
      %427 = vst [vmem:[#allocation2 + $0x8] sm:$0x1] %v426
      %v428 = vld [vmem:[#allocation2 + $0x14] sm:$0x1]
      %v429 = vsel %vm424, 0, %v428
      %430 = vst [vmem:[#allocation2 + $0x14] sm:$0x1] %v429
      %v431 = vld [vmem:[#allocation2 + $0x20] sm:$0x1]
      %v432 = vsel %vm424, 0, %v431
      %433 = vst [vmem:[#allocation2 + $0x20] sm:$0x1] %v432
      %v434 = vld [vmem:[#allocation2 + $0x2c] sm:$0x1]
      %v435 = vsel %vm424, 0, %v434
      %436 = vst [vmem:[#allocation2 + $0x2c] sm:$0x1] %v435
      %v437 = vld [vmem:[#allocation2 + $0x38] sm:$0x1]
      %v438 = vsel %vm424, 0, %v437
      %439 = vst [vmem:[#allocation2 + $0x38] sm:$0x1] %v438
      %v440 = vld [vmem:[#allocation2 + $0x44] sm:$0x1]
      %v441 = vsel %vm424, 0, %v440
      %442 = vst [vmem:[#allocation2 + $0x44] sm:$0x1] %v441
      %v443 = vld [vmem:[#allocation2 + $0x50] sm:$0x1]
      %v444 = vsel %vm424, 0, %v443
      %445 = vst [vmem:[#allocation2 + $0x50] sm:$0x1] %v444
      %v446 = vld [vmem:[#allocation2 + $0x5c] sm:$0x1]
      %v447 = vsel %vm424, 0, %v446
      %448 = vst [vmem:[#allocation2 + $0x5c] sm:$0x1] %v447
      %v449 = vld [vmem:[#allocation2 + $0x68] sm:$0x1]
      %v450 = vsel %vm424, 0, %v449
      %451 = vst [vmem:[#allocation2 + $0x68] sm:$0x1] %v450
      %v452 = vld [vmem:[#allocation2 + $0x74] sm:$0x1]
      %v453 = vsel %vm424, 0, %v452
      %454 = vst [vmem:[#allocation2 + $0x74] sm:$0x1] %v453
      %v455 = vld [vmem:[#allocation2 + $0x80] sm:$0x1]
      %v456 = vsel %vm424, 0, %v455
      %457 = vst [vmem:[#allocation2 + $0x80] sm:$0x1] %v456
      %v458 = vld [vmem:[#allocation2 + $0x8c] sm:$0x1]
      %v459 = vsel %vm424, 0, %v458
      %460 = vst [vmem:[#allocation2 + $0x8c] sm:$0x1] %v459
      %v461 = vld [vmem:[#allocation2 + $0x98] sm:$0x1]
      %v462 = vsel %vm424, 0, %v461
      %463 = vst [vmem:[#allocation2 + $0x98] sm:$0x1] %v462
      %v464 = vld [vmem:[#allocation2 + $0xa4] sm:$0x1]
      %v465 = vsel %vm424, 0, %v464
      %466 = vst [vmem:[#allocation2 + $0xa4] sm:$0x1] %v465
      %v467 = vld [vmem:[#allocation2 + $0xb0] sm:$0x1]
      %v468 = vsel %vm424, 0, %v467
      %469 = vst [vmem:[#allocation2 + $0xb0] sm:$0x1] %v468
      %v470 = vld [vmem:[#allocation2 + $0xbc] sm:$0x1]
      %v471 = vsel %vm424, 0, %v470
      %472 = vst [vmem:[#allocation2 + $0xbc] sm:$0x1] %v471
      %v473 = vld [vmem:[#allocation2 + $0xc8] sm:$0x1]
      %v474 = vsel %vm424, 0, %v473
      %475 = vst [vmem:[#allocation2 + $0xc8] sm:$0x1] %v474
      %v476 = vld [vmem:[#allocation2 + $0xd4] sm:$0x1]
      %v477 = vsel %vm424, 0, %v476
      %478 = vst [vmem:[#allocation2 + $0xd4] sm:$0x1] %v477
      %vm479 = vsmask.f32 4368
      %vm480 = vmor %vm367, %vm479
      %v482 = vshrl.u32 %v183, 16
      %v484 = vrot.slane %v482, 7
      %v485 = vshll.u32 %v183, 16
      %v487 = vor.u32 %v484, %v485
      %v488 = vrot.slane %v484, 4
      %v490 = vshrl.u32 %v184, 16
      %v492 = vrot.slane %v490, 7
      %v493 = vshll.u32 %v184, 16
      %v495 = vor.u32 %v492, %v493
      %v496 = vsel %vm480, %v488, %v495
      %v497 = vrot.slane %v492, 4
      %v499 = vshrl.u32 %v185, 16
      %v501 = vrot.slane %v499, 7
      %v502 = vshll.u32 %v185, 16
      %v504 = vor.u32 %v501, %v502
      %v505 = vrot.slane %v501, 4
      %v507 = vshrl.u32 %v186, 16
      %v509 = vrot.slane %v507, 7
      %v510 = vshll.u32 %v186, 16
      %v512 = vor.u32 %v509, %v510
      %v513 = vsel %vm480, %v505, %v512
      %v514 = vrot.slane %v509, 4
      %v516 = vshrl.u32 %v187, 16
      %v518 = vrot.slane %v516, 7
      %v519 = vshll.u32 %v187, 16
      %v521 = vor.u32 %v518, %v519
      %v522 = vrot.slane %v518, 4
      %v524 = vshrl.u32 %v188, 16
      %v526 = vrot.slane %v524, 7
      %v527 = vshll.u32 %v188, 16
      %v529 = vor.u32 %v526, %v527
      %v530 = vsel %vm480, %v522, %v529
      %v531 = vrot.slane %v526, 4
      %v533 = vshrl.u32 %v189, 16
      %v535 = vrot.slane %v533, 7
      %v536 = vshll.u32 %v189, 16
      %v538 = vor.u32 %v535, %v536
      %v539 = vrot.slane %v535, 4
      %v541 = vshrl.u32 %v190, 16
      %v543 = vrot.slane %v541, 7
      %v544 = vshll.u32 %v190, 16
      %v546 = vor.u32 %v543, %v544
      %v547 = vsel %vm480, %v539, %v546
      %v548 = vrot.slane %v543, 4
      %v550 = vshrl.u32 %v191, 16
      %v552 = vrot.slane %v550, 7
      %v553 = vshll.u32 %v191, 16
      %v555 = vor.u32 %v552, %v553
      %v556 = vrot.slane %v552, 4
      %v558 = vshrl.u32 %v192, 16
      %v560 = vrot.slane %v558, 7
      %v561 = vshll.u32 %v192, 16
      %v563 = vor.u32 %v560, %v561
      %v564 = vsel %vm480, %v556, %v563
      %v565 = vrot.slane %v560, 4
      %v567 = vshrl.u32 %v193, 16
      %v569 = vrot.slane %v567, 7
      %v570 = vshll.u32 %v193, 16
      %v572 = vor.u32 %v569, %v570
      %v573 = vrot.slane %v569, 4
      %v575 = vshrl.u32 %v194, 16
      %v577 = vrot.slane %v575, 7
      %v578 = vshll.u32 %v194, 16
      %v580 = vor.u32 %v577, %v578
      %v581 = vsel %vm480, %v573, %v580
      %v582 = vrot.slane %v577, 4
      %v584 = vshrl.u32 %v195, 16
      %v586 = vrot.slane %v584, 7
      %v587 = vshll.u32 %v195, 16
      %v589 = vor.u32 %v586, %v587
      %v590 = vrot.slane %v586, 4
      %v592 = vshrl.u32 %v196, 16
      %v594 = vrot.slane %v592, 7
      %v595 = vshll.u32 %v196, 16
      %v597 = vor.u32 %v594, %v595
      %v598 = vsel %vm480, %v590, %v597
      %v599 = vrot.slane %v594, 4
      %v601 = vshrl.u32 %v197, 16
      %v603 = vrot.slane %v601, 7
      %v604 = vshll.u32 %v197, 16
      %v606 = vor.u32 %v603, %v604
      %v607 = vrot.slane %v603, 4
      %v609 = vshrl.u32 %v198, 16
      %v611 = vrot.slane %v609, 7
      %v612 = vshll.u32 %v198, 16
      %v614 = vor.u32 %v611, %v612
      %v615 = vsel %vm480, %v607, %v614
      %v616 = vrot.slane %v611, 4
      %v618 = vshrl.u32 %v199, 16
      %v620 = vrot.slane %v618, 7
      %v621 = vshll.u32 %v199, 16
      %v623 = vor.u32 %v620, %v621
      %v624 = vrot.slane %v620, 4
      %v626 = vshrl.u32 %v200, 16
      %v628 = vrot.slane %v626, 7
      %v629 = vshll.u32 %v200, 16
      %v631 = vor.u32 %v628, %v629
      %v632 = vsel %vm480, %v624, %v631
      %v633 = vrot.slane %v628, 4
      %v635 = vshrl.u32 %v201, 16
      %v637 = vrot.slane %v635, 7
      %v638 = vshll.u32 %v201, 16
      %v640 = vor.u32 %v637, %v638
      %v641 = vrot.slane %v637, 4
      %v643 = vshrl.u32 %v202, 16
      %v645 = vrot.slane %v643, 7
      %v646 = vshll.u32 %v202, 16
      %v648 = vor.u32 %v645, %v646
      %v649 = vsel %vm480, %v641, %v648
      %v650 = vrot.slane %v645, 4
      %v652 = vshrl.u32 %v203, 16
      %v654 = vrot.slane %v652, 7
      %v655 = vshll.u32 %v203, 16
      %v657 = vor.u32 %v654, %v655
      %v658 = vrot.slane %v654, 4
      %v660 = vshrl.u32 %v204, 16
      %v662 = vrot.slane %v660, 7
      %v663 = vshll.u32 %v204, 16
      %v665 = vor.u32 %v662, %v663
      %v666 = vsel %vm480, %v658, %v665
      %v667 = vrot.slane %v662, 4
      %v669 = vshrl.u32 %v205, 16
      %v671 = vrot.slane %v669, 7
      %v672 = vshll.u32 %v205, 16
      %v674 = vor.u32 %v671, %v672
      %v675 = vrot.slane %v671, 4
      %v677 = vshrl.u32 %v206, 16
      %v679 = vrot.slane %v677, 7
      %v680 = vshll.u32 %v206, 16
      %v682 = vor.u32 %v679, %v680
      %v683 = vsel %vm480, %v675, %v682
      %v684 = vrot.slane %v679, 4
      %v686 = vshrl.u32 %v207, 16
      %v688 = vrot.slane %v686, 7
      %v689 = vshll.u32 %v207, 16
      %v691 = vor.u32 %v688, %v689
      %v692 = vrot.slane %v688, 4
      %v694 = vshrl.u32 %v208, 16
      %v696 = vrot.slane %v694, 7
      %v697 = vshll.u32 %v208, 16
      %v699 = vor.u32 %v696, %v697
      %v700 = vsel %vm480, %v692, %v699
      %v701 = vrot.slane %v696, 4
      %v703 = vshrl.u32 %v209, 16
      %v705 = vrot.slane %v703, 7
      %v706 = vshll.u32 %v209, 16
      %v708 = vor.u32 %v705, %v706
      %v709 = vrot.slane %v705, 4
      %v711 = vshrl.u32 %v210, 16
      %v713 = vrot.slane %v711, 7
      %v714 = vshll.u32 %v210, 16
      %v716 = vor.u32 %v713, %v714
      %v717 = vsel %vm480, %v709, %v716
      %v718 = vrot.slane %v713, 4
      %v720 = vshrl.u32 %v211, 16
      %v722 = vrot.slane %v720, 7
      %v723 = vshll.u32 %v211, 16
      %v725 = vor.u32 %v722, %v723
      %v726 = vrot.slane %v722, 4
      %v728 = vshrl.u32 %v212, 16
      %v730 = vrot.slane %v728, 7
      %v731 = vshll.u32 %v212, 16
      %v733 = vor.u32 %v730, %v731
      %v734 = vsel %vm480, %v726, %v733
      %v735 = vrot.slane %v730, 4
      %v737 = vshrl.u32 %v213, 16
      %v739 = vrot.slane %v737, 7
      %v740 = vshll.u32 %v213, 16
      %v742 = vor.u32 %v739, %v740
      %v743 = vrot.slane %v739, 4
      %v745 = vshrl.u32 %v214, 16
      %v747 = vrot.slane %v745, 7
      %v748 = vshll.u32 %v214, 16
      %v750 = vor.u32 %v747, %v748
      %v751 = vsel %vm480, %v743, %v750
      %v752 = vrot.slane %v747, 4
      %s801 = scalar_lea.vmem [#allocation2], 12
      %vm802 = vcmask 1043456
      %vm803 = vmand %vm802, %vm423
      %v804 = vld [vmem:[%s801] sm:$0xf]
      %v805 = vsel %vm803, %v487, %v804
      %806 = vst [vmem:[%s801] sm:$0xf] %v805
      %807 = vst [vmem:[%s801 + $0x4] sm:$0xf] %v496
      %v808 = vld [vmem:[%s801 + $0x8] sm:$0x1]
      %v809 = vsel %vm368, %v497, %v808
      %810 = vst [vmem:[%s801 + $0x8] sm:$0x1] %v809
      %v811 = vld [vmem:[%s801 + $0xc] sm:$0xf]
      %v812 = vsel %vm803, %v504, %v811
      %813 = vst [vmem:[%s801 + $0xc] sm:$0xf] %v812
      %814 = vst [vmem:[%s801 + $0x10] sm:$0xf] %v513
      %v815 = vld [vmem:[%s801 + $0x14] sm:$0x1]
      %v816 = vsel %vm368, %v514, %v815
      %817 = vst [vmem:[%s801 + $0x14] sm:$0x1] %v816
      %v818 = vld [vmem:[%s801 + $0x18] sm:$0xf]
      %v819 = vsel %vm803, %v521, %v818
      %820 = vst [vmem:[%s801 + $0x18] sm:$0xf] %v819
      %821 = vst [vmem:[%s801 + $0x1c] sm:$0xf] %v530
      %v822 = vld [vmem:[%s801 + $0x20] sm:$0x1]
      %v823 = vsel %vm368, %v531, %v822
      %824 = vst [vmem:[%s801 + $0x20] sm:$0x1] %v823
      %v825 = vld [vmem:[%s801 + $0x24] sm:$0xf]
      %v826 = vsel %vm803, %v538, %v825
      %827 = vst [vmem:[%s801 + $0x24] sm:$0xf] %v826
      %828 = vst [vmem:[%s801 + $0x28] sm:$0xf] %v547
      %v829 = vld [vmem:[%s801 + $0x2c] sm:$0x1]
      %v830 = vsel %vm368, %v548, %v829
      %831 = vst [vmem:[%s801 + $0x2c] sm:$0x1] %v830
      %v832 = vld [vmem:[%s801 + $0x30] sm:$0xf]
      %v833 = vsel %vm803, %v555, %v832
      %834 = vst [vmem:[%s801 + $0x30] sm:$0xf] %v833
      %835 = vst [vmem:[%s801 + $0x34] sm:$0xf] %v564
      %v836 = vld [vmem:[%s801 + $0x38] sm:$0x1]
      %v837 = vsel %vm368, %v565, %v836
      %838 = vst [vmem:[%s801 + $0x38] sm:$0x1] %v837
      %v839 = vld [vmem:[%s801 + $0x3c] sm:$0xf]
      %v840 = vsel %vm803, %v572, %v839
      %841 = vst [vmem:[%s801 + $0x3c] sm:$0xf] %v840
      %842 = vst [vmem:[%s801 + $0x40] sm:$0xf] %v581
      %v843 = vld [vmem:[%s801 + $0x44] sm:$0x1]
      %v844 = vsel %vm368, %v582, %v843
      %845 = vst [vmem:[%s801 + $0x44] sm:$0x1] %v844
      %v846 = vld [vmem:[%s801 + $0x48] sm:$0xf]
      %v847 = vsel %vm803, %v589, %v846
      %848 = vst [vmem:[%s801 + $0x48] sm:$0xf] %v847
      %849 = vst [vmem:[%s801 + $0x4c] sm:$0xf] %v598
      %v850 = vld [vmem:[%s801 + $0x50] sm:$0x1]
      %v851 = vsel %vm368, %v599, %v850
      %852 = vst [vmem:[%s801 + $0x50] sm:$0x1] %v851
      %v853 = vld [vmem:[%s801 + $0x54] sm:$0xf]
      %v854 = vsel %vm803, %v606, %v853
      %855 = vst [vmem:[%s801 + $0x54] sm:$0xf] %v854
      %856 = vst [vmem:[%s801 + $0x58] sm:$0xf] %v615
      %v857 = vld [vmem:[%s801 + $0x5c] sm:$0x1]
      %v858 = vsel %vm368, %v616, %v857
      %859 = vst [vmem:[%s801 + $0x5c] sm:$0x1] %v858
      %v860 = vld [vmem:[%s801 + $0x60] sm:$0xf]
      %v861 = vsel %vm803, %v623, %v860
      %862 = vst [vmem:[%s801 + $0x60] sm:$0xf] %v861
      %863 = vst [vmem:[%s801 + $0x64] sm:$0xf] %v632
      %v864 = vld [vmem:[%s801 + $0x68] sm:$0x1]
      %v865 = vsel %vm368, %v633, %v864
      %866 = vst [vmem:[%s801 + $0x68] sm:$0x1] %v865
      %v867 = vld [vmem:[%s801 + $0x6c] sm:$0xf]
      %v868 = vsel %vm803, %v640, %v867
      %869 = vst [vmem:[%s801 + $0x6c] sm:$0xf] %v868
      %870 = vst [vmem:[%s801 + $0x70] sm:$0xf] %v649
      %v871 = vld [vmem:[%s801 + $0x74] sm:$0x1]
      %v872 = vsel %vm368, %v650, %v871
      %873 = vst [vmem:[%s801 + $0x74] sm:$0x1] %v872
      %v874 = vld [vmem:[%s801 + $0x78] sm:$0xf]
      %v875 = vsel %vm803, %v657, %v874
      %876 = vst [vmem:[%s801 + $0x78] sm:$0xf] %v875
      %877 = vst [vmem:[%s801 + $0x7c] sm:$0xf] %v666
      %v878 = vld [vmem:[%s801 + $0x80] sm:$0x1]
      %v879 = vsel %vm368, %v667, %v878
      %880 = vst [vmem:[%s801 + $0x80] sm:$0x1] %v879
      %v881 = vld [vmem:[%s801 + $0x84] sm:$0xf]
      %v882 = vsel %vm803, %v674, %v881
      %883 = vst [vmem:[%s801 + $0x84] sm:$0xf] %v882
      %884 = vst [vmem:[%s801 + $0x88] sm:$0xf] %v683
      %v885 = vld [vmem:[%s801 + $0x8c] sm:$0x1]
      %v886 = vsel %vm368, %v684, %v885
      %887 = vst [vmem:[%s801 + $0x8c] sm:$0x1] %v886
      %v888 = vld [vmem:[%s801 + $0x90] sm:$0xf]
      %v889 = vsel %vm803, %v691, %v888
      %890 = vst [vmem:[%s801 + $0x90] sm:$0xf] %v889
      %891 = vst [vmem:[%s801 + $0x94] sm:$0xf] %v700
      %v892 = vld [vmem:[%s801 + $0x98] sm:$0x1]
      %v893 = vsel %vm368, %v701, %v892
      %894 = vst [vmem:[%s801 + $0x98] sm:$0x1] %v893
      %v895 = vld [vmem:[%s801 + $0x9c] sm:$0xf]
      %v896 = vsel %vm803, %v708, %v895
      %897 = vst [vmem:[%s801 + $0x9c] sm:$0xf] %v896
      %898 = vst [vmem:[%s801 + $0xa0] sm:$0xf] %v717
      %v899 = vld [vmem:[%s801 + $0xa4] sm:$0x1]
      %v900 = vsel %vm368, %v718, %v899
      %901 = vst [vmem:[%s801 + $0xa4] sm:$0x1] %v900
      %v902 = vld [vmem:[%s801 + $0xa8] sm:$0xf]
      %v903 = vsel %vm803, %v725, %v902
      %904 = vst [vmem:[%s801 + $0xa8] sm:$0xf] %v903
      %905 = vst [vmem:[%s801 + $0xac] sm:$0xf] %v734
      %v906 = vld [vmem:[%s801 + $0xb0] sm:$0x1]
      %v907 = vsel %vm368, %v735, %v906
      %908 = vst [vmem:[%s801 + $0xb0] sm:$0x1] %v907
      %v909 = vld [vmem:[%s801 + $0xb4] sm:$0xf]
      %v910 = vsel %vm803, %v742, %v909
      %911 = vst [vmem:[%s801 + $0xb4] sm:$0xf] %v910
      %912 = vst [vmem:[%s801 + $0xb8] sm:$0xf] %v751
      %v913 = vld [vmem:[%s801 + $0xbc] sm:$0x1]
      %v914 = vsel %vm368, %v752, %v913
      %915 = vst [vmem:[%s801 + $0xbc] sm:$0x1] %v914
      %v916 = vld [vmem:[#allocation2] sm:$0xf]
      %v917 = vld [vmem:[#allocation2 + $0x4] sm:$0xf]
      %v918 = vld [vmem:[#allocation2 + $0x8] sm:$0x1]
      %v919 = vld [vmem:[#allocation2 + $0xc] sm:$0xf]
      %v920 = vld [vmem:[#allocation2 + $0x10] sm:$0xf]
      %v921 = vld [vmem:[#allocation2 + $0x14] sm:$0x1]
      %v922 = vld [vmem:[#allocation2 + $0x18] sm:$0xf]
      %v923 = vld [vmem:[#allocation2 + $0x1c] sm:$0xf]
      %v924 = vld [vmem:[#allocation2 + $0x20] sm:$0x1]
      %v925 = vld [vmem:[#allocation2 + $0x24] sm:$0xf]
      %v926 = vld [vmem:[#allocation2 + $0x28] sm:$0xf]
      %v927 = vld [vmem:[#allocation2 + $0x2c] sm:$0x1]
      %v928 = vld [vmem:[#allocation2 + $0x30] sm:$0xf]
      %v929 = vld [vmem:[#allocation2 + $0x34] sm:$0xf]
      %v930 = vld [vmem:[#allocation2 + $0x38] sm:$0x1]
      %v931 = vld [vmem:[#allocation2 + $0x3c] sm:$0xf]
      %v932 = vld [vmem:[#allocation2 + $0x40] sm:$0xf]
      %v933 = vld [vmem:[#allocation2 + $0x44] sm:$0x1]
      %v934 = vld [vmem:[#allocation2 + $0x48] sm:$0xf]
      %v935 = vld [vmem:[#allocation2 + $0x4c] sm:$0xf]
      %v936 = vld [vmem:[#allocation2 + $0x50] sm:$0x1]
      %v937 = vld [vmem:[#allocation2 + $0x54] sm:$0xf]
      %v938 = vld [vmem:[#allocation2 + $0x58] sm:$0xf]
      %v939 = vld [vmem:[#allocation2 + $0x5c] sm:$0x1]
      %v940 = vld [vmem:[#allocation2 + $0x60] sm:$0xf]
      %v941 = vld [vmem:[#allocation2 + $0x64] sm:$0xf]
      %v942 = vld [vmem:[#allocation2 + $0x68] sm:$0x1]
      %v943 = vld [vmem:[#allocation2 + $0x6c] sm:$0xf]
      %v944 = vld [vmem:[#allocation2 + $0x70] sm:$0xf]
      %v945 = vld [vmem:[#allocation2 + $0x74] sm:$0x1]
      %v946 = vld [vmem:[#allocation2 + $0x78] sm:$0xf]
      %v947 = vld [vmem:[#allocation2 + $0x7c] sm:$0xf]
      %v948 = vld [vmem:[#allocation2 + $0x80] sm:$0x1]
      %v949 = vld [vmem:[#allocation2 + $0x84] sm:$0xf]
      %v950 = vld [vmem:[#allocation2 + $0x88] sm:$0xf]
      %v951 = vld [vmem:[#allocation2 + $0x8c] sm:$0x1]
      %v952 = vld [vmem:[#allocation2 + $0x90] sm:$0xf]
      %v953 = vld [vmem:[#allocation2 + $0x94] sm:$0xf]
      %v954 = vld [vmem:[#allocation2 + $0x98] sm:$0x1]
      %v955 = vld [vmem:[#allocation2 + $0x9c] sm:$0xf]
      %v956 = vld [vmem:[#allocation2 + $0xa0] sm:$0xf]
      %v957 = vld [vmem:[#allocation2 + $0xa4] sm:$0x1]
      %v958 = vld [vmem:[#allocation2 + $0xa8] sm:$0xf]
      %v959 = vld [vmem:[#allocation2 + $0xac] sm:$0xf]
      %v960 = vld [vmem:[#allocation2 + $0xb0] sm:$0x1]
      %v961 = vld [vmem:[#allocation2 + $0xb4] sm:$0xf]
      %v962 = vld [vmem:[#allocation2 + $0xb8] sm:$0xf]
      %v963 = vld [vmem:[#allocation2 + $0xbc] sm:$0x1]
      %v964 = vld [vmem:[#allocation2 + $0xc0] sm:$0xf]
      %v965 = vld [vmem:[#allocation2 + $0xc4] sm:$0xf]
      %v966 = vld [vmem:[#allocation2 + $0xc8] sm:$0x1]
      %v967 = vld [vmem:[#allocation2 + $0xcc] sm:$0xf]
      %v968 = vld [vmem:[#allocation2 + $0xd0] sm:$0xf]
      %v969 = vld [vmem:[#allocation2 + $0xd4] sm:$0x1]
      %v1002 = vunpack.c.l.b16 %v916
      %v1003 = vunpack.c.l.b16 %v917
      %v1004 = vunpack.c.l.b16 %v919
      %v1005 = vunpack.c.l.b16 %v920
      %v1006 = vunpack.c.l.b16 %v922
      %v1007 = vunpack.c.l.b16 %v923
      %v1008 = vunpack.c.l.b16 %v925
      %v1009 = vunpack.c.l.b16 %v926
      %v1010 = vunpack.c.l.b16 %v928
      %v1011 = vunpack.c.l.b16 %v929
      %v1012 = vunpack.c.l.b16 %v931
      %v1013 = vunpack.c.l.b16 %v932
      %v1014 = vunpack.c.l.b16 %v934
      %v1015 = vunpack.c.l.b16 %v935
      %v1016 = vunpack.c.l.b16 %v937
      %v1017 = vunpack.c.l.b16 %v938
      %v1018 = vunpack.c.l.b16 %v940
      %v1019 = vunpack.c.l.b16 %v941
      %v1020 = vunpack.c.l.b16 %v943
      %v1021 = vunpack.c.l.b16 %v944
      %v1022 = vunpack.c.l.b16 %v946
      %v1023 = vunpack.c.l.b16 %v947
      %v1024 = vunpack.c.l.b16 %v949
      %v1025 = vunpack.c.l.b16 %v950
      %v1026 = vunpack.c.l.b16 %v952
      %v1027 = vunpack.c.l.b16 %v953
      %v1028 = vunpack.c.l.b16 %v955
      %v1029 = vunpack.c.l.b16 %v956
      %v1030 = vunpack.c.l.b16 %v958
      %v1031 = vunpack.c.l.b16 %v959
      %v1032 = vunpack.c.l.b16 %v961
      %v1033 = vunpack.c.l.b16 %v962
      %v1034 = vpack.c.b16 %v1003, %v1002
      %v1035 = vpack.c.b16 %v1005, %v1004
      %v1036 = vpack.c.b16 %v1007, %v1006
      %v1037 = vpack.c.b16 %v1009, %v1008
      %v1038 = vpack.c.b16 %v1011, %v1010
      %v1039 = vpack.c.b16 %v1013, %v1012
      %v1040 = vpack.c.b16 %v1015, %v1014
      %v1041 = vpack.c.b16 %v1017, %v1016
      %v1042 = vpack.c.b16 %v1019, %v1018
      %v1043 = vpack.c.b16 %v1021, %v1020
      %v1044 = vpack.c.b16 %v1023, %v1022
      %v1045 = vpack.c.b16 %v1025, %v1024
      %v1046 = vpack.c.b16 %v1027, %v1026
      %v1047 = vpack.c.b16 %v1029, %v1028
      %v1048 = vpack.c.b16 %v1031, %v1030
      %v1049 = vpack.c.b16 %v1033, %v1032
      %v1082 = vunpack.c.l.b16 %v918
      %v1083 = vunpack.c.l.b16 %v921
      %v1084 = vunpack.c.l.b16 %v924
      %v1085 = vunpack.c.l.b16 %v927
      %v1086 = vunpack.c.l.b16 %v930
      %v1087 = vunpack.c.l.b16 %v933
      %v1088 = vunpack.c.l.b16 %v936
      %v1089 = vunpack.c.l.b16 %v939
      %v1090 = vunpack.c.l.b16 %v942
      %v1091 = vunpack.c.l.b16 %v945
      %v1092 = vunpack.c.l.b16 %v948
      %v1093 = vunpack.c.l.b16 %v951
      %v1094 = vunpack.c.l.b16 %v954
      %v1095 = vunpack.c.l.b16 %v957
      %v1096 = vunpack.c.l.b16 %v960
      %v1097 = vunpack.c.l.b16 %v963
      %v1098 = vpack.c.b16 %v1082, %v1082
      %v1099 = vpack.c.b16 %v1083, %v1083
      %v1100 = vpack.c.b16 %v1084, %v1084
      %v1101 = vpack.c.b16 %v1085, %v1085
      %v1102 = vpack.c.b16 %v1086, %v1086
      %v1103 = vpack.c.b16 %v1087, %v1087
      %v1104 = vpack.c.b16 %v1088, %v1088
      %v1105 = vpack.c.b16 %v1089, %v1089
      %v1106 = vpack.c.b16 %v1090, %v1090
      %v1107 = vpack.c.b16 %v1091, %v1091
      %v1108 = vpack.c.b16 %v1092, %v1092
      %v1109 = vpack.c.b16 %v1093, %v1093
      %v1110 = vpack.c.b16 %v1094, %v1094
      %v1111 = vpack.c.b16 %v1095, %v1095
      %v1112 = vpack.c.b16 %v1096, %v1096
      %v1113 = vpack.c.b16 %v1097, %v1097
      %vm1114 = vsmask.f32 7424
      %v1116 = vshrl.u32 %v1034, 16
      %v1118 = vshll.u32 %v1034, 16
      %v1120 = vrot.slane %v1118, 1
      %v1121 = vor.u32 %v1116, %v1120
      %v1123 = vshll.u32 %v1098, 16
      %v1125 = vrot.slane %v1123, 1
      %v1126 = vsel %vm1114, %v1121, %v1125
      %v1128 = vshrl.u32 %v1035, 16
      %v1130 = vshll.u32 %v1035, 16
      %v1132 = vrot.slane %v1130, 1
      %v1133 = vor.u32 %v1128, %v1132
      %v1135 = vshll.u32 %v1099, 16
      %v1137 = vrot.slane %v1135, 1
      %v1138 = vsel %vm1114, %v1133, %v1137
      %v1140 = vshrl.u32 %v1036, 16
      %v1142 = vshll.u32 %v1036, 16
      %v1144 = vrot.slane %v1142, 1
      %v1145 = vor.u32 %v1140, %v1144
      %v1147 = vshll.u32 %v1100, 16
      %v1149 = vrot.slane %v1147, 1
      %v1150 = vsel %vm1114, %v1145, %v1149
      %v1152 = vshrl.u32 %v1037, 16
      %v1154 = vshll.u32 %v1037, 16
      %v1156 = vrot.slane %v1154, 1
      %v1157 = vor.u32 %v1152, %v1156
      %v1159 = vshll.u32 %v1101, 16
      %v1161 = vrot.slane %v1159, 1
      %v1162 = vsel %vm1114, %v1157, %v1161
      %v1164 = vshrl.u32 %v1038, 16
      %v1166 = vshll.u32 %v1038, 16
      %v1168 = vrot.slane %v1166, 1
      %v1169 = vor.u32 %v1164, %v1168
      %v1171 = vshll.u32 %v1102, 16
      %v1173 = vrot.slane %v1171, 1
      %v1174 = vsel %vm1114, %v1169, %v1173
      %v1176 = vshrl.u32 %v1039, 16
      %v1178 = vshll.u32 %v1039, 16
      %v1180 = vrot.slane %v1178, 1
      %v1181 = vor.u32 %v1176, %v1180
      %v1183 = vshll.u32 %v1103, 16
      %v1185 = vrot.slane %v1183, 1
      %v1186 = vsel %vm1114, %v1181, %v1185
      %v1188 = vshrl.u32 %v1040, 16
      %v1190 = vshll.u32 %v1040, 16
      %v1192 = vrot.slane %v1190, 1
      %v1193 = vor.u32 %v1188, %v1192
      %v1195 = vshll.u32 %v1104, 16
      %v1197 = vrot.slane %v1195, 1
      %v1198 = vsel %vm1114, %v1193, %v1197
      %v1200 = vshrl.u32 %v1041, 16
      %v1202 = vshll.u32 %v1041, 16
      %v1204 = vrot.slane %v1202, 1
      %v1205 = vor.u32 %v1200, %v1204
      %v1207 = vshll.u32 %v1105, 16
      %v1209 = vrot.slane %v1207, 1
      %v1210 = vsel %vm1114, %v1205, %v1209
      %v1212 = vshrl.u32 %v1042, 16
      %v1214 = vshll.u32 %v1042, 16
      %v1216 = vrot.slane %v1214, 1
      %v1217 = vor.u32 %v1212, %v1216
      %v1219 = vshll.u32 %v1106, 16
      %v1221 = vrot.slane %v1219, 1
      %v1222 = vsel %vm1114, %v1217, %v1221
      %v1224 = vshrl.u32 %v1043, 16
      %v1226 = vshll.u32 %v1043, 16
      %v1228 = vrot.slane %v1226, 1
      %v1229 = vor.u32 %v1224, %v1228
      %v1231 = vshll.u32 %v1107, 16
      %v1233 = vrot.slane %v1231, 1
      %v1234 = vsel %vm1114, %v1229, %v1233
      %v1236 = vshrl.u32 %v1044, 16
      %v1238 = vshll.u32 %v1044, 16
      %v1240 = vrot.slane %v1238, 1
      %v1241 = vor.u32 %v1236, %v1240
      %v1243 = vshll.u32 %v1108, 16
      %v1245 = vrot.slane %v1243, 1
      %v1246 = vsel %vm1114, %v1241, %v1245
      %v1248 = vshrl.u32 %v1045, 16
      %v1250 = vshll.u32 %v1045, 16
      %v1252 = vrot.slane %v1250, 1
      %v1253 = vor.u32 %v1248, %v1252
      %v1255 = vshll.u32 %v1109, 16
      %v1257 = vrot.slane %v1255, 1
      %v1258 = vsel %vm1114, %v1253, %v1257
      %v1260 = vshrl.u32 %v1046, 16
      %v1262 = vshll.u32 %v1046, 16
      %v1264 = vrot.slane %v1262, 1
      %v1265 = vor.u32 %v1260, %v1264
      %v1267 = vshll.u32 %v1110, 16
      %v1269 = vrot.slane %v1267, 1
      %v1270 = vsel %vm1114, %v1265, %v1269
      %v1272 = vshrl.u32 %v1047, 16
      %v1274 = vshll.u32 %v1047, 16
      %v1276 = vrot.slane %v1274, 1
      %v1277 = vor.u32 %v1272, %v1276
      %v1279 = vshll.u32 %v1111, 16
      %v1281 = vrot.slane %v1279, 1
      %v1282 = vsel %vm1114, %v1277, %v1281
      %v1284 = vshrl.u32 %v1048, 16
      %v1286 = vshll.u32 %v1048, 16
      %v1288 = vrot.slane %v1286, 1
      %v1289 = vor.u32 %v1284, %v1288
      %v1291 = vshll.u32 %v1112, 16
      %v1293 = vrot.slane %v1291, 1
      %v1294 = vsel %vm1114, %v1289, %v1293
      %v1296 = vshrl.u32 %v1049, 16
      %v1298 = vshll.u32 %v1049, 16
      %v1300 = vrot.slane %v1298, 1
      %v1301 = vor.u32 %v1296, %v1300
      %v1303 = vshll.u32 %v1113, 16
      %v1305 = vrot.slane %v1303, 1
      %v1306 = vsel %vm1114, %v1301, %v1305
      %vm1323 = vcmask 1046528
      %v1324 = vrot.slane %v1034, 1
      %v1325 = vrot.slane %v1098, 1
      %v1326 = vsel %vm1323, %v1324, %v1325
      %v1327 = vrot.slane %v1035, 1
      %v1328 = vrot.slane %v1099, 1
      %v1329 = vsel %vm1323, %v1327, %v1328
      %v1330 = vrot.slane %v1036, 1
      %v1331 = vrot.slane %v1100, 1
      %v1332 = vsel %vm1323, %v1330, %v1331
      %v1333 = vrot.slane %v1037, 1
      %v1334 = vrot.slane %v1101, 1
      %v1335 = vsel %vm1323, %v1333, %v1334
      %v1336 = vrot.slane %v1038, 1
      %v1337 = vrot.slane %v1102, 1
      %v1338 = vsel %vm1323, %v1336, %v1337
      %v1339 = vrot.slane %v1039, 1
      %v1340 = vrot.slane %v1103, 1
      %v1341 = vsel %vm1323, %v1339, %v1340
      %v1342 = vrot.slane %v1040, 1
      %v1343 = vrot.slane %v1104, 1
      %v1344 = vsel %vm1323, %v1342, %v1343
      %v1345 = vrot.slane %v1041, 1
      %v1346 = vrot.slane %v1105, 1
      %v1347 = vsel %vm1323, %v1345, %v1346
      %v1348 = vrot.slane %v1042, 1
      %v1349 = vrot.slane %v1106, 1
      %v1350 = vsel %vm1323, %v1348, %v1349
      %v1351 = vrot.slane %v1043, 1
      %v1352 = vrot.slane %v1107, 1
      %v1353 = vsel %vm1323, %v1351, %v1352
      %v1354 = vrot.slane %v1044, 1
      %v1355 = vrot.slane %v1108, 1
      %v1356 = vsel %vm1323, %v1354, %v1355
      %v1357 = vrot.slane %v1045, 1
      %v1358 = vrot.slane %v1109, 1
      %v1359 = vsel %vm1323, %v1357, %v1358
      %v1360 = vrot.slane %v1046, 1
      %v1361 = vrot.slane %v1110, 1
      %v1362 = vsel %vm1323, %v1360, %v1361
      %v1363 = vrot.slane %v1047, 1
      %v1364 = vrot.slane %v1111, 1
      %v1365 = vsel %vm1323, %v1363, %v1364
      %v1366 = vrot.slane %v1048, 1
      %v1367 = vrot.slane %v1112, 1
      %v1368 = vsel %vm1323, %v1366, %v1367
      %v1369 = vrot.slane %v1049, 1
      %v1370 = vrot.slane %v1113, 1
      %v1371 = vsel %vm1323, %v1369, %v1370
      %v1390 = vunpack.c.l.b16 %v964
      %v1391 = vunpack.c.l.b16 %v965
      %v1392 = vpack.c.b16 %v1391, %v1390
      %v1395 = vunpack.c.l.b16 %v966
      %v1396 = vpack.c.b16 %v1395, %v1395
      %v1398 = vshrl.u32 %v1392, 16
      %v1400 = vshll.u32 %v1392, 16
      %v1402 = vrot.slane %v1400, 1
      %v1403 = vor.u32 %v1398, %v1402
      %v1405 = vshll.u32 %v1396, 16
      %v1407 = vrot.slane %v1405, 1
      %v1408 = vsel %vm1114, %v1403, %v1407
      %v1410 = vrot.slane %v1392, 1
      %v1411 = vrot.slane %v1396, 1
      %v1412 = vsel %vm1323, %v1410, %v1411
      %v1416 = vunpack.c.l.b16 %v967
      %v1417 = vunpack.c.l.b16 %v968
      %v1418 = vpack.c.b16 %v1417, %v1416
      %v1421 = vunpack.c.l.b16 %v969
      %v1422 = vpack.c.b16 %v1421, %v1421
      %v1424 = vshrl.u32 %v1418, 16
      %v1426 = vshll.u32 %v1418, 16
      %v1428 = vrot.slane %v1426, 1
      %v1429 = vor.u32 %v1424, %v1428
      %v1431 = vshll.u32 %v1422, 16
      %v1433 = vrot.slane %v1431, 1
      %v1434 = vsel %vm1114, %v1429, %v1433
      %v1436 = vrot.slane %v1418, 1
      %v1437 = vrot.slane %v1422, 1
      %v1438 = vsel %vm1323, %v1436, %v1437
      %v1584 = vunpack.c.l.b16 %v215
      %v1585 = vunpack.c.l.b16 %v216
      %v1586 = vunpack.c.l.b16 %v217
      %v1587 = vunpack.c.l.b16 %v218
      %v1588 = vunpack.c.l.b16 %v219
      %v1589 = vunpack.c.l.b16 %v220
      %v1590 = vunpack.c.l.b16 %v221
      %v1591 = vunpack.c.l.b16 %v222
      %v1592 = vunpack.c.l.b16 %v223
      %v1593 = vunpack.c.l.b16 %v224
      %v1594 = vunpack.c.l.b16 %v225
      %v1595 = vunpack.c.l.b16 %v226
      %v1596 = vunpack.c.l.b16 %v227
      %v1597 = vunpack.c.l.b16 %v228
      %v1598 = vunpack.c.l.b16 %v229
      %v1599 = vunpack.c.l.b16 %v230
      %v1600 = vunpack.c.l.b16 %v231
      %v1601 = vunpack.c.l.b16 %v232
      %v1602 = vunpack.c.l.b16 %v233
      %v1603 = vunpack.c.l.b16 %v234
      %v1604 = vunpack.c.l.b16 %v235
      %v1605 = vunpack.c.l.b16 %v236
      %v1606 = vunpack.c.l.b16 %v237
      %v1607 = vunpack.c.l.b16 %v238
      %v1608 = vunpack.c.l.b16 %v239
      %v1609 = vunpack.c.l.b16 %v240
      %v1610 = vunpack.c.l.b16 %v241
      %v1611 = vunpack.c.l.b16 %v242
      %v1612 = vunpack.c.l.b16 %v243
      %v1613 = vunpack.c.l.b16 %v244
      %v1614 = vunpack.c.l.b16 %v245
      %v1615 = vunpack.c.l.b16 %v246
      %v1616 = vunpack.c.l.b16 %v247
      %v1617 = vunpack.c.l.b16 %v248
      %v1618 = vunpack.c.l.b16 %v249
      %v1619 = vunpack.c.l.b16 %v250
      %v1620 = vunpack.c.l.b16 %v251
      %v1621 = vunpack.c.l.b16 %v252
      %v1622 = vunpack.c.l.b16 %v253
      %v1623 = vunpack.c.l.b16 %v254
      %v1624 = vunpack.c.l.b16 %v255
      %v1625 = vunpack.c.l.b16 %v256
      %v1626 = vunpack.c.l.b16 %v257
      %v1627 = vunpack.c.l.b16 %v258
      %v1628 = vunpack.c.l.b16 %v259
      %v1629 = vunpack.c.l.b16 %v260
      %v1630 = vunpack.c.l.b16 %v261
      %v1631 = vunpack.c.l.b16 %v262
      %v1632 = vunpack.c.l.b16 %v263
      %v1633 = vunpack.c.l.b16 %v264
      %v1634 = vunpack.c.l.b16 %v265
      %v1635 = vunpack.c.l.b16 %v266
      %v1636 = vunpack.c.l.b16 %v267
      %v1637 = vunpack.c.l.b16 %v268
      %v1638 = vunpack.c.l.b16 %v269
      %v1639 = vunpack.c.l.b16 %v270
      %v1640 = vunpack.c.l.b16 %v271
      %v1641 = vunpack.c.l.b16 %v272
      %v1642 = vunpack.c.l.b16 %v273
      %v1643 = vunpack.c.l.b16 %v274
      %v1644 = vunpack.c.l.b16 %v275
      %v1645 = vunpack.c.l.b16 %v276
      %v1646 = vunpack.c.l.b16 %v277
      %v1647 = vunpack.c.l.b16 %v278
      %v1648 = vunpack.c.l.b16 %v279
      %v1649 = vunpack.c.l.b16 %v280
      %v1650 = vunpack.c.l.b16 %v281
      %v1651 = vunpack.c.l.b16 %v282
      %v1652 = vunpack.c.l.b16 %v283
      %v1653 = vunpack.c.l.b16 %v284
      %v1654 = vunpack.c.l.b16 %v285
      %v1655 = vunpack.c.l.b16 %v286
      %v1656 = vunpack.c.l.b16 %v287
      %v1657 = vunpack.c.l.b16 %v288
      %v1658 = vunpack.c.l.b16 %v289
      %v1659 = vunpack.c.l.b16 %v290
      %v1660 = vunpack.c.l.b16 %v291
      %v1661 = vunpack.c.l.b16 %v292
      %v1662 = vunpack.c.l.b16 %v293
      %v1663 = vunpack.c.l.b16 %v294
      %v1664 = vunpack.c.l.b16 %v295
      %v1665 = vunpack.c.l.b16 %v296
      %v1666 = vunpack.c.l.b16 %v297
      %v1667 = vunpack.c.l.b16 %v298
      %v1668 = vunpack.c.l.b16 %v299
      %v1669 = vunpack.c.l.b16 %v300
      %v1670 = vunpack.c.l.b16 %v301
      %v1671 = vunpack.c.l.b16 %v302
      %v1672 = vunpack.c.l.b16 %v303
      %v1673 = vunpack.c.l.b16 %v304
      %v1674 = vunpack.c.l.b16 %v305
      %v1675 = vunpack.c.l.b16 %v306
      %v1676 = vunpack.c.l.b16 %v307
      %v1677 = vunpack.c.l.b16 %v308
      %v1678 = vunpack.c.l.b16 %v309
      %v1679 = vunpack.c.l.b16 %v310
      %v1680 = vunpack.c.l.b16 %v311
      %v1681 = vunpack.c.l.b16 %v312
      %v1682 = vunpack.c.l.b16 %v313
      %v1683 = vunpack.c.l.b16 %v314
      %v1684 = vunpack.c.l.b16 %v315
      %v1685 = vunpack.c.l.b16 %v316
      %v1686 = vunpack.c.l.b16 %v317
      %v1687 = vunpack.c.l.b16 %v318
      %v1688 = vunpack.c.l.b16 %v319
      %v1689 = vunpack.c.l.b16 %v320
      %v1690 = vunpack.c.l.b16 %v321
      %v1691 = vunpack.c.l.b16 %v322
      %v1692 = vunpack.c.l.b16 %v323
      %v1693 = vunpack.c.l.b16 %v324
      %v1694 = vunpack.c.l.b16 %v325
      %v1695 = vunpack.c.l.b16 %v326
      %v1696 = vunpack.c.l.b16 %v327
      %v1697 = vunpack.c.l.b16 %v328
      %v1698 = vunpack.c.l.b16 %v329
      %v1699 = vunpack.c.l.b16 %v330
      %v1700 = vunpack.c.l.b16 %v331
      %v1701 = vunpack.c.l.b16 %v332
      %v1702 = vunpack.c.l.b16 %v333
      %v1703 = vunpack.c.l.b16 %v334
      %v1704 = vunpack.c.l.b16 %v335
      %v1705 = vunpack.c.l.b16 %v336
      %v1706 = vunpack.c.l.b16 %v337
      %v1707 = vunpack.c.l.b16 %v338
      %v1708 = vunpack.c.l.b16 %v339
      %v1709 = vunpack.c.l.b16 %v340
      %v1710 = vunpack.c.l.b16 %v341
      %v1711 = vunpack.c.l.b16 %v342
      %v1712 = vunpack.c.l.b16 %v343
      %v1713 = vunpack.c.l.b16 %v344
      %v1714 = vunpack.c.l.b16 %v345
      %v1715 = vunpack.c.l.b16 %v346
      %v1716 = vunpack.c.l.b16 %v347
      %v1717 = vunpack.c.l.b16 %v348
      %v1718 = vunpack.c.l.b16 %v349
      %v1719 = vunpack.c.l.b16 %v350
      %v1720 = vunpack.c.l.b16 %v351
      %v1721 = vunpack.c.l.b16 %v352
      %v1722 = vunpack.c.l.b16 %v353
      %v1723 = vunpack.c.l.b16 %v354
      %v1724 = vunpack.c.l.b16 %v355
      %v1725 = vunpack.c.l.b16 %v356
      %v1726 = vunpack.c.l.b16 %v357
      %v1727 = vunpack.c.l.b16 %v358
      %v1728 = vpack.c.b16 %v1585, %v1584
      %v1729 = vpack.c.b16 %v1587, %v1586
      %v1730 = vpack.c.b16 %v1589, %v1588
      %v1731 = vpack.c.b16 %v1591, %v1590
      %v1732 = vpack.c.b16 %v1593, %v1592
      %v1733 = vpack.c.b16 %v1595, %v1594
      %v1734 = vpack.c.b16 %v1597, %v1596
      %v1735 = vpack.c.b16 %v1599, %v1598
      %v1736 = vpack.c.b16 %v1601, %v1600
      %v1737 = vpack.c.b16 %v1603, %v1602
      %v1738 = vpack.c.b16 %v1605, %v1604
      %v1739 = vpack.c.b16 %v1607, %v1606
      %v1740 = vpack.c.b16 %v1609, %v1608
      %v1741 = vpack.c.b16 %v1611, %v1610
      %v1742 = vpack.c.b16 %v1613, %v1612
      %v1743 = vpack.c.b16 %v1615, %v1614
      %v1744 = vpack.c.b16 %v1617, %v1616
      %v1745 = vpack.c.b16 %v1619, %v1618
      %v1746 = vpack.c.b16 %v1621, %v1620
      %v1747 = vpack.c.b16 %v1623, %v1622
      %v1748 = vpack.c.b16 %v1625, %v1624
      %v1749 = vpack.c.b16 %v1627, %v1626
      %v1750 = vpack.c.b16 %v1629, %v1628
      %v1751 = vpack.c.b16 %v1631, %v1630
      %v1752 = vpack.c.b16 %v1633, %v1632
      %v1753 = vpack.c.b16 %v1635, %v1634
      %v1754 = vpack.c.b16 %v1637, %v1636
      %v1755 = vpack.c.b16 %v1639, %v1638
      %v1756 = vpack.c.b16 %v1641, %v1640
      %v1757 = vpack.c.b16 %v1643, %v1642
      %v1758 = vpack.c.b16 %v1645, %v1644
      %v1759 = vpack.c.b16 %v1647, %v1646
      %v1760 = vpack.c.b16 %v1649, %v1648
      %v1761 = vpack.c.b16 %v1651, %v1650
      %v1762 = vpack.c.b16 %v1653, %v1652
      %v1763 = vpack.c.b16 %v1655, %v1654
      %v1764 = vpack.c.b16 %v1657, %v1656
      %v1765 = vpack.c.b16 %v1659, %v1658
      %v1766 = vpack.c.b16 %v1661, %v1660
      %v1767 = vpack.c.b16 %v1663, %v1662
      %v1768 = vpack.c.b16 %v1665, %v1664
      %v1769 = vpack.c.b16 %v1667, %v1666
      %v1770 = vpack.c.b16 %v1669, %v1668
      %v1771 = vpack.c.b16 %v1671, %v1670
      %v1772 = vpack.c.b16 %v1673, %v1672
      %v1773 = vpack.c.b16 %v1675, %v1674
      %v1774 = vpack.c.b16 %v1677, %v1676
      %v1775 = vpack.c.b16 %v1679, %v1678
      %v1776 = vpack.c.b16 %v1681, %v1680
      %v1777 = vpack.c.b16 %v1683, %v1682
      %v1778 = vpack.c.b16 %v1685, %v1684
      %v1779 = vpack.c.b16 %v1687, %v1686
      %v1780 = vpack.c.b16 %v1689, %v1688
      %v1781 = vpack.c.b16 %v1691, %v1690
      %v1782 = vpack.c.b16 %v1693, %v1692
      %v1783 = vpack.c.b16 %v1695, %v1694
      %v1784 = vpack.c.b16 %v1697, %v1696
      %v1785 = vpack.c.b16 %v1699, %v1698
      %v1786 = vpack.c.b16 %v1701, %v1700
      %v1787 = vpack.c.b16 %v1703, %v1702
      %v1788 = vpack.c.b16 %v1705, %v1704
      %v1789 = vpack.c.b16 %v1707, %v1706
      %v1790 = vpack.c.b16 %v1709, %v1708
      %v1791 = vpack.c.b16 %v1711, %v1710
      %v1792 = vpack.c.b16 %v1713, %v1712
      %v1793 = vpack.c.b16 %v1715, %v1714
      %v1794 = vpack.c.b16 %v1717, %v1716
      %v1795 = vpack.c.b16 %v1719, %v1718
      %v1796 = vpack.c.b16 %v1721, %v1720
      %v1797 = vpack.c.b16 %v1723, %v1722
      %v1798 = vpack.c.b16 %v1725, %v1724
      %v1799 = vpack.c.b16 %v1727, %v1726
      %1872 = vmatprep.subr.bf16.mxu0 0
      %1873 = vmatpush1.bf16.msra.mxu0 %v1728
      %1874 = vmatprep.subr.bf16.mxu0 0
      %1875 = vmatpush1.bf16.msra.mxu0 %v1729
      %1876 = vmatprep.subr.bf16.mxu0 0
      %1877 = vmatpush1.bf16.msra.mxu0 %v1730
      %1878 = vmatprep.subr.bf16.mxu0 0
      %1879 = vmatpush1.bf16.msra.mxu0 %v1731
      %1880 = vmatprep.subr.bf16.mxu0 0
      %1881 = vmatpush1.bf16.msra.mxu0 %v1732
      %1882 = vmatprep.subr.bf16.mxu0 0
      %1883 = vmatpush1.bf16.msra.mxu0 %v1733
      %1884 = vmatprep.subr.bf16.mxu0 0
      %1885 = vmatpush1.bf16.msra.mxu0 %v1734
      %1886 = vmatprep.subr.bf16.mxu0 0
      %1887 = vmatpush1.bf16.msra.mxu0 %v1735
      %1888 = vmatprep.subr.bf16.mxu0 0
      %1889 = vmatpush1.bf16.msra.mxu0 %v1736
      %1890 = vmatprep.subr.bf16.mxu0 0
      %1891 = vmatpush1.bf16.msra.mxu0 %v1737
      %1892 = vmatprep.subr.bf16.mxu0 0
      %1893 = vmatpush1.bf16.msra.mxu0 %v1738
      %1894 = vmatprep.subr.bf16.mxu0 0
      %1895 = vmatpush1.bf16.msra.mxu0 %v1739
      %1896 = vmatprep.subr.bf16.mxu0 0
      %1897 = vmatpush1.bf16.msra.mxu0 %v1740
      %1898 = vmatprep.subr.bf16.mxu0 0
      %1899 = vmatpush1.bf16.msra.mxu0 %v1741
      %1900 = vmatprep.subr.bf16.mxu0 0
      %1901 = vmatpush1.bf16.msra.mxu0 %v1742
      %1902 = vmatprep.subr.bf16.mxu0 0
      %1903 = vmatpush1.bf16.msra.mxu0 %v1743
      %1904 = vmatprep.mubr.bf16.mxu0 %v1126
      %1905 = vmatmul.mubr.bf16.gmra.mrb[0].mxu0 %v1034
      %v1906 = vpop.f32.mrb[0].mxu0
      %v1907 = vadd.f32 0.0, %v1906
      %v1908 = vpop.f32.mrb[0].mxu0
      %v1909 = vpop.f32.mrb[0].mxu0
      %v1910 = vadd.f32 0.0, %v1909
      %v1911 = vpop.f32.mrb[0].mxu0
      %1912 = vmatprep.mubr.bf16.mxu0 %v1138
      %1913 = vmatmul.mubr.bf16.gmra.mrb[0].mxu0 %v1035
      %v1914 = vpop.f32.mrb[0].mxu0
      %v1915 = vadd.f32 0.0, %v1914
      %v1916 = vpop.f32.mrb[0].mxu0
      %v1917 = vpop.f32.mrb[0].mxu0
      %v1918 = vadd.f32 0.0, %v1917
      %v1919 = vpop.f32.mrb[0].mxu0
      %1920 = vmatprep.mubr.bf16.mxu0 %v1150
      %1921 = vmatmul.mubr.bf16.gmra.mrb[0].mxu0 %v1036
      %v1922 = vpop.f32.mrb[0].mxu0
      %v1923 = vadd.f32 0.0, %v1922
      %v1924 = vpop.f32.mrb[0].mxu0
      %v1925 = vpop.f32.mrb[0].mxu0
      %v1926 = vadd.f32 0.0, %v1925
      %v1927 = vpop.f32.mrb[0].mxu0
      %1928 = vmatprep.mubr.bf16.mxu0 %v1162
      %1929 = vmatmul.mubr.bf16.gmra.mrb[0].mxu0 %v1037
      %v1930 = vpop.f32.mrb[0].mxu0
      %v1931 = vadd.f32 0.0, %v1930
      %v1932 = vpop.f32.mrb[0].mxu0
      %v1933 = vpop.f32.mrb[0].mxu0
      %v1934 = vadd.f32 0.0, %v1933
      %v1935 = vpop.f32.mrb[0].mxu0
      %1936 = vmatprep.mubr.bf16.mxu0 %v1174
      %1937 = vmatmul.mubr.bf16.gmra.mrb[0].mxu0 %v1038
      %v1938 = vpop.f32.mrb[0].mxu0
      %v1939 = vadd.f32 0.0, %v1938
      %v1940 = vpop.f32.mrb[0].mxu0
      %v1941 = vpop.f32.mrb[0].mxu0
      %v1942 = vadd.f32 0.0, %v1941
      %v1943 = vpop.f32.mrb[0].mxu0
      %1944 = vmatprep.mubr.bf16.mxu0 %v1186
      %1945 = vmatmul.mubr.bf16.gmra.mrb[0].mxu0 %v1039
      %v1946 = vpop.f32.mrb[0].mxu0
      %v1947 = vadd.f32 0.0, %v1946
      %v1948 = vpop.f32.mrb[0].mxu0
      %v1949 = vpop.f32.mrb[0].mxu0
      %v1950 = vadd.f32 0.0, %v1949
      %v1951 = vpop.f32.mrb[0].mxu0
      %1952 = vmatprep.mubr.bf16.mxu0 %v1198
      %1953 = vmatmul.mubr.bf16.gmra.mrb[0].mxu0 %v1040
      %v1954 = vpop.f32.mrb[0].mxu0
      %v1955 = vadd.f32 0.0, %v1954
      %v1956 = vpop.f32.mrb[0].mxu0
      %v1957 = vpop.f32.mrb[0].mxu0
      %v1958 = vadd.f32 0.0, %v1957
      %v1959 = vpop.f32.mrb[0].mxu0
      %1960 = vmatprep.mubr.bf16.mxu0 %v1210
      %1961 = vmatmul.mubr.bf16.gmra.mrb[0].mxu0 %v1041
      %v1962 = vpop.f32.mrb[0].mxu0
      %v1963 = vadd.f32 0.0, %v1962
      %v1964 = vpop.f32.mrb[0].mxu0
      %v1965 = vpop.f32.mrb[0].mxu0
      %v1966 = vadd.f32 0.0, %v1965
      %v1967 = vpop.f32.mrb[0].mxu0
      %1968 = vmatprep.mubr.bf16.mxu0 %v1222
      %1969 = vmatmul.mubr.bf16.gmra.mrb[0].mxu0 %v1042
      %v1970 = vpop.f32.mrb[0].mxu0
      %v1971 = vadd.f32 0.0, %v1970
      %v1972 = vpop.f32.mrb[0].mxu0
      %v1973 = vpop.f32.mrb[0].mxu0
      %v1974 = vadd.f32 0.0, %v1973
      %v1975 = vpop.f32.mrb[0].mxu0
      %1976 = vmatprep.mubr.bf16.mxu0 %v1234
      %1977 = vmatmul.mubr.bf16.gmra.mrb[0].mxu0 %v1043
      %v1978 = vpop.f32.mrb[0].mxu0
      %v1979 = vadd.f32 0.0, %v1978
      %v1980 = vpop.f32.mrb[0].mxu0
      %v1981 = vpop.f32.mrb[0].mxu0
      %v1982 = vadd.f32 0.0, %v1981
      %v1983 = vpop.f32.mrb[0].mxu0
      %1984 = vmatprep.mubr.bf16.mxu0 %v1246
      %1985 = vmatmul.mubr.bf16.gmra.mrb[0].mxu0 %v1044
      %v1986 = vpop.f32.mrb[0].mxu0
      %v1987 = vadd.f32 0.0, %v1986
      %v1988 = vpop.f32.mrb[0].mxu0
      %v1989 = vpop.f32.mrb[0].mxu0
      %v1990 = vadd.f32 0.0, %v1989
      %v1991 = vpop.f32.mrb[0].mxu0
      %1992 = vmatprep.mubr.bf16.mxu0 %v1258
      %1993 = vmatmul.mubr.bf16.gmra.mrb[0].mxu0 %v1045
      %v1994 = vpop.f32.mrb[0].mxu0
      %v1995 = vadd.f32 0.0, %v1994
      %v1996 = vpop.f32.mrb[0].mxu0
      %v1997 = vpop.f32.mrb[0].mxu0
      %v1998 = vadd.f32 0.0, %v1997
      %v1999 = vpop.f32.mrb[0].mxu0
      %2000 = vmatprep.mubr.bf16.mxu0 %v1270
      %2001 = vmatmul.mubr.bf16.gmra.mrb[0].mxu0 %v1046
      %v2002 = vpop.f32.mrb[0].mxu0
      %v2003 = vadd.f32 0.0, %v2002
      %v2004 = vpop.f32.mrb[0].mxu0
      %v2005 = vpop.f32.mrb[0].mxu0
      %v2006 = vadd.f32 0.0, %v2005
      %v2007 = vpop.f32.mrb[0].mxu0
      %2008 = vmatprep.mubr.bf16.mxu0 %v1282
      %2009 = vmatmul.mubr.bf16.gmra.mrb[0].mxu0 %v1047
      %v2010 = vpop.f32.mrb[0].mxu0
      %v2011 = vadd.f32 0.0, %v2010
      %v2012 = vpop.f32.mrb[0].mxu0
      %v2013 = vpop.f32.mrb[0].mxu0
      %v2014 = vadd.f32 0.0, %v2013
      %v2015 = vpop.f32.mrb[0].mxu0
      %2016 = vmatprep.mubr.bf16.mxu0 %v1294
      %2017 = vmatmul.mubr.bf16.gmra.mrb[0].mxu0 %v1048
      %v2018 = vpop.f32.mrb[0].mxu0
      %v2019 = vadd.f32 0.0, %v2018
      %v2020 = vpop.f32.mrb[0].mxu0
      %v2021 = vpop.f32.mrb[0].mxu0
      %v2022 = vadd.f32 0.0, %v2021
      %v2023 = vpop.f32.mrb[0].mxu0
      %2024 = vmatprep.mubr.bf16.mxu0 %v1306
      %2025 = vmatmul.mubr.bf16.gmra.mrb[0].mxu0 %v1049
      %v2026 = vpop.f32.mrb[0].mxu0
      %v2027 = vadd.f32 0.0, %v2026
      %v2028 = vpop.f32.mrb[0].mxu0
      %v2029 = vpop.f32.mrb[0].mxu0
      %v2030 = vadd.f32 0.0, %v2029
      %v2031 = vpop.f32.mrb[0].mxu0
      %2032 = vdwg.mxu0
      %2033 = vmatprep.subr.bf16.mxu0 0
      %2034 = vmatpush1.bf16.msra.mxu0 %v1744
      %2035 = vmatprep.subr.bf16.mxu0 0
      %2036 = vmatpush1.bf16.msra.mxu0 %v1745
      %2037 = vmatprep.subr.bf16.mxu0 0
      %2038 = vmatpush1.bf16.msra.mxu0 %v1746
      %2039 = vmatprep.subr.bf16.mxu0 0
      %2040 = vmatpush1.bf16.msra.mxu0 %v1747
      %2041 = vmatprep.subr.bf16.mxu0 0
      %2042 = vmatpush1.bf16.msra.mxu0 %v1748
      %2043 = vmatprep.subr.bf16.mxu0 0
      %2044 = vmatpush1.bf16.msra.mxu0 %v1749
      %2045 = vmatprep.subr.bf16.mxu0 0
      %2046 = vmatpush1.bf16.msra.mxu0 %v1750
      %2047 = vmatprep.subr.bf16.mxu0 0
      %2048 = vmatpush1.bf16.msra.mxu0 %v1751
      %2049 = vmatprep.subr.bf16.mxu0 0
      %2050 = vmatpush1.bf16.msra.mxu0 %v1752
      %2051 = vmatprep.subr.bf16.mxu0 0
      %2052 = vmatpush1.bf16.msra.mxu0 %v1753
      %2053 = vmatprep.subr.bf16.mxu0 0
      %2054 = vmatpush1.bf16.msra.mxu0 %v1754
      %2055 = vmatprep.subr.bf16.mxu0 0
      %2056 = vmatpush1.bf16.msra.mxu0 %v1755
      %2057 = vmatprep.subr.bf16.mxu0 0
      %2058 = vmatpush1.bf16.msra.mxu0 %v1756
      %2059 = vmatprep.subr.bf16.mxu0 0
      %2060 = vmatpush1.bf16.msra.mxu0 %v1757
      %2061 = vmatprep.subr.bf16.mxu0 0
      %2062 = vmatpush1.bf16.msra.mxu0 %v1758
      %2063 = vmatprep.subr.bf16.mxu0 0
      %2064 = vmatpush1.bf16.msra.mxu0 %v1759
      %2065 = vmatprep.mubr.bf16.mxu0 %v1035
      %2066 = vmatmul.mubr.bf16.gmra.mrb[0].mxu0 %v1326
      %v2067 = vpop.f32.mrb[0].mxu0
      %v2068 = vadd.f32 %v1907, %v2067
      %v2069 = vpop.f32.mrb[0].mxu0
      %v2070 = vpop.f32.mrb[0].mxu0
      %v2071 = vadd.f32 %v1910, %v2070
      %v2072 = vpop.f32.mrb[0].mxu0
      %2073 = vmatprep.mubr.bf16.mxu0 %v1036
      %2074 = vmatmul.mubr.bf16.gmra.mrb[0].mxu0 %v1329
      %v2075 = vpop.f32.mrb[0].mxu0
      %v2076 = vadd.f32 %v1915, %v2075
      %v2077 = vpop.f32.mrb[0].mxu0
      %v2078 = vpop.f32.mrb[0].mxu0
      %v2079 = vadd.f32 %v1918, %v2078
      %v2080 = vpop.f32.mrb[0].mxu0
      %2081 = vmatprep.mubr.bf16.mxu0 %v1037
      %2082 = vmatmul.mubr.bf16.gmra.mrb[0].mxu0 %v1332
      %v2083 = vpop.f32.mrb[0].mxu0
      %v2084 = vadd.f32 %v1923, %v2083
      %v2085 = vpop.f32.mrb[0].mxu0
      %v2086 = vpop.f32.mrb[0].mxu0
      %v2087 = vadd.f32 %v1926, %v2086
      %v2088 = vpop.f32.mrb[0].mxu0
      %2089 = vmatprep.mubr.bf16.mxu0 %v1038
      %2090 = vmatmul.mubr.bf16.gmra.mrb[0].mxu0 %v1335
      %v2091 = vpop.f32.mrb[0].mxu0
      %v2092 = vadd.f32 %v1931, %v2091
      %v2093 = vpop.f32.mrb[0].mxu0
      %v2094 = vpop.f32.mrb[0].mxu0
      %v2095 = vadd.f32 %v1934, %v2094
      %v2096 = vpop.f32.mrb[0].mxu0
      %2097 = vmatprep.mubr.bf16.mxu0 %v1039
      %2098 = vmatmul.mubr.bf16.gmra.mrb[0].mxu0 %v1338
      %v2099 = vpop.f32.mrb[0].mxu0
      %v2100 = vadd.f32 %v1939, %v2099
      %v2101 = vpop.f32.mrb[0].mxu0
      %v2102 = vpop.f32.mrb[0].mxu0
      %v2103 = vadd.f32 %v1942, %v2102
      %v2104 = vpop.f32.mrb[0].mxu0
      %2105 = vmatprep.mubr.bf16.mxu0 %v1040
      %2106 = vmatmul.mubr.bf16.gmra.mrb[0].mxu0 %v1341
      %v2107 = vpop.f32.mrb[0].mxu0
      %v2108 = vadd.f32 %v1947, %v2107
      %v2109 = vpop.f32.mrb[0].mxu0
      %v2110 = vpop.f32.mrb[0].mxu0
      %v2111 = vadd.f32 %v1950, %v2110
      %v2112 = vpop.f32.mrb[0].mxu0
      %2113 = vmatprep.mubr.bf16.mxu0 %v1041
      %2114 = vmatmul.mubr.bf16.gmra.mrb[0].mxu0 %v1344
      %v2115 = vpop.f32.mrb[0].mxu0
      %v2116 = vadd.f32 %v1955, %v2115
      %v2117 = vpop.f32.mrb[0].mxu0
      %v2118 = vpop.f32.mrb[0].mxu0
      %v2119 = vadd.f32 %v1958, %v2118
      %v2120 = vpop.f32.mrb[0].mxu0
      %2121 = vmatprep.mubr.bf16.mxu0 %v1042
      %2122 = vmatmul.mubr.bf16.gmra.mrb[0].mxu0 %v1347
      %v2123 = vpop.f32.mrb[0].mxu0
      %v2124 = vadd.f32 %v1963, %v2123
      %v2125 = vpop.f32.mrb[0].mxu0
      %v2126 = vpop.f32.mrb[0].mxu0
      %v2127 = vadd.f32 %v1966, %v2126
      %v2128 = vpop.f32.mrb[0].mxu0
      %2129 = vmatprep.mubr.bf16.mxu0 %v1043
      %2130 = vmatmul.mubr.bf16.gmra.mrb[0].mxu0 %v1350
      %v2131 = vpop.f32.mrb[0].mxu0
      %v2132 = vadd.f32 %v1971, %v2131
      %v2133 = vpop.f32.mrb[0].mxu0
      %v2134 = vpop.f32.mrb[0].mxu0
      %v2135 = vadd.f32 %v1974, %v2134
      %v2136 = vpop.f32.mrb[0].mxu0
      %2137 = vmatprep.mubr.bf16.mxu0 %v1044
      %2138 = vmatmul.mubr.bf16.gmra.mrb[0].mxu0 %v1353
      %v2139 = vpop.f32.mrb[0].mxu0
      %v2140 = vadd.f32 %v1979, %v2139
      %v2141 = vpop.f32.mrb[0].mxu0
      %v2142 = vpop.f32.mrb[0].mxu0
      %v2143 = vadd.f32 %v1982, %v2142
      %v2144 = vpop.f32.mrb[0].mxu0
      %2145 = vmatprep.mubr.bf16.mxu0 %v1045
      %2146 = vmatmul.mubr.bf16.gmra.mrb[0].mxu0 %v1356
      %v2147 = vpop.f32.mrb[0].mxu0
      %v2148 = vadd.f32 %v1987, %v2147
      %v2149 = vpop.f32.mrb[0].mxu0
      %v2150 = vpop.f32.mrb[0].mxu0
      %v2151 = vadd.f32 %v1990, %v2150
      %v2152 = vpop.f32.mrb[0].mxu0
      %2153 = vmatprep.mubr.bf16.mxu0 %v1046
      %2154 = vmatmul.mubr.bf16.gmra.mrb[0].mxu0 %v1359
      %v2155 = vpop.f32.mrb[0].mxu0
      %v2156 = vadd.f32 %v1995, %v2155
      %v2157 = vpop.f32.mrb[0].mxu0
      %v2158 = vpop.f32.mrb[0].mxu0
      %v2159 = vadd.f32 %v1998, %v2158
      %v2160 = vpop.f32.mrb[0].mxu0
      %2161 = vmatprep.mubr.bf16.mxu0 %v1047
      %2162 = vmatmul.mubr.bf16.gmra.mrb[0].mxu0 %v1362
      %v2163 = vpop.f32.mrb[0].mxu0
      %v2164 = vadd.f32 %v2003, %v2163
      %v2165 = vpop.f32.mrb[0].mxu0
      %v2166 = vpop.f32.mrb[0].mxu0
      %v2167 = vadd.f32 %v2006, %v2166
      %v2168 = vpop.f32.mrb[0].mxu0
      %2169 = vmatprep.mubr.bf16.mxu0 %v1048
      %2170 = vmatmul.mubr.bf16.gmra.mrb[0].mxu0 %v1365
      %v2171 = vpop.f32.mrb[0].mxu0
      %v2172 = vadd.f32 %v2011, %v2171
      %v2173 = vpop.f32.mrb[0].mxu0
      %v2174 = vpop.f32.mrb[0].mxu0
      %v2175 = vadd.f32 %v2014, %v2174
      %v2176 = vpop.f32.mrb[0].mxu0
      %2177 = vmatprep.mubr.bf16.mxu0 %v1049
      %2178 = vmatmul.mubr.bf16.gmra.mrb[0].mxu0 %v1368
      %v2179 = vpop.f32.mrb[0].mxu0
      %v2180 = vadd.f32 %v2019, %v2179
      %v2181 = vpop.f32.mrb[0].mxu0
      %v2182 = vpop.f32.mrb[0].mxu0
      %v2183 = vadd.f32 %v2022, %v2182
      %v2184 = vpop.f32.mrb[0].mxu0
      %2185 = vmatprep.mubr.bf16.mxu0 %v1392
      %2186 = vmatmul.mubr.bf16.gmra.mrb[0].mxu0 %v1371
      %v2187 = vpop.f32.mrb[0].mxu0
      %v2188 = vadd.f32 %v2027, %v2187
      %v2189 = vpop.f32.mrb[0].mxu0
      %v2190 = vpop.f32.mrb[0].mxu0
      %v2191 = vadd.f32 %v2030, %v2190
      %v2192 = vpop.f32.mrb[0].mxu0
      %2193 = vdwg.mxu0
      %2194 = vmatprep.subr.bf16.mxu0 0
      %2195 = vmatpush1.bf16.msra.mxu0 %v1760
      %2196 = vmatprep.subr.bf16.mxu0 0
      %2197 = vmatpush1.bf16.msra.mxu0 %v1761
      %2198 = vmatprep.subr.bf16.mxu0 0
      %2199 = vmatpush1.bf16.msra.mxu0 %v1762
      %2200 = vmatprep.subr.bf16.mxu0 0
      %2201 = vmatpush1.bf16.msra.mxu0 %v1763
      %2202 = vmatprep.subr.bf16.mxu0 0
      %2203 = vmatpush1.bf16.msra.mxu0 %v1764
      %2204 = vmatprep.subr.bf16.mxu0 0
      %2205 = vmatpush1.bf16.msra.mxu0 %v1765
      %2206 = vmatprep.subr.bf16.mxu0 0
      %2207 = vmatpush1.bf16.msra.mxu0 %v1766
      %2208 = vmatprep.subr.bf16.mxu0 0
      %2209 = vmatpush1.bf16.msra.mxu0 %v1767
      %2210 = vmatprep.subr.bf16.mxu0 0
      %2211 = vmatpush1.bf16.msra.mxu0 %v1768
      %2212 = vmatprep.subr.bf16.mxu0 0
      %2213 = vmatpush1.bf16.msra.mxu0 %v1769
      %2214 = vmatprep.subr.bf16.mxu0 0
      %2215 = vmatpush1.bf16.msra.mxu0 %v1770
      %2216 = vmatprep.subr.bf16.mxu0 0
      %2217 = vmatpush1.bf16.msra.mxu0 %v1771
      %2218 = vmatprep.subr.bf16.mxu0 0
      %2219 = vmatpush1.bf16.msra.mxu0 %v1772
      %2220 = vmatprep.subr.bf16.mxu0 0
      %2221 = vmatpush1.bf16.msra.mxu0 %v1773
      %2222 = vmatprep.subr.bf16.mxu0 0
      %2223 = vmatpush1.bf16.msra.mxu0 %v1774
      %2224 = vmatprep.subr.bf16.mxu0 0
      %2225 = vmatpush1.bf16.msra.mxu0 %v1775
      %2226 = vmatprep.mubr.bf16.mxu0 %v1329
      %2227 = vmatmul.mubr.bf16.gmra.mrb[0].mxu0 %v1138
      %v2228 = vpop.f32.mrb[0].mxu0
      %v2229 = vadd.f32 %v2068, %v2228
      %v2230 = vpop.f32.mrb[0].mxu0
      %v2231 = vpop.f32.mrb[0].mxu0
      %v2232 = vadd.f32 %v2071, %v2231
      %v2233 = vpop.f32.mrb[0].mxu0
      %2234 = vmatprep.mubr.bf16.mxu0 %v1332
      %2235 = vmatmul.mubr.bf16.gmra.mrb[0].mxu0 %v1150
      %v2236 = vpop.f32.mrb[0].mxu0
      %v2237 = vadd.f32 %v2076, %v2236
      %v2238 = vpop.f32.mrb[0].mxu0
      %v2239 = vpop.f32.mrb[0].mxu0
      %v2240 = vadd.f32 %v2079, %v2239
      %v2241 = vpop.f32.mrb[0].mxu0
      %2242 = vmatprep.mubr.bf16.mxu0 %v1335
      %2243 = vmatmul.mubr.bf16.gmra.mrb[0].mxu0 %v1162
      %v2244 = vpop.f32.mrb[0].mxu0
      %v2245 = vadd.f32 %v2084, %v2244
      %v2246 = vpop.f32.mrb[0].mxu0
      %v2247 = vpop.f32.mrb[0].mxu0
      %v2248 = vadd.f32 %v2087, %v2247
      %v2249 = vpop.f32.mrb[0].mxu0
      %2250 = vmatprep.mubr.bf16.mxu0 %v1338
      %2251 = vmatmul.mubr.bf16.gmra.mrb[0].mxu0 %v1174
      %v2252 = vpop.f32.mrb[0].mxu0
      %v2253 = vadd.f32 %v2092, %v2252
      %v2254 = vpop.f32.mrb[0].mxu0
      %v2255 = vpop.f32.mrb[0].mxu0
      %v2256 = vadd.f32 %v2095, %v2255
      %v2257 = vpop.f32.mrb[0].mxu0
      %2258 = vmatprep.mubr.bf16.mxu0 %v1341
      %2259 = vmatmul.mubr.bf16.gmra.mrb[0].mxu0 %v1186
      %v2260 = vpop.f32.mrb[0].mxu0
      %v2261 = vadd.f32 %v2100, %v2260
      %v2262 = vpop.f32.mrb[0].mxu0
      %v2263 = vpop.f32.mrb[0].mxu0
      %v2264 = vadd.f32 %v2103, %v2263
      %v2265 = vpop.f32.mrb[0].mxu0
      %2266 = vmatprep.mubr.bf16.mxu0 %v1344
      %2267 = vmatmul.mubr.bf16.gmra.mrb[0].mxu0 %v1198
      %v2268 = vpop.f32.mrb[0].mxu0
      %v2269 = vadd.f32 %v2108, %v2268
      %v2270 = vpop.f32.mrb[0].mxu0
      %v2271 = vpop.f32.mrb[0].mxu0
      %v2272 = vadd.f32 %v2111, %v2271
      %v2273 = vpop.f32.mrb[0].mxu0
      %2274 = vmatprep.mubr.bf16.mxu0 %v1347
      %2275 = vmatmul.mubr.bf16.gmra.mrb[0].mxu0 %v1210
      %v2276 = vpop.f32.mrb[0].mxu0
      %v2277 = vadd.f32 %v2116, %v2276
      %v2278 = vpop.f32.mrb[0].mxu0
      %v2279 = vpop.f32.mrb[0].mxu0
      %v2280 = vadd.f32 %v2119, %v2279
      %v2281 = vpop.f32.mrb[0].mxu0
      %2282 = vmatprep.mubr.bf16.mxu0 %v1350
      %2283 = vmatmul.mubr.bf16.gmra.mrb[0].mxu0 %v1222
      %v2284 = vpop.f32.mrb[0].mxu0
      %v2285 = vadd.f32 %v2124, %v2284
      %v2286 = vpop.f32.mrb[0].mxu0
      %v2287 = vpop.f32.mrb[0].mxu0
      %v2288 = vadd.f32 %v2127, %v2287
      %v2289 = vpop.f32.mrb[0].mxu0
      %2290 = vmatprep.mubr.bf16.mxu0 %v1353
      %2291 = vmatmul.mubr.bf16.gmra.mrb[0].mxu0 %v1234
      %v2292 = vpop.f32.mrb[0].mxu0
      %v2293 = vadd.f32 %v2132, %v2292
      %v2294 = vpop.f32.mrb[0].mxu0
      %v2295 = vpop.f32.mrb[0].mxu0
      %v2296 = vadd.f32 %v2135, %v2295
      %v2297 = vpop.f32.mrb[0].mxu0
      %2298 = vmatprep.mubr.bf16.mxu0 %v1356
      %2299 = vmatmul.mubr.bf16.gmra.mrb[0].mxu0 %v1246
      %v2300 = vpop.f32.mrb[0].mxu0
      %v2301 = vadd.f32 %v2140, %v2300
      %v2302 = vpop.f32.mrb[0].mxu0
      %v2303 = vpop.f32.mrb[0].mxu0
      %v2304 = vadd.f32 %v2143, %v2303
      %v2305 = vpop.f32.mrb[0].mxu0
      %2306 = vmatprep.mubr.bf16.mxu0 %v1359
      %2307 = vmatmul.mubr.bf16.gmra.mrb[0].mxu0 %v1258
      %v2308 = vpop.f32.mrb[0].mxu0
      %v2309 = vadd.f32 %v2148, %v2308
      %v2310 = vpop.f32.mrb[0].mxu0
      %v2311 = vpop.f32.mrb[0].mxu0
      %v2312 = vadd.f32 %v2151, %v2311
      %v2313 = vpop.f32.mrb[0].mxu0
      %2314 = vmatprep.mubr.bf16.mxu0 %v1362
      %2315 = vmatmul.mubr.bf16.gmra.mrb[0].mxu0 %v1270
      %v2316 = vpop.f32.mrb[0].mxu0
      %v2317 = vadd.f32 %v2156, %v2316
      %v2318 = vpop.f32.mrb[0].mxu0
      %v2319 = vpop.f32.mrb[0].mxu0
      %v2320 = vadd.f32 %v2159, %v2319
      %v2321 = vpop.f32.mrb[0].mxu0
      %2322 = vmatprep.mubr.bf16.mxu0 %v1365
      %2323 = vmatmul.mubr.bf16.gmra.mrb[0].mxu0 %v1282
      %v2324 = vpop.f32.mrb[0].mxu0
      %v2325 = vadd.f32 %v2164, %v2324
      %v2326 = vpop.f32.mrb[0].mxu0
      %v2327 = vpop.f32.mrb[0].mxu0
      %v2328 = vadd.f32 %v2167, %v2327
      %v2329 = vpop.f32.mrb[0].mxu0
      %2330 = vmatprep.mubr.bf16.mxu0 %v1368
      %2331 = vmatmul.mubr.bf16.gmra.mrb[0].mxu0 %v1294
      %v2332 = vpop.f32.mrb[0].mxu0
      %v2333 = vadd.f32 %v2172, %v2332
      %v2334 = vpop.f32.mrb[0].mxu0
      %v2335 = vpop.f32.mrb[0].mxu0
      %v2336 = vadd.f32 %v2175, %v2335
      %v2337 = vpop.f32.mrb[0].mxu0
      %2338 = vmatprep.mubr.bf16.mxu0 %v1371
      %2339 = vmatmul.mubr.bf16.gmra.mrb[0].mxu0 %v1306
      %v2340 = vpop.f32.mrb[0].mxu0
      %v2341 = vadd.f32 %v2180, %v2340
      %v2342 = vpop.f32.mrb[0].mxu0
      %v2343 = vpop.f32.mrb[0].mxu0
      %v2344 = vadd.f32 %v2183, %v2343
      %v2345 = vpop.f32.mrb[0].mxu0
      %2346 = vmatprep.mubr.bf16.mxu0 %v1412
      %2347 = vmatmul.mubr.bf16.gmra.mrb[0].mxu0 %v1408
      %v2348 = vpop.f32.mrb[0].mxu0
      %v2349 = vadd.f32 %v2188, %v2348
      %v2350 = vpop.f32.mrb[0].mxu0
      %v2351 = vpop.f32.mrb[0].mxu0
      %v2352 = vadd.f32 %v2191, %v2351
      %v2353 = vpop.f32.mrb[0].mxu0
      %2354 = vdwg.mxu0
      %2355 = vmatprep.subr.bf16.mxu0 0
      %2356 = vmatpush1.bf16.msra.mxu0 %v1776
      %2357 = vmatprep.subr.bf16.mxu0 0
      %2358 = vmatpush1.bf16.msra.mxu0 %v1777
      %2359 = vmatprep.subr.bf16.mxu0 0
      %2360 = vmatpush1.bf16.msra.mxu0 %v1778
      %2361 = vmatprep.subr.bf16.mxu0 0
      %2362 = vmatpush1.bf16.msra.mxu0 %v1779
      %2363 = vmatprep.subr.bf16.mxu0 0
      %2364 = vmatpush1.bf16.msra.mxu0 %v1780
      %2365 = vmatprep.subr.bf16.mxu0 0
      %2366 = vmatpush1.bf16.msra.mxu0 %v1781
      %2367 = vmatprep.subr.bf16.mxu0 0
      %2368 = vmatpush1.bf16.msra.mxu0 %v1782
      %2369 = vmatprep.subr.bf16.mxu0 0
      %2370 = vmatpush1.bf16.msra.mxu0 %v1783
      %2371 = vmatprep.subr.bf16.mxu0 0
      %2372 = vmatpush1.bf16.msra.mxu0 %v1784
      %2373 = vmatprep.subr.bf16.mxu0 0
      %2374 = vmatpush1.bf16.msra.mxu0 %v1785
      %2375 = vmatprep.subr.bf16.mxu0 0
      %2376 = vmatpush1.bf16.msra.mxu0 %v1786
      %2377 = vmatprep.subr.bf16.mxu0 0
      %2378 = vmatpush1.bf16.msra.mxu0 %v1787
      %2379 = vmatprep.subr.bf16.mxu0 0
      %2380 = vmatpush1.bf16.msra.mxu0 %v1788
      %2381 = vmatprep.subr.bf16.mxu0 0
      %2382 = vmatpush1.bf16.msra.mxu0 %v1789
      %2383 = vmatprep.subr.bf16.mxu0 0
      %2384 = vmatpush1.bf16.msra.mxu0 %v1790
      %2385 = vmatprep.subr.bf16.mxu0 0
      %2386 = vmatpush1.bf16.msra.mxu0 %v1791
      %2387 = vmatprep.mubr.bf16.mxu0 %v1150
      %2388 = vmatmul.mubr.bf16.gmra.mrb[0].mxu0 %v1036
      %v2389 = vpop.f32.mrb[0].mxu0
      %v2390 = vadd.f32 %v2229, %v2389
      %v2391 = vpop.f32.mrb[0].mxu0
      %v2392 = vpop.f32.mrb[0].mxu0
      %v2393 = vadd.f32 %v2232, %v2392
      %v2394 = vpop.f32.mrb[0].mxu0
      %2395 = vmatprep.mubr.bf16.mxu0 %v1162
      %2396 = vmatmul.mubr.bf16.gmra.mrb[0].mxu0 %v1037
      %v2397 = vpop.f32.mrb[0].mxu0
      %v2398 = vadd.f32 %v2237, %v2397
      %v2399 = vpop.f32.mrb[0].mxu0
      %v2400 = vpop.f32.mrb[0].mxu0
      %v2401 = vadd.f32 %v2240, %v2400
      %v2402 = vpop.f32.mrb[0].mxu0
      %2403 = vmatprep.mubr.bf16.mxu0 %v1174
      %2404 = vmatmul.mubr.bf16.gmra.mrb[0].mxu0 %v1038
      %v2405 = vpop.f32.mrb[0].mxu0
      %v2406 = vadd.f32 %v2245, %v2405
      %v2407 = vpop.f32.mrb[0].mxu0
      %v2408 = vpop.f32.mrb[0].mxu0
      %v2409 = vadd.f32 %v2248, %v2408
      %v2410 = vpop.f32.mrb[0].mxu0
      %2411 = vmatprep.mubr.bf16.mxu0 %v1186
      %2412 = vmatmul.mubr.bf16.gmra.mrb[0].mxu0 %v1039
      %v2413 = vpop.f32.mrb[0].mxu0
      %v2414 = vadd.f32 %v2253, %v2413
      %v2415 = vpop.f32.mrb[0].mxu0
      %v2416 = vpop.f32.mrb[0].mxu0
      %v2417 = vadd.f32 %v2256, %v2416
      %v2418 = vpop.f32.mrb[0].mxu0
      %2419 = vmatprep.mubr.bf16.mxu0 %v1198
      %2420 = vmatmul.mubr.bf16.gmra.mrb[0].mxu0 %v1040
      %v2421 = vpop.f32.mrb[0].mxu0
      %v2422 = vadd.f32 %v2261, %v2421
      %v2423 = vpop.f32.mrb[0].mxu0
      %v2424 = vpop.f32.mrb[0].mxu0
      %v2425 = vadd.f32 %v2264, %v2424
      %v2426 = vpop.f32.mrb[0].mxu0
      %2427 = vmatprep.mubr.bf16.mxu0 %v1210
      %2428 = vmatmul.mubr.bf16.gmra.mrb[0].mxu0 %v1041
      %v2429 = vpop.f32.mrb[0].mxu0
      %v2430 = vadd.f32 %v2269, %v2429
      %v2431 = vpop.f32.mrb[0].mxu0
      %v2432 = vpop.f32.mrb[0].mxu0
      %v2433 = vadd.f32 %v2272, %v2432
      %v2434 = vpop.f32.mrb[0].mxu0
      %2435 = vmatprep.mubr.bf16.mxu0 %v1222
      %2436 = vmatmul.mubr.bf16.gmra.mrb[0].mxu0 %v1042
      %v2437 = vpop.f32.mrb[0].mxu0
      %v2438 = vadd.f32 %v2277, %v2437
      %v2439 = vpop.f32.mrb[0].mxu0
      %v2440 = vpop.f32.mrb[0].mxu0
      %v2441 = vadd.f32 %v2280, %v2440
      %v2442 = vpop.f32.mrb[0].mxu0
      %2443 = vmatprep.mubr.bf16.mxu0 %v1234
      %2444 = vmatmul.mubr.bf16.gmra.mrb[0].mxu0 %v1043
      %v2445 = vpop.f32.mrb[0].mxu0
      %v2446 = vadd.f32 %v2285, %v2445
      %v2447 = vpop.f32.mrb[0].mxu0
      %v2448 = vpop.f32.mrb[0].mxu0
      %v2449 = vadd.f32 %v2288, %v2448
      %v2450 = vpop.f32.mrb[0].mxu0
      %2451 = vmatprep.mubr.bf16.mxu0 %v1246
      %2452 = vmatmul.mubr.bf16.gmra.mrb[0].mxu0 %v1044
      %v2453 = vpop.f32.mrb[0].mxu0
      %v2454 = vadd.f32 %v2293, %v2453
      %v2455 = vpop.f32.mrb[0].mxu0
      %v2456 = vpop.f32.mrb[0].mxu0
      %v2457 = vadd.f32 %v2296, %v2456
      %v2458 = vpop.f32.mrb[0].mxu0
      %2459 = vmatprep.mubr.bf16.mxu0 %v1258
      %2460 = vmatmul.mubr.bf16.gmra.mrb[0].mxu0 %v1045
      %v2461 = vpop.f32.mrb[0].mxu0
      %v2462 = vadd.f32 %v2301, %v2461
      %v2463 = vpop.f32.mrb[0].mxu0
      %v2464 = vpop.f32.mrb[0].mxu0
      %v2465 = vadd.f32 %v2304, %v2464
      %v2466 = vpop.f32.mrb[0].mxu0
      %2467 = vmatprep.mubr.bf16.mxu0 %v1270
      %2468 = vmatmul.mubr.bf16.gmra.mrb[0].mxu0 %v1046
      %v2469 = vpop.f32.mrb[0].mxu0
      %v2470 = vadd.f32 %v2309, %v2469
      %v2471 = vpop.f32.mrb[0].mxu0
      %v2472 = vpop.f32.mrb[0].mxu0
      %v2473 = vadd.f32 %v2312, %v2472
      %v2474 = vpop.f32.mrb[0].mxu0
      %2475 = vmatprep.mubr.bf16.mxu0 %v1282
      %2476 = vmatmul.mubr.bf16.gmra.mrb[0].mxu0 %v1047
      %v2477 = vpop.f32.mrb[0].mxu0
      %v2478 = vadd.f32 %v2317, %v2477
      %v2479 = vpop.f32.mrb[0].mxu0
      %v2480 = vpop.f32.mrb[0].mxu0
      %v2481 = vadd.f32 %v2320, %v2480
      %v2482 = vpop.f32.mrb[0].mxu0
      %2483 = vmatprep.mubr.bf16.mxu0 %v1294
      %2484 = vmatmul.mubr.bf16.gmra.mrb[0].mxu0 %v1048
      %v2485 = vpop.f32.mrb[0].mxu0
      %v2486 = vadd.f32 %v2325, %v2485
      %v2487 = vpop.f32.mrb[0].mxu0
      %v2488 = vpop.f32.mrb[0].mxu0
      %v2489 = vadd.f32 %v2328, %v2488
      %v2490 = vpop.f32.mrb[0].mxu0
      %2491 = vmatprep.mubr.bf16.mxu0 %v1306
      %2492 = vmatmul.mubr.bf16.gmra.mrb[0].mxu0 %v1049
      %v2493 = vpop.f32.mrb[0].mxu0
      %v2494 = vadd.f32 %v2333, %v2493
      %v2495 = vpop.f32.mrb[0].mxu0
      %v2496 = vpop.f32.mrb[0].mxu0
      %v2497 = vadd.f32 %v2336, %v2496
      %v2498 = vpop.f32.mrb[0].mxu0
      %2499 = vmatprep.mubr.bf16.mxu0 %v1408
      %2500 = vmatmul.mubr.bf16.gmra.mrb[0].mxu0 %v1392
      %v2501 = vpop.f32.mrb[0].mxu0
      %v2502 = vadd.f32 %v2341, %v2501
      %v2503 = vpop.f32.mrb[0].mxu0
      %v2504 = vpop.f32.mrb[0].mxu0
      %v2505 = vadd.f32 %v2344, %v2504
      %v2506 = vpop.f32.mrb[0].mxu0
      %2507 = vmatprep.mubr.bf16.mxu0 %v1434
      %2508 = vmatmul.mubr.bf16.gmra.mrb[0].mxu0 %v1418
      %v2509 = vpop.f32.mrb[0].mxu0
      %v2510 = vadd.f32 %v2349, %v2509
      %v2511 = vpop.f32.mrb[0].mxu0
      %v2512 = vpop.f32.mrb[0].mxu0
      %v2513 = vadd.f32 %v2352, %v2512
      %v2514 = vpop.f32.mrb[0].mxu0
      %2515 = vdwg.mxu0
      %2516 = vmatprep.subr.bf16.mxu0 0
      %2517 = vmatpush1.bf16.msra.mxu0 %v1792
      %2518 = vmatprep.subr.bf16.mxu0 0
      %2519 = vmatpush1.bf16.msra.mxu0 %v1793
      %2520 = vmatprep.subr.bf16.mxu0 0
      %2521 = vmatpush1.bf16.msra.mxu0 %v1794
      %2522 = vmatprep.subr.bf16.mxu0 0
      %2523 = vmatpush1.bf16.msra.mxu0 %v1795
      %2524 = vmatprep.subr.bf16.mxu0 0
      %2525 = vmatpush1.bf16.msra.mxu0 %v1796
      %2526 = vmatprep.subr.bf16.mxu0 0
      %2527 = vmatpush1.bf16.msra.mxu0 %v1797
      %2528 = vmatprep.subr.bf16.mxu0 0
      %2529 = vmatpush1.bf16.msra.mxu0 %v1798
      %2530 = vmatprep.subr.bf16.mxu0 0
      %2531 = vmatpush1.bf16.msra.mxu0 %v1799
      %2532 = vmatprep.subr.bf16.mxu0 0
      %2533 = vmatpush1.bf16.msra.mxu0 0
      %2534 = vmatprep.subr.bf16.mxu0 0
      %2535 = vmatpush1.bf16.msra.mxu0 0
      %2536 = vmatprep.subr.bf16.mxu0 0
      %2537 = vmatpush1.bf16.msra.mxu0 0
      %2538 = vmatprep.subr.bf16.mxu0 0
      %2539 = vmatpush1.bf16.msra.mxu0 0
      %2540 = vmatprep.subr.bf16.mxu0 0
      %2541 = vmatpush1.bf16.msra.mxu0 0
      %2542 = vmatprep.subr.bf16.mxu0 0
      %2543 = vmatpush1.bf16.msra.mxu0 0
      %2544 = vmatprep.subr.bf16.mxu0 0
      %2545 = vmatpush1.bf16.msra.mxu0 0
      %2546 = vmatprep.subr.bf16.mxu0 0
      %2547 = vmatpush1.bf16.msra.mxu0 0
      %2548 = vmatprep.mubr.bf16.mxu0 0
      %2549 = vmatmul.mubr.bf16.gmra.mrb[0].mxu0 %v1332
      %v2550 = vpop.f32.mrb[0].mxu0
      %v2551 = vadd.f32 %v2390, %v2550
      %v2552 = vpop.f32.mrb[0].mxu0
      %v2553 = vpop.f32.mrb[0].mxu0
      %v2554 = vadd.f32 %v2393, %v2553
      %v2555 = vpop.f32.mrb[0].mxu0
      %2556 = vmatprep.mubr.bf16.mxu0 0
      %2557 = vmatmul.mubr.bf16.gmra.mrb[0].mxu0 %v1335
      %v2558 = vpop.f32.mrb[0].mxu0
      %v2559 = vadd.f32 %v2398, %v2558
      %v2560 = vpop.f32.mrb[0].mxu0
      %v2561 = vpop.f32.mrb[0].mxu0
      %v2562 = vadd.f32 %v2401, %v2561
      %v2563 = vpop.f32.mrb[0].mxu0
      %2564 = vmatprep.mubr.bf16.mxu0 0
      %2565 = vmatmul.mubr.bf16.gmra.mrb[0].mxu0 %v1338
      %v2566 = vpop.f32.mrb[0].mxu0
      %v2567 = vadd.f32 %v2406, %v2566
      %v2568 = vpop.f32.mrb[0].mxu0
      %v2569 = vpop.f32.mrb[0].mxu0
      %v2570 = vadd.f32 %v2409, %v2569
      %v2571 = vpop.f32.mrb[0].mxu0
      %2572 = vmatprep.mubr.bf16.mxu0 0
      %2573 = vmatmul.mubr.bf16.gmra.mrb[0].mxu0 %v1341
      %v2574 = vpop.f32.mrb[0].mxu0
      %v2575 = vadd.f32 %v2414, %v2574
      %v2576 = vpop.f32.mrb[0].mxu0
      %v2577 = vpop.f32.mrb[0].mxu0
      %v2578 = vadd.f32 %v2417, %v2577
      %v2579 = vpop.f32.mrb[0].mxu0
      %2580 = vmatprep.mubr.bf16.mxu0 0
      %2581 = vmatmul.mubr.bf16.gmra.mrb[0].mxu0 %v1344
      %v2582 = vpop.f32.mrb[0].mxu0
      %v2583 = vadd.f32 %v2422, %v2582
      %v2584 = vpop.f32.mrb[0].mxu0
      %v2585 = vpop.f32.mrb[0].mxu0
      %v2586 = vadd.f32 %v2425, %v2585
      %v2587 = vpop.f32.mrb[0].mxu0
      %2588 = vmatprep.mubr.bf16.mxu0 0
      %2589 = vmatmul.mubr.bf16.gmra.mrb[0].mxu0 %v1347
      %v2590 = vpop.f32.mrb[0].mxu0
      %v2591 = vadd.f32 %v2430, %v2590
      %v2592 = vpop.f32.mrb[0].mxu0
      %v2593 = vpop.f32.mrb[0].mxu0
      %v2594 = vadd.f32 %v2433, %v2593
      %v2595 = vpop.f32.mrb[0].mxu0
      %2596 = vmatprep.mubr.bf16.mxu0 0
      %2597 = vmatmul.mubr.bf16.gmra.mrb[0].mxu0 %v1350
      %v2598 = vpop.f32.mrb[0].mxu0
      %v2599 = vadd.f32 %v2438, %v2598
      %v2600 = vpop.f32.mrb[0].mxu0
      %v2601 = vpop.f32.mrb[0].mxu0
      %v2602 = vadd.f32 %v2441, %v2601
      %v2603 = vpop.f32.mrb[0].mxu0
      %2604 = vmatprep.mubr.bf16.mxu0 0
      %2605 = vmatmul.mubr.bf16.gmra.mrb[0].mxu0 %v1353
      %v2606 = vpop.f32.mrb[0].mxu0
      %v2607 = vadd.f32 %v2446, %v2606
      %v2608 = vpop.f32.mrb[0].mxu0
      %v2609 = vpop.f32.mrb[0].mxu0
      %v2610 = vadd.f32 %v2449, %v2609
      %v2611 = vpop.f32.mrb[0].mxu0
      %2612 = vmatprep.mubr.bf16.mxu0 0
      %2613 = vmatmul.mubr.bf16.gmra.mrb[0].mxu0 %v1356
      %v2614 = vpop.f32.mrb[0].mxu0
      %v2615 = vadd.f32 %v2454, %v2614
      %v2616 = vpop.f32.mrb[0].mxu0
      %v2617 = vpop.f32.mrb[0].mxu0
      %v2618 = vadd.f32 %v2457, %v2617
      %v2619 = vpop.f32.mrb[0].mxu0
      %2620 = vmatprep.mubr.bf16.mxu0 0
      %2621 = vmatmul.mubr.bf16.gmra.mrb[0].mxu0 %v1359
      %v2622 = vpop.f32.mrb[0].mxu0
      %v2623 = vadd.f32 %v2462, %v2622
      %v2624 = vpop.f32.mrb[0].mxu0
      %v2625 = vpop.f32.mrb[0].mxu0
      %v2626 = vadd.f32 %v2465, %v2625
      %v2627 = vpop.f32.mrb[0].mxu0
      %2628 = vmatprep.mubr.bf16.mxu0 0
      %2629 = vmatmul.mubr.bf16.gmra.mrb[0].mxu0 %v1362
      %v2630 = vpop.f32.mrb[0].mxu0
      %v2631 = vadd.f32 %v2470, %v2630
      %v2632 = vpop.f32.mrb[0].mxu0
      %v2633 = vpop.f32.mrb[0].mxu0
      %v2634 = vadd.f32 %v2473, %v2633
      %v2635 = vpop.f32.mrb[0].mxu0
      %2636 = vmatprep.mubr.bf16.mxu0 0
      %2637 = vmatmul.mubr.bf16.gmra.mrb[0].mxu0 %v1365
      %v2638 = vpop.f32.mrb[0].mxu0
      %v2639 = vadd.f32 %v2478, %v2638
      %v2640 = vpop.f32.mrb[0].mxu0
      %v2641 = vpop.f32.mrb[0].mxu0
      %v2642 = vadd.f32 %v2481, %v2641
      %v2643 = vpop.f32.mrb[0].mxu0
      %2644 = vmatprep.mubr.bf16.mxu0 0
      %2645 = vmatmul.mubr.bf16.gmra.mrb[0].mxu0 %v1368
      %v2646 = vpop.f32.mrb[0].mxu0
      %v2647 = vadd.f32 %v2486, %v2646
      %v2648 = vpop.f32.mrb[0].mxu0
      %v2649 = vpop.f32.mrb[0].mxu0
      %v2650 = vadd.f32 %v2489, %v2649
      %v2651 = vpop.f32.mrb[0].mxu0
      %2652 = vmatprep.mubr.bf16.mxu0 0
      %2653 = vmatmul.mubr.bf16.gmra.mrb[0].mxu0 %v1371
      %v2654 = vpop.f32.mrb[0].mxu0
      %v2655 = vadd.f32 %v2494, %v2654
      %v2656 = vpop.f32.mrb[0].mxu0
      %v2657 = vpop.f32.mrb[0].mxu0
      %v2658 = vadd.f32 %v2497, %v2657
      %v2659 = vpop.f32.mrb[0].mxu0
      %2660 = vmatprep.mubr.bf16.mxu0 0
      %2661 = vmatmul.mubr.bf16.gmra.mrb[0].mxu0 %v1412
      %v2662 = vpop.f32.mrb[0].mxu0
      %v2663 = vadd.f32 %v2502, %v2662
      %v2664 = vpop.f32.mrb[0].mxu0
      %v2665 = vpop.f32.mrb[0].mxu0
      %v2666 = vadd.f32 %v2505, %v2665
      %v2667 = vpop.f32.mrb[0].mxu0
      %2668 = vmatprep.mubr.bf16.mxu0 0
      %2669 = vmatmul.mubr.bf16.gmra.mrb[0].mxu0 %v1438
      %v2670 = vpop.f32.mrb[0].mxu0
      %v2671 = vadd.f32 %v2510, %v2670
      %v2672 = vpop.f32.mrb[0].mxu0
      %v2673 = vpop.f32.mrb[0].mxu0
      %v2674 = vadd.f32 %v2513, %v2673
      %v2675 = vpop.f32.mrb[0].mxu0
      %2676 = vdwg.mxu0
      %v2677 = vadd.f32 %v2551, %v2554
      %v2678 = vadd.f32 %v2677, %v2559
      %v2679 = vadd.f32 %v2678, %v2562
      %v2680 = vadd.f32 %v2679, %v2567
      %v2681 = vadd.f32 %v2680, %v2570
      %v2682 = vadd.f32 %v2681, %v2575
      %v2683 = vadd.f32 %v2682, %v2578
      %v2684 = vadd.f32 %v2683, %v2583
      %v2685 = vadd.f32 %v2684, %v2586
      %v2686 = vadd.f32 %v2685, %v2591
      %v2687 = vadd.f32 %v2686, %v2594
      %v2688 = vadd.f32 %v2687, %v2599
      %v2689 = vadd.f32 %v2688, %v2602
      %v2690 = vadd.f32 %v2689, %v2607
      %v2691 = vadd.f32 %v2690, %v2610
      %v2692 = vadd.f32 %v2691, %v2615
      %v2693 = vadd.f32 %v2692, %v2618
      %v2694 = vadd.f32 %v2693, %v2623
      %v2695 = vadd.f32 %v2694, %v2626
      %v2696 = vadd.f32 %v2695, %v2631
      %v2697 = vadd.f32 %v2696, %v2634
      %v2698 = vadd.f32 %v2697, %v2639
      %v2699 = vadd.f32 %v2698, %v2642
      %v2700 = vadd.f32 %v2699, %v2647
      %v2701 = vadd.f32 %v2700, %v2650
      %v2702 = vadd.f32 %v2701, %v2655
      %v2703 = vadd.f32 %v2702, %v2658
      %v2704 = vadd.f32 %v2703, %v2663
      %v2705 = vadd.f32 %v2704, %v2666
      %v2706 = vadd.f32 %v2705, %v2671
      %v2707 = vadd.f32 %v2706, %v2674
      %v2708 = vrot.slane %v2707, 4
      %v2709 = vadd.f32 %v2707, %v2708
      %v2710 = vrot.slane %v2709, 2
      %v2711 = vadd.f32 %v2709, %v2710
      %v2712 = vrot.slane %v2711, 1
      %v2713 = vadd.f32 %v2711, %v2712
      %2714 = vst [vmem:[%s181] sm:$0x1] %v2713
      %v2715 = vmul.f32 %v2551, %v2551
      %v2716 = vmul.f32 %v2554, %v2554
      %v2717 = vmul.f32 %v2559, %v2559
      %v2718 = vmul.f32 %v2562, %v2562
      %v2719 = vmul.f32 %v2567, %v2567
      %v2720 = vmul.f32 %v2570, %v2570
      %v2721 = vmul.f32 %v2575, %v2575
      %v2722 = vmul.f32 %v2578, %v2578
      %v2723 = vmul.f32 %v2583, %v2583
      %v2724 = vmul.f32 %v2586, %v2586
      %v2725 = vmul.f32 %v2591, %v2591
      %v2726 = vmul.f32 %v2594, %v2594
      %v2727 = vmul.f32 %v2599, %v2599
      %v2728 = vmul.f32 %v2602, %v2602
      %v2729 = vmul.f32 %v2607, %v2607
      %v2730 = vmul.f32 %v2610, %v2610
      %v2731 = vmul.f32 %v2615, %v2615
      %v2732 = vmul.f32 %v2618, %v2618
      %v2733 = vmul.f32 %v2623, %v2623
      %v2734 = vmul.f32 %v2626, %v2626
      %v2735 = vmul.f32 %v2631, %v2631
      %v2736 = vmul.f32 %v2634, %v2634
      %v2737 = vmul.f32 %v2639, %v2639
      %v2738 = vmul.f32 %v2642, %v2642
      %v2739 = vmul.f32 %v2647, %v2647
      %v2740 = vmul.f32 %v2650, %v2650
      %v2741 = vmul.f32 %v2655, %v2655
      %v2742 = vmul.f32 %v2658, %v2658
      %v2743 = vmul.f32 %v2663, %v2663
      %v2744 = vmul.f32 %v2666, %v2666
      %v2745 = vmul.f32 %v2671, %v2671
      %v2746 = vmul.f32 %v2674, %v2674
      %v2747 = vadd.f32 %v2715, %v2716
      %v2748 = vadd.f32 %v2747, %v2717
      %v2749 = vadd.f32 %v2748, %v2718
      %v2750 = vadd.f32 %v2749, %v2719
      %v2751 = vadd.f32 %v2750, %v2720
      %v2752 = vadd.f32 %v2751, %v2721
      %v2753 = vadd.f32 %v2752, %v2722
      %v2754 = vadd.f32 %v2753, %v2723
      %v2755 = vadd.f32 %v2754, %v2724
      %v2756 = vadd.f32 %v2755, %v2725
      %v2757 = vadd.f32 %v2756, %v2726
      %v2758 = vadd.f32 %v2757, %v2727
      %v2759 = vadd.f32 %v2758, %v2728
      %v2760 = vadd.f32 %v2759, %v2729
      %v2761 = vadd.f32 %v2760, %v2730
      %v2762 = vadd.f32 %v2761, %v2731
      %v2763 = vadd.f32 %v2762, %v2732
      %v2764 = vadd.f32 %v2763, %v2733
      %v2765 = vadd.f32 %v2764, %v2734
      %v2766 = vadd.f32 %v2765, %v2735
      %v2767 = vadd.f32 %v2766, %v2736
      %v2768 = vadd.f32 %v2767, %v2737
      %v2769 = vadd.f32 %v2768, %v2738
      %v2770 = vadd.f32 %v2769, %v2739
      %v2771 = vadd.f32 %v2770, %v2740
      %v2772 = vadd.f32 %v2771, %v2741
      %v2773 = vadd.f32 %v2772, %v2742
      %v2774 = vadd.f32 %v2773, %v2743
      %v2775 = vadd.f32 %v2774, %v2744
      %v2776 = vadd.f32 %v2775, %v2745
      %v2777 = vadd.f32 %v2776, %v2746
      %v2778 = vrot.slane %v2777, 4
      %v2779 = vadd.f32 %v2777, %v2778
      %v2780 = vrot.slane %v2779, 2
      %v2781 = vadd.f32 %v2779, %v2780
      %v2782 = vrot.slane %v2781, 1
      %v2783 = vadd.f32 %v2781, %v2782
      %2784 = vst [vmem:[%s181 + $0x1] sm:$0x1] %v2783
      %v2785 = vpack.c.bf16 %v2554, %v2551
      %v2786 = vpack.c.bf16 %v2562, %v2559
      %v2787 = vpack.c.bf16 %v2570, %v2567
      %v2788 = vpack.c.bf16 %v2578, %v2575
      %v2789 = vpack.c.bf16 %v2586, %v2583
      %v2790 = vpack.c.bf16 %v2594, %v2591
      %v2791 = vpack.c.bf16 %v2602, %v2599
      %v2792 = vpack.c.bf16 %v2610, %v2607
      %v2793 = vpack.c.bf16 %v2618, %v2615
      %v2794 = vpack.c.bf16 %v2626, %v2623
      %v2795 = vpack.c.bf16 %v2634, %v2631
      %v2796 = vpack.c.bf16 %v2642, %v2639
      %v2797 = vpack.c.bf16 %v2650, %v2647
      %v2798 = vpack.c.bf16 %v2658, %v2655
      %v2799 = vpack.c.bf16 %v2666, %v2663
      %v2800 = vpack.c.bf16 %v2674, %v2671
      %v2817 = vunpack.c.l.b16 %v2785
      %v2818 = vunpack.c.h.b16 %v2785
      %v2819 = vunpack.c.l.b16 %v2786
      %v2820 = vunpack.c.h.b16 %v2786
      %v2821 = vunpack.c.l.b16 %v2787
      %v2822 = vunpack.c.h.b16 %v2787
      %v2823 = vunpack.c.l.b16 %v2788
      %v2824 = vunpack.c.h.b16 %v2788
      %v2825 = vunpack.c.l.b16 %v2789
      %v2826 = vunpack.c.h.b16 %v2789
      %v2827 = vunpack.c.l.b16 %v2790
      %v2828 = vunpack.c.h.b16 %v2790
      %v2829 = vunpack.c.l.b16 %v2791
      %v2830 = vunpack.c.h.b16 %v2791
      %v2831 = vunpack.c.l.b16 %v2792
      %v2832 = vunpack.c.h.b16 %v2792
      %v2833 = vunpack.c.l.b16 %v2793
      %v2834 = vunpack.c.h.b16 %v2793
      %v2835 = vunpack.c.l.b16 %v2794
      %v2836 = vunpack.c.h.b16 %v2794
      %v2837 = vunpack.c.l.b16 %v2795
      %v2838 = vunpack.c.h.b16 %v2795
      %v2839 = vunpack.c.l.b16 %v2796
      %v2840 = vunpack.c.h.b16 %v2796
      %v2841 = vunpack.c.l.b16 %v2797
      %v2842 = vunpack.c.h.b16 %v2797
      %v2843 = vunpack.c.l.b16 %v2798
      %v2844 = vunpack.c.h.b16 %v2798
      %v2845 = vunpack.c.l.b16 %v2799
      %v2846 = vunpack.c.h.b16 %v2799
      %v2847 = vunpack.c.l.b16 %v2800
      %v2848 = vunpack.c.h.b16 %v2800
      %v2849 = vpack.c.b16 %v2817, %v2817
      %v2850 = vpack.c.b16 %v2818, %v2818
      %v2851 = vpack.c.b16 %v2819, %v2819
      %v2852 = vpack.c.b16 %v2820, %v2820
      %v2853 = vpack.c.b16 %v2821, %v2821
      %v2854 = vpack.c.b16 %v2822, %v2822
      %v2855 = vpack.c.b16 %v2823, %v2823
      %v2856 = vpack.c.b16 %v2824, %v2824
      %v2857 = vpack.c.b16 %v2825, %v2825
      %v2858 = vpack.c.b16 %v2826, %v2826
      %v2859 = vpack.c.b16 %v2827, %v2827
      %v2860 = vpack.c.b16 %v2828, %v2828
      %v2861 = vpack.c.b16 %v2829, %v2829
      %v2862 = vpack.c.b16 %v2830, %v2830
      %v2863 = vpack.c.b16 %v2831, %v2831
      %v2864 = vpack.c.b16 %v2832, %v2832
      %v2865 = vpack.c.b16 %v2833, %v2833
      %v2866 = vpack.c.b16 %v2834, %v2834
      %v2867 = vpack.c.b16 %v2835, %v2835
      %v2868 = vpack.c.b16 %v2836, %v2836
      %v2869 = vpack.c.b16 %v2837, %v2837
      %v2870 = vpack.c.b16 %v2838, %v2838
      %v2871 = vpack.c.b16 %v2839, %v2839
      %v2872 = vpack.c.b16 %v2840, %v2840
      %v2873 = vpack.c.b16 %v2841, %v2841
      %v2874 = vpack.c.b16 %v2842, %v2842
      %v2875 = vpack.c.b16 %v2843, %v2843
      %v2876 = vpack.c.b16 %v2844, %v2844
      %v2877 = vpack.c.b16 %v2845, %v2845
      %v2878 = vpack.c.b16 %v2846, %v2846
      %v2879 = vpack.c.b16 %v2847, %v2847
      %v2880 = vpack.c.b16 %v2848, %v2848
      %2913 = vst [vmem:[%s177] sm:$0xf] %v2849
      %2914 = vst [vmem:[%s177 + $0x4] sm:$0xf] %v2850
      %2915 = vst [vmem:[%s177 + $0x8] sm:$0xf] %v2851
      %2916 = vst [vmem:[%s177 + $0xc] sm:$0xf] %v2852
      %2917 = vst [vmem:[%s177 + $0x10] sm:$0xf] %v2853
      %2918 = vst [vmem:[%s177 + $0x14] sm:$0xf] %v2854
      %2919 = vst [vmem:[%s177 + $0x18] sm:$0xf] %v2855
      %2920 = vst [vmem:[%s177 + $0x1c] sm:$0xf] %v2856
      %2921 = vst [vmem:[%s177 + $0x20] sm:$0xf] %v2857
      %2922 = vst [vmem:[%s177 + $0x24] sm:$0xf] %v2858
      %2923 = vst [vmem:[%s177 + $0x28] sm:$0xf] %v2859
      %2924 = vst [vmem:[%s177 + $0x2c] sm:$0xf] %v2860
      %2925 = vst [vmem:[%s177 + $0x30] sm:$0xf] %v2861
      %2926 = vst [vmem:[%s177 + $0x34] sm:$0xf] %v2862
      %2927 = vst [vmem:[%s177 + $0x38] sm:$0xf] %v2863
      %2928 = vst [vmem:[%s177 + $0x3c] sm:$0xf] %v2864
      %2929 = vst [vmem:[%s177 + $0x40] sm:$0xf] %v2865
      %2930 = vst [vmem:[%s177 + $0x44] sm:$0xf] %v2866
      %2931 = vst [vmem:[%s177 + $0x48] sm:$0xf] %v2867
      %2932 = vst [vmem:[%s177 + $0x4c] sm:$0xf] %v2868
      %2933 = vst [vmem:[%s177 + $0x50] sm:$0xf] %v2869
      %2934 = vst [vmem:[%s177 + $0x54] sm:$0xf] %v2870
      %2935 = vst [vmem:[%s177 + $0x58] sm:$0xf] %v2871
      %2936 = vst [vmem:[%s177 + $0x5c] sm:$0xf] %v2872
      %2937 = vst [vmem:[%s177 + $0x60] sm:$0xf] %v2873
      %2938 = vst [vmem:[%s177 + $0x64] sm:$0xf] %v2874
      %2939 = vst [vmem:[%s177 + $0x68] sm:$0xf] %v2875
      %2940 = vst [vmem:[%s177 + $0x6c] sm:$0xf] %v2876
      %2941 = vst [vmem:[%s177 + $0x70] sm:$0xf] %v2877
      %2942 = vst [vmem:[%s177 + $0x74] sm:$0xf] %v2878
      %2943 = vst [vmem:[%s177 + $0x78] sm:$0xf] %v2879
      %2944 = vst [vmem:[%s177 + $0x7c] sm:$0xf] %v2880
      %p2945 = scmp.lt.s32.totalorder %s15, 1
      %s2946 = scalar_select %p2945, %s15, 1
      %s2947 = smul.addr %s2946, 32
      %s2948 = smul.addr %s2947, 4
      %s2949 = scalar_lea.vmem %s2, %s2948
      %p2950 = scmp.lt.s32.totalorder %s15, 1
      %s2951 = scalar_select %p2950, %s15, 1
      %s2952 = smul.addr %s2951, 2
      %s2953 = scalar_lea.vmem %s3, %s2952
      // Predicated region
      $region29: #{basic_block_forward.3} parent=27 // pred_check
        %p2954 = pneg %p80
      $region30: #{basic_block_forward.3} parent=27 // pred_check_branch
        %2956 = sbr.rel (%p2954) target = $region32
      $region31: #{basic_block_forward.3} parent=27 // pred_region
        _
      $region32: #{basic_block_forward.3} parent=27 // pred_fallthru
        _
      // Predicated region
      $region33: #{basic_block_forward.3} parent=27 // pred_check
        %p2957 = pneg %p106
      $region34: #{basic_block_forward.3} parent=27 // pred_check_branch
        %2959 = sbr.rel (%p2957) target = $region36
      $region35: #{basic_block_forward.3} parent=27 // pred_region
        _
      $region36: #{basic_block_forward.3} parent=27 // pred_fallthru
        _
    $region28: #{basic_block_forward.3} parent=5 // pred_fallthru
      _
    %p2960 = scmp.le.s32.totalorder 2, %s10
    // Predicated region
    $region37: #{basic_block_forward.3} parent=5 // pred_check
      %p2961 = pneg %p2960
    $region38: #{basic_block_forward.3} parent=5 // pred_check_branch
      %2963 = sbr.rel (%p2961) target = $region40
    $region39: #{basic_block_forward.3} parent=5 // pred_region
      %s2964 = ssub.s32 %s10, 2
      // Predicated region
      $region41: #{basic_block_forward.3} parent=39 // pred_check
        %p2965 = pneg %p86
      $region42: #{basic_block_forward.3} parent=39 // pred_check_branch
        %2967 = sbr.rel (%p2965) target = $region44
      $region43: #{basic_block_forward.3} parent=39 // pred_region
        %p2968 = scmp.lt.s32.totalorder %s16, 1
        %s2969 = scalar_select %p2968, %s16, 1
        %s2970 = smul.addr %s2969, 32
        %s2971 = smul.addr %s2970, 4
        %s2972 = scalar_lea.vmem %s2, %s2971
      $region44: #{basic_block_forward.3} parent=39 // pred_fallthru
        _
      // Predicated region
      $region45: #{basic_block_forward.3} parent=39 // pred_check
        %p2973 = pneg %p112
      $region46: #{basic_block_forward.3} parent=39 // pred_check_branch
        %2975 = sbr.rel (%p2973) target = $region48
      $region47: #{basic_block_forward.3} parent=39 // pred_region
        %p2976 = scmp.lt.s32.totalorder %s16, 1
        %s2977 = scalar_select %p2976, %s16, 1
        %s2978 = smul.addr %s2977, 2
        %s2979 = scalar_lea.vmem %s3, %s2978
      $region48: #{basic_block_forward.3} parent=39 // pred_fallthru
        _
    $region40: #{basic_block_forward.3} parent=5 // pred_fallthru
      _
  $region6: #{basic_block_forward.3} parent=0 // loop_footer
    %s14 = sadd.s32 1, %s10
  $region7: #{basic_block_forward.3} parent=0 // loop_footer_branch
    %9 = sbr.rel target = $region3
  $region8: #{basic_block_forward.3} parent=0 // loop_exit
    _

// kernel: basic_block_forward.4
$region0: #{basic_block_forward.4}
  #allocation0 [shape = 'u32[]', space=smem, size = 0x4, offset = 0x4, fixed_abs, tag = 'smem constant byte address 0x4 - core index']
  #allocation1 [shape = 'u32[144,128]{1,0:T(1,128)}', space=vmem, size = 0x12000, scoped, tag = 'internal scratch']
  #allocation2 [shape = 'bf16[18,18,128]{2,1,0:T(8,128)(2,1)}', space=vmem, size = 0x1b000, scoped, tag = 'scratch operand']
  %s0 = inlined_call_operand.vmem [shape: bf16[2,16,16,128], index: 0, kind: input, shape index: {}]
  %s1 = inlined_call_operand.vmem [shape: f32[1,128], index: 1, kind: input, shape index: {}]
  %s2 = inlined_call_operand.vmem [shape: f32[1,128], index: 2, kind: input, shape index: {}]
  %s3 = inlined_call_operand.vmem [shape: bf16[1152,128], index: 3, kind: input, shape index: {}]
  %s4 = inlined_call_operand.vmem [shape: bf16[2,16,16,128], index: 4, kind: output, shape index: {0}]
  %s5 = inlined_call_operand.vmem [shape: f32[2,2,128], index: 5, kind: output, shape index: {1}]
  %6 = xla_tuple %s4, %s5
  %s7 = sld [smem:[#allocation0]]
  $region57: #{basic_block_forward.4} parent=0
    _
  %s9 = ssub.s32 1, %s7
  %s10 = scalar_select 0, %s9, %s7
  loop: start=0, step=1, limit=4
  $region2: #{basic_block_forward.4} parent=0 // loop_pre_header
    _
  $region3: #{basic_block_forward.4} parent=0 // loop_header
    %s12 = sphi 0, %s16
    %p13 = scmp.ge.s32.totalorder %s12, 4
    %s22 = sphi 0, %s24
    %s25 = sphi 0, %s22
    %s26 = sphi 0, %s25
    %s42 = sphi 0, %s26
    %s46 = sphi 0, %s46
    %s48 = sphi 0, %s46
    %s49 = sphi 0, %s48
    %s63 = sphi 0, %s49
    %s67 = sphi 0, %s67
    %s69 = sphi 0, %s67
    %s70 = sphi 0, %s69
    %s84 = sphi 0, %s70
    %s88 = sphi 0, %s88
    %s90 = sphi 0, %s88
    %s91 = sphi 0, %s90
    %s105 = sphi 0, %s91
    %s111 = sphi 0, %s113
    %s114 = sphi 0, %s111
    %s115 = sphi 0, %s114
    %s131 = sphi 0, %s115
    %s137 = sphi 0, %s139
    %s140 = sphi 0, %s137
    %s141 = sphi 0, %s140
    %s157 = sphi 0, %s141
  $region4: #{basic_block_forward.4} parent=0 // loop_header_branch
    %15 = sbr.rel (%p13) target = $region8
  $region5: #{basic_block_forward.4} parent=0 // loop_body
    %s17 = ssub.s32 %s12, 1
    %s18 = ssub.s32 %s12, 2
    %s19 = sadd.s32 %s12, 1
    %s20 = ssub.s32 %s12, %s19
    %p21 = scmp.eq.s32.totalorder %s20, 0
    %s23 = sadd.s32 %s22, 1
    %s24 = scalar_select %p21, %s22, %s23
    %p27 = pneg %p21
    %p28 = scmp.eq.s32.totalorder %s12, 1
    %p29 = por %p27, %p28
    %p30 = scmp.ne.s32.totalorder %s22, %s25
    %p31 = scmp.eq.s32.totalorder %s12, 0
    %p32 = por %p30, %p31
    %p33 = scmp.ne.s32.totalorder %s22, %s25
    %p34 = scmp.eq.s32.totalorder %s17, 1
    %p35 = por %p33, %p34
    %p36 = scmp.ne.s32.totalorder %s25, %s26
    %p37 = scmp.eq.s32.totalorder %s17, 0
    %p38 = por %p36, %p37
    %p39 = scmp.ne.s32.totalorder %s25, %s26
    %p40 = scmp.eq.s32.totalorder %s18, 1
    %p41 = por %p39, %p40
    %p43 = scmp.ne.s32.totalorder %s26, %s42
    %p44 = scmp.eq.s32.totalorder %s18, 0
    %p45 = por %p43, %p44
    %s47 = sadd.s32 %s46, 1
    %p50 = scmp.eq.s32.totalorder %s12, 1
    %p51 = scmp.ne.s32.totalorder %s46, %s48
    %p52 = scmp.eq.s32.totalorder %s12, 0
    %p53 = por %p51, %p52
    %p54 = scmp.ne.s32.totalorder %s46, %s48
    %p55 = scmp.eq.s32.totalorder %s17, 1
    %p56 = por %p54, %p55
    %p57 = scmp.ne.s32.totalorder %s48, %s49
    %p58 = scmp.eq.s32.totalorder %s17, 0
    %p59 = por %p57, %p58
    %p60 = scmp.ne.s32.totalorder %s48, %s49
    %p61 = scmp.eq.s32.totalorder %s18, 1
    %p62 = por %p60, %p61
    %p64 = scmp.ne.s32.totalorder %s49, %s63
    %p65 = scmp.eq.s32.totalorder %s18, 0
    %p66 = por %p64, %p65
    %s68 = sadd.s32 %s67, 1
    %p71 = scmp.eq.s32.totalorder %s12, 1
    %p72 = scmp.ne.s32.totalorder %s67, %s69
    %p73 = scmp.eq.s32.totalorder %s12, 0
    %p74 = por %p72, %p73
    %p75 = scmp.ne.s32.totalorder %s67, %s69
    %p76 = scmp.eq.s32.totalorder %s17, 1
    %p77 = por %p75, %p76
    %p78 = scmp.ne.s32.totalorder %s69, %s70
    %p79 = scmp.eq.s32.totalorder %s17, 0
    %p80 = por %p78, %p79
    %p81 = scmp.ne.s32.totalorder %s69, %s70
    %p82 = scmp.eq.s32.totalorder %s18, 1
    %p83 = por %p81, %p82
    %p85 = scmp.ne.s32.totalorder %s70, %s84
    %p86 = scmp.eq.s32.totalorder %s18, 0
    %p87 = por %p85, %p86
    %s89 = sadd.s32 %s88, 1
    %p92 = scmp.eq.s32.totalorder %s12, 1
    %p93 = scmp.ne.s32.totalorder %s88, %s90
    %p94 = scmp.eq.s32.totalorder %s12, 0
    %p95 = por %p93, %p94
    %p96 = scmp.ne.s32.totalorder %s88, %s90
    %p97 = scmp.eq.s32.totalorder %s17, 1
    %p98 = por %p96, %p97
    %p99 = scmp.ne.s32.totalorder %s90, %s91
    %p100 = scmp.eq.s32.totalorder %s17, 0
    %p101 = por %p99, %p100
    %p102 = scmp.ne.s32.totalorder %s90, %s91
    %p103 = scmp.eq.s32.totalorder %s18, 1
    %p104 = por %p102, %p103
    %p106 = scmp.ne.s32.totalorder %s91, %s105
    %p107 = scmp.eq.s32.totalorder %s18, 0
    %p108 = por %p106, %p107
    %s109 = ssub.s32 %s12, %s19
    %p110 = scmp.eq.s32.totalorder %s109, 0
    %s112 = sadd.s32 %s111, 1
    %s113 = scalar_select %p110, %s111, %s112
    %p116 = pneg %p110
    %p117 = scmp.eq.s32.totalorder %s12, 1
    %p118 = por %p116, %p117
    %p119 = scmp.ne.s32.totalorder %s111, %s114
    %p120 = scmp.eq.s32.totalorder %s12, 0
    %p121 = por %p119, %p120
    %p122 = scmp.ne.s32.totalorder %s111, %s114
    %p123 = scmp.eq.s32.totalorder %s17, 1
    %p124 = por %p122, %p123
    %p125 = scmp.ne.s32.totalorder %s114, %s115
    %p126 = scmp.eq.s32.totalorder %s17, 0
    %p127 = por %p125, %p126
    %p128 = scmp.ne.s32.totalorder %s114, %s115
    %p129 = scmp.eq.s32.totalorder %s18, 1
    %p130 = por %p128, %p129
    %p132 = scmp.ne.s32.totalorder %s115, %s131
    %p133 = scmp.eq.s32.totalorder %s18, 0
    %p134 = por %p132, %p133
    %s135 = ssub.s32 %s12, %s19
    %p136 = scmp.eq.s32.totalorder %s135, 0
    %s138 = sadd.s32 %s137, 1
    %s139 = scalar_select %p136, %s137, %s138
    %p142 = pneg %p136
    %p143 = scmp.eq.s32.totalorder %s12, 1
    %p144 = por %p142, %p143
    %p145 = scmp.ne.s32.totalorder %s137, %s140
    %p146 = scmp.eq.s32.totalorder %s12, 0
    %p147 = por %p145, %p146
    %p148 = scmp.ne.s32.totalorder %s137, %s140
    %p149 = scmp.eq.s32.totalorder %s17, 1
    %p150 = por %p148, %p149
    %p151 = scmp.ne.s32.totalorder %s140, %s141
    %p152 = scmp.eq.s32.totalorder %s17, 0
    %p153 = por %p151, %p152
    %p154 = scmp.ne.s32.totalorder %s140, %s141
    %p155 = scmp.eq.s32.totalorder %s18, 1
    %p156 = por %p154, %p155
    %p158 = scmp.ne.s32.totalorder %s141, %s157
    %p159 = scmp.eq.s32.totalorder %s18, 0
    %p160 = por %p158, %p159
    %p161 = scmp.le.s32.totalorder 1, %s12
    %p162 = scmp.lt.s32.totalorder %s12, 3
    %p163 = pnand %p161, %p162
    %p164 = pneg %p163
    // Predicated region
    $region9: #{basic_block_forward.4} parent=5 // pred_check
      _
    $region10: #{basic_block_forward.4} parent=5 // pred_check_branch
      %166 = sbr.rel (%p163) target = $region12
    $region11: #{basic_block_forward.4} parent=5 // pred_region
      %s167 = ssub.s32 %s12, 1
      // Predicated region
      $region13: #{basic_block_forward.4} parent=11 // pred_check
        %p168 = pneg %p59
      $region14: #{basic_block_forward.4} parent=11 // pred_check_branch
        %170 = sbr.rel (%p168) target = $region16
      $region15: #{basic_block_forward.4} parent=11 // pred_region
        _
      $region16: #{basic_block_forward.4} parent=11 // pred_fallthru
        _
      // Predicated region
      $region17: #{basic_block_forward.4} parent=11 // pred_check
        %p171 = pneg %p80
      $region18: #{basic_block_forward.4} parent=11 // pred_check_branch
        %173 = sbr.rel (%p171) target = $region20
      $region19: #{basic_block_forward.4} parent=11 // pred_region
        _
      $region20: #{basic_block_forward.4} parent=11 // pred_fallthru
        _
      // Predicated region
      $region21: #{basic_block_forward.4} parent=11 // pred_check
        %p174 = pneg %p101
      $region22: #{basic_block_forward.4} parent=11 // pred_check_branch
        %176 = sbr.rel (%p174) target = $region24
      $region23: #{basic_block_forward.4} parent=11 // pred_region
        _
      $region24: #{basic_block_forward.4} parent=11 // pred_fallthru
        _
    $region12: #{basic_block_forward.4} parent=5 // pred_fallthru
      _
    %p177 = scmp.lt.s32.totalorder %s12, 2
    // Predicated region
    $region25: #{basic_block_forward.4} parent=5 // pred_check
      %p178 = pneg %p177
    $region26: #{basic_block_forward.4} parent=5 // pred_check_branch
      %180 = sbr.rel (%p178) target = $region28
    $region27: #{basic_block_forward.4} parent=5 // pred_region
      // Predicated region
      $region29: #{basic_block_forward.4} parent=27 // pred_check
        %p181 = pneg %p32
      $region30: #{basic_block_forward.4} parent=27 // pred_check_branch
        %183 = sbr.rel (%p181) target = $region32
      $region31: #{basic_block_forward.4} parent=27 // pred_region
        %p184 = scmp.lt.s32.totalorder %s12, 1
        %s185 = scalar_select %p184, %s12, 1
        %s186 = smul.addr %s185, 32
        %s187 = smul.addr %s186, 4
        %s188 = scalar_lea.vmem %s0, %s187
      $region32: #{basic_block_forward.4} parent=27 // pred_fallthru
        _
    $region28: #{basic_block_forward.4} parent=5 // pred_fallthru
      _
    %p189 = scmp.le.s32.totalorder 1, %s12
    %p190 = scmp.lt.s32.totalorder %s12, 3
    %p191 = pnand %p189, %p190
    %p192 = pneg %p191
    // Predicated region
    $region33: #{basic_block_forward.4} parent=5 // pred_check
      _
    $region34: #{basic_block_forward.4} parent=5 // pred_check_branch
      %194 = sbr.rel (%p191) target = $region36
    $region35: #{basic_block_forward.4} parent=5 // pred_region
      %s195 = ssub.s32 %s12, 1
      %p196 = scmp.lt.s32.totalorder %s17, 1
      %s197 = scalar_select %p196, %s17, 1
      %s198 = smul.addr %s197, 32
      %s199 = smul.addr %s198, 4
      %s200 = scalar_lea.vmem %s0, %s199
      %p201 = pneg %p38
      %p202 = pneg %p35
      %p203 = pneg %p59
      %p204 = pneg %p56
      %p205 = pneg %p80
      %p206 = pneg %p77
      %p207 = pneg %p101
      %p208 = pneg %p98
      %p209 = pneg %p127
      %p210 = pneg %p124
      %p211 = scmp.lt.s32.totalorder %s17, 1
      %s212 = scalar_select %p211, %s17, 1
      %s213 = smul.addr %s212, 32
      %s214 = smul.addr %s213, 4
      %s215 = scalar_lea.vmem %s4, %s214
      %p216 = pneg %p153
      %p217 = pneg %p150
      %p218 = scmp.lt.s32.totalorder %s17, 1
      %s219 = scalar_select %p218, %s17, 1
      %s220 = smul.addr %s219, 2
      %s221 = scalar_lea.vmem %s5, %s220
      %p222 = scmp.lt.s32.totalorder %s17, 1
      %s223 = scalar_select %p222, %s17, 1
      %s224 = smul.addr %s223, 32
      %s225 = smul.addr %s224, 4
      %s226 = scalar_lea.vmem %s0, %s225
      %p227 = scmp.lt.s32.totalorder %s17, 1
      %s228 = scalar_select %p227, %s17, 1
      %s229 = smul.addr %s228, 32
      %s230 = smul.addr %s229, 4
      %s231 = scalar_lea.vmem %s4, %s230
      %p232 = scmp.lt.s32.totalorder %s17, 1
      %s233 = scalar_select %p232, %s17, 1
      %s234 = smul.addr %s233, 2
      %s235 = scalar_lea.vmem %s5, %s234
      %v237 = vld [vmem:[%s1] sm:$0x1]
      %v238 = vld [vmem:[%s2] sm:$0x1]
      %v239 = vld [vmem:[%s226] sm:$0xf]
      %v240 = vld [vmem:[%s226 + $0x4] sm:$0xf]
      %v241 = vld [vmem:[%s226 + $0x8] sm:$0xf]
      %v242 = vld [vmem:[%s226 + $0xc] sm:$0xf]
      %v243 = vld [vmem:[%s226 + $0x10] sm:$0xf]
      %v244 = vld [vmem:[%s226 + $0x14] sm:$0xf]
      %v245 = vld [vmem:[%s226 + $0x18] sm:$0xf]
      %v246 = vld [vmem:[%s226 + $0x1c] sm:$0xf]
      %v247 = vld [vmem:[%s226 + $0x20] sm:$0xf]
      %v248 = vld [vmem:[%s226 + $0x24] sm:$0xf]
      %v249 = vld [vmem:[%s226 + $0x28] sm:$0xf]
      %v250 = vld [vmem:[%s226 + $0x2c] sm:$0xf]
      %v251 = vld [vmem:[%s226 + $0x30] sm:$0xf]
      %v252 = vld [vmem:[%s226 + $0x34] sm:$0xf]
      %v253 = vld [vmem:[%s226 + $0x38] sm:$0xf]
      %v254 = vld [vmem:[%s226 + $0x3c] sm:$0xf]
      %v255 = vld [vmem:[%s226 + $0x40] sm:$0xf]
      %v256 = vld [vmem:[%s226 + $0x44] sm:$0xf]
      %v257 = vld [vmem:[%s226 + $0x48] sm:$0xf]
      %v258 = vld [vmem:[%s226 + $0x4c] sm:$0xf]
      %v259 = vld [vmem:[%s226 + $0x50] sm:$0xf]
      %v260 = vld [vmem:[%s226 + $0x54] sm:$0xf]
      %v261 = vld [vmem:[%s226 + $0x58] sm:$0xf]
      %v262 = vld [vmem:[%s226 + $0x5c] sm:$0xf]
      %v263 = vld [vmem:[%s226 + $0x60] sm:$0xf]
      %v264 = vld [vmem:[%s226 + $0x64] sm:$0xf]
      %v265 = vld [vmem:[%s226 + $0x68] sm:$0xf]
      %v266 = vld [vmem:[%s226 + $0x6c] sm:$0xf]
      %v267 = vld [vmem:[%s226 + $0x70] sm:$0xf]
      %v268 = vld [vmem:[%s226 + $0x74] sm:$0xf]
      %v269 = vld [vmem:[%s226 + $0x78] sm:$0xf]
      %v270 = vld [vmem:[%s226 + $0x7c] sm:$0xf]
      %v271 = vunpack.c.l.bf16 %v239
      %v272 = vunpack.c.l.bf16 %v240
      %v273 = vunpack.c.l.bf16 %v241
      %v274 = vunpack.c.l.bf16 %v242
      %v275 = vunpack.c.l.bf16 %v243
      %v276 = vunpack.c.l.bf16 %v244
      %v277 = vunpack.c.l.bf16 %v245
      %v278 = vunpack.c.l.bf16 %v246
      %v279 = vunpack.c.l.bf16 %v247
      %v280 = vunpack.c.l.bf16 %v248
      %v281 = vunpack.c.l.bf16 %v249
      %v282 = vunpack.c.l.bf16 %v250
      %v283 = vunpack.c.l.bf16 %v251
      %v284 = vunpack.c.l.bf16 %v252
      %v285 = vunpack.c.l.bf16 %v253
      %v286 = vunpack.c.l.bf16 %v254
      %v287 = vunpack.c.l.bf16 %v255
      %v288 = vunpack.c.l.bf16 %v256
      %v289 = vunpack.c.l.bf16 %v257
      %v290 = vunpack.c.l.bf16 %v258
      %v291 = vunpack.c.l.bf16 %v259
      %v292 = vunpack.c.l.bf16 %v260
      %v293 = vunpack.c.l.bf16 %v261
      %v294 = vunpack.c.l.bf16 %v262
      %v295 = vunpack.c.l.bf16 %v263
      %v296 = vunpack.c.l.bf16 %v264
      %v297 = vunpack.c.l.bf16 %v265
      %v298 = vunpack.c.l.bf16 %v266
      %v299 = vunpack.c.l.bf16 %v267
      %v300 = vunpack.c.l.bf16 %v268
      %v301 = vunpack.c.l.bf16 %v269
      %v302 = vunpack.c.l.bf16 %v270
      %v304 = vlaneseq
      %v305 = vshrl.u32 %v304, 7
      %v306 = vsub.s32 0, %v305
      %v307 = vrot.slane %v237, %v306
      %v309 = vmul.f32 %v271, %v307
      %v310 = vmul.f32 %v272, %v307
      %v311 = vmul.f32 %v273, %v307
      %v312 = vmul.f32 %v274, %v307
      %v313 = vmul.f32 %v275, %v307
      %v314 = vmul.f32 %v276, %v307
      %v315 = vmul.f32 %v277, %v307
      %v316 = vmul.f32 %v278, %v307
      %v317 = vmul.f32 %v279, %v307
      %v318 = vmul.f32 %v280, %v307
      %v319 = vmul.f32 %v281, %v307
      %v320 = vmul.f32 %v282, %v307
      %v321 = vmul.f32 %v283, %v307
      %v322 = vmul.f32 %v284, %v307
      %v323 = vmul.f32 %v285, %v307
      %v324 = vmul.f32 %v286, %v307
      %v325 = vmul.f32 %v287, %v307
      %v326 = vmul.f32 %v288, %v307
      %v327 = vmul.f32 %v289, %v307
      %v328 = vmul.f32 %v290, %v307
      %v329 = vmul.f32 %v291, %v307
      %v330 = vmul.f32 %v292, %v307
      %v331 = vmul.f32 %v293, %v307
      %v332 = vmul.f32 %v294, %v307
      %v333 = vmul.f32 %v295, %v307
      %v334 = vmul.f32 %v296, %v307
      %v335 = vmul.f32 %v297, %v307
      %v336 = vmul.f32 %v298, %v307
      %v337 = vmul.f32 %v299, %v307
      %v338 = vmul.f32 %v300, %v307
      %v339 = vmul.f32 %v301, %v307
      %v340 = vmul.f32 %v302, %v307
      %v342 = vlaneseq
      %v343 = vshrl.u32 %v342, 7
      %v344 = vsub.s32 0, %v343
      %v345 = vrot.slane %v238, %v344
      %v347 = vadd.f32 %v309, %v345
      %v348 = vadd.f32 %v310, %v345
      %v349 = vadd.f32 %v311, %v345
      %v350 = vadd.f32 %v312, %v345
      %v351 = vadd.f32 %v313, %v345
      %v352 = vadd.f32 %v314, %v345
      %v353 = vadd.f32 %v315, %v345
      %v354 = vadd.f32 %v316, %v345
      %v355 = vadd.f32 %v317, %v345
      %v356 = vadd.f32 %v318, %v345
      %v357 = vadd.f32 %v319, %v345
      %v358 = vadd.f32 %v320, %v345
      %v359 = vadd.f32 %v321, %v345
      %v360 = vadd.f32 %v322, %v345
      %v361 = vadd.f32 %v323, %v345
      %v362 = vadd.f32 %v324, %v345
      %v363 = vadd.f32 %v325, %v345
      %v364 = vadd.f32 %v326, %v345
      %v365 = vadd.f32 %v327, %v345
      %v366 = vadd.f32 %v328, %v345
      %v367 = vadd.f32 %v329, %v345
      %v368 = vadd.f32 %v330, %v345
      %v369 = vadd.f32 %v331, %v345
      %v370 = vadd.f32 %v332, %v345
      %v371 = vadd.f32 %v333, %v345
      %v372 = vadd.f32 %v334, %v345
      %v373 = vadd.f32 %v335, %v345
      %v374 = vadd.f32 %v336, %v345
      %v375 = vadd.f32 %v337, %v345
      %v376 = vadd.f32 %v338, %v345
      %v377 = vadd.f32 %v339, %v345
      %v378 = vadd.f32 %v340, %v345
      %v379 = vmax.f32 %v347, 0.0
      %v380 = vmax.f32 %v348, 0.0
      %v381 = vmax.f32 %v349, 0.0
      %v382 = vmax.f32 %v350, 0.0
      %v383 = vmax.f32 %v351, 0.0
      %v384 = vmax.f32 %v352, 0.0
      %v385 = vmax.f32 %v353, 0.0
      %v386 = vmax.f32 %v354, 0.0
      %v387 = vmax.f32 %v355, 0.0
      %v388 = vmax.f32 %v356, 0.0
      %v389 = vmax.f32 %v357, 0.0
      %v390 = vmax.f32 %v358, 0.0
      %v391 = vmax.f32 %v359, 0.0
      %v392 = vmax.f32 %v360, 0.0
      %v393 = vmax.f32 %v361, 0.0
      %v394 = vmax.f32 %v362, 0.0
      %v395 = vmax.f32 %v363, 0.0
      %v396 = vmax.f32 %v364, 0.0
      %v397 = vmax.f32 %v365, 0.0
      %v398 = vmax.f32 %v366, 0.0
      %v399 = vmax.f32 %v367, 0.0
      %v400 = vmax.f32 %v368, 0.0
      %v401 = vmax.f32 %v369, 0.0
      %v402 = vmax.f32 %v370, 0.0
      %v403 = vmax.f32 %v371, 0.0
      %v404 = vmax.f32 %v372, 0.0
      %v405 = vmax.f32 %v373, 0.0
      %v406 = vmax.f32 %v374, 0.0
      %v407 = vmax.f32 %v375, 0.0
      %v408 = vmax.f32 %v376, 0.0
      %v409 = vmax.f32 %v377, 0.0
      %v410 = vmax.f32 %v378, 0.0
      %v411 = vpack.c.bf16 %v380, %v379
      %v412 = vpack.c.bf16 %v382, %v381
      %v413 = vpack.c.bf16 %v384, %v383
      %v414 = vpack.c.bf16 %v386, %v385
      %v415 = vpack.c.bf16 %v388, %v387
      %v416 = vpack.c.bf16 %v390, %v389
      %v417 = vpack.c.bf16 %v392, %v391
      %v418 = vpack.c.bf16 %v394, %v393
      %v419 = vpack.c.bf16 %v396, %v395
      %v420 = vpack.c.bf16 %v398, %v397
      %v421 = vpack.c.bf16 %v400, %v399
      %v422 = vpack.c.bf16 %v402, %v401
      %v423 = vpack.c.bf16 %v404, %v403
      %v424 = vpack.c.bf16 %v406, %v405
      %v425 = vpack.c.bf16 %v408, %v407
      %v426 = vpack.c.bf16 %v410, %v409
      %v427 = vld [vmem:[%s3] sm:$0xf]
      %v428 = vld [vmem:[%s3 + $0x4] sm:$0xf]
      %v429 = vld [vmem:[%s3 + $0x8] sm:$0xf]
      %v430 = vld [vmem:[%s3 + $0xc] sm:$0xf]
      %v431 = vld [vmem:[%s3 + $0x10] sm:$0xf]
      %v432 = vld [vmem:[%s3 + $0x14] sm:$0xf]
      %v433 = vld [vmem:[%s3 + $0x18] sm:$0xf]
      %v434 = vld [vmem:[%s3 + $0x1c] sm:$0xf]
      %v435 = vld [vmem:[%s3 + $0x20] sm:$0xf]
      %v436 = vld [vmem:[%s3 + $0x24] sm:$0xf]
      %v437 = vld [vmem:[%s3 + $0x28] sm:$0xf]
      %v438 = vld [vmem:[%s3 + $0x2c] sm:$0xf]
      %v439 = vld [vmem:[%s3 + $0x30] sm:$0xf]
      %v440 = vld [vmem:[%s3 + $0x34] sm:$0xf]
      %v441 = vld [vmem:[%s3 + $0x38] sm:$0xf]
      %v442 = vld [vmem:[%s3 + $0x3c] sm:$0xf]
      %v443 = vld [vmem:[%s3 + $0x40] sm:$0xf]
      %v444 = vld [vmem:[%s3 + $0x44] sm:$0xf]
      %v445 = vld [vmem:[%s3 + $0x48] sm:$0xf]
      %v446 = vld [vmem:[%s3 + $0x4c] sm:$0xf]
      %v447 = vld [vmem:[%s3 + $0x50] sm:$0xf]
      %v448 = vld [vmem:[%s3 + $0x54] sm:$0xf]
      %v449 = vld [vmem:[%s3 + $0x58] sm:$0xf]
      %v450 = vld [vmem:[%s3 + $0x5c] sm:$0xf]
      %v451 = vld [vmem:[%s3 + $0x60] sm:$0xf]
      %v452 = vld [vmem:[%s3 + $0x64] sm:$0xf]
      %v453 = vld [vmem:[%s3 + $0x68] sm:$0xf]
      %v454 = vld [vmem:[%s3 + $0x6c] sm:$0xf]
      %v455 = vld [vmem:[%s3 + $0x70] sm:$0xf]
      %v456 = vld [vmem:[%s3 + $0x74] sm:$0xf]
      %v457 = vld [vmem:[%s3 + $0x78] sm:$0xf]
      %v458 = vld [vmem:[%s3 + $0x7c] sm:$0xf]
      %v459 = vld [vmem:[%s3 + $0x80] sm:$0xf]
      %v460 = vld [vmem:[%s3 + $0x84] sm:$0xf]
      %v461 = vld [vmem:[%s3 + $0x88] sm:$0xf]
      %v462 = vld [vmem:[%s3 + $0x8c] sm:$0xf]
      %v463 = vld [vmem:[%s3 + $0x90] sm:$0xf]
      %v464 = vld [vmem:[%s3 + $0x94] sm:$0xf]
      %v465 = vld [vmem:[%s3 + $0x98] sm:$0xf]
      %v466 = vld [vmem:[%s3 + $0x9c] sm:$0xf]
      %v467 = vld [vmem:[%s3 + $0xa0] sm:$0xf]
      %v468 = vld [vmem:[%s3 + $0xa4] sm:$0xf]
      %v469 = vld [vmem:[%s3 + $0xa8] sm:$0xf]
      %v470 = vld [vmem:[%s3 + $0xac] sm:$0xf]
      %v471 = vld [vmem:[%s3 + $0xb0] sm:$0xf]
      %v472 = vld [vmem:[%s3 + $0xb4] sm:$0xf]
      %v473 = vld [vmem:[%s3 + $0xb8] sm:$0xf]
      %v474 = vld [vmem:[%s3 + $0xbc] sm:$0xf]
      %v475 = vld [vmem:[%s3 + $0xc0] sm:$0xf]
      %v476 = vld [vmem:[%s3 + $0xc4] sm:$0xf]
      %v477 = vld [vmem:[%s3 + $0xc8] sm:$0xf]
      %v478 = vld [vmem:[%s3 + $0xcc] sm:$0xf]
      %v479 = vld [vmem:[%s3 + $0xd0] sm:$0xf]
      %v480 = vld [vmem:[%s3 + $0xd4] sm:$0xf]
      %v481 = vld [vmem:[%s3 + $0xd8] sm:$0xf]
      %v482 = vld [vmem:[%s3 + $0xdc] sm:$0xf]
      %v483 = vld [vmem:[%s3 + $0xe0] sm:$0xf]
      %v484 = vld [vmem:[%s3 + $0xe4] sm:$0xf]
      %v485 = vld [vmem:[%s3 + $0xe8] sm:$0xf]
      %v486 = vld [vmem:[%s3 + $0xec] sm:$0xf]
      %v487 = vld [vmem:[%s3 + $0xf0] sm:$0xf]
      %v488 = vld [vmem:[%s3 + $0xf4] sm:$0xf]
      %v489 = vld [vmem:[%s3 + $0xf8] sm:$0xf]
      %v490 = vld [vmem:[%s3 + $0xfc] sm:$0xf]
      %v491 = vld [vmem:[%s3 + $0x100] sm:$0xf]
      %v492 = vld [vmem:[%s3 + $0x104] sm:$0xf]
      %v493 = vld [vmem:[%s3 + $0x108] sm:$0xf]
      %v494 = vld [vmem:[%s3 + $0x10c] sm:$0xf]
      %v495 = vld [vmem:[%s3 + $0x110] sm:$0xf]
      %v496 = vld [vmem:[%s3 + $0x114] sm:$0xf]
      %v497 = vld [vmem:[%s3 + $0x118] sm:$0xf]
      %v498 = vld [vmem:[%s3 + $0x11c] sm:$0xf]
      %v499 = vld [vmem:[%s3 + $0x120] sm:$0xf]
      %v500 = vld [vmem:[%s3 + $0x124] sm:$0xf]
      %v501 = vld [vmem:[%s3 + $0x128] sm:$0xf]
      %v502 = vld [vmem:[%s3 + $0x12c] sm:$0xf]
      %v503 = vld [vmem:[%s3 + $0x130] sm:$0xf]
      %v504 = vld [vmem:[%s3 + $0x134] sm:$0xf]
      %v505 = vld [vmem:[%s3 + $0x138] sm:$0xf]
      %v506 = vld [vmem:[%s3 + $0x13c] sm:$0xf]
      %v507 = vld [vmem:[%s3 + $0x140] sm:$0xf]
      %v508 = vld [vmem:[%s3 + $0x144] sm:$0xf]
      %v509 = vld [vmem:[%s3 + $0x148] sm:$0xf]
      %v510 = vld [vmem:[%s3 + $0x14c] sm:$0xf]
      %v511 = vld [vmem:[%s3 + $0x150] sm:$0xf]
      %v512 = vld [vmem:[%s3 + $0x154] sm:$0xf]
      %v513 = vld [vmem:[%s3 + $0x158] sm:$0xf]
      %v514 = vld [vmem:[%s3 + $0x15c] sm:$0xf]
      %v515 = vld [vmem:[%s3 + $0x160] sm:$0xf]
      %v516 = vld [vmem:[%s3 + $0x164] sm:$0xf]
      %v517 = vld [vmem:[%s3 + $0x168] sm:$0xf]
      %v518 = vld [vmem:[%s3 + $0x16c] sm:$0xf]
      %v519 = vld [vmem:[%s3 + $0x170] sm:$0xf]
      %v520 = vld [vmem:[%s3 + $0x174] sm:$0xf]
      %v521 = vld [vmem:[%s3 + $0x178] sm:$0xf]
      %v522 = vld [vmem:[%s3 + $0x17c] sm:$0xf]
      %v523 = vld [vmem:[%s3 + $0x180] sm:$0xf]
      %v524 = vld [vmem:[%s3 + $0x184] sm:$0xf]
      %v525 = vld [vmem:[%s3 + $0x188] sm:$0xf]
      %v526 = vld [vmem:[%s3 + $0x18c] sm:$0xf]
      %v527 = vld [vmem:[%s3 + $0x190] sm:$0xf]
      %v528 = vld [vmem:[%s3 + $0x194] sm:$0xf]
      %v529 = vld [vmem:[%s3 + $0x198] sm:$0xf]
      %v530 = vld [vmem:[%s3 + $0x19c] sm:$0xf]
      %v531 = vld [vmem:[%s3 + $0x1a0] sm:$0xf]
      %v532 = vld [vmem:[%s3 + $0x1a4] sm:$0xf]
      %v533 = vld [vmem:[%s3 + $0x1a8] sm:$0xf]
      %v534 = vld [vmem:[%s3 + $0x1ac] sm:$0xf]
      %v535 = vld [vmem:[%s3 + $0x1b0] sm:$0xf]
      %v536 = vld [vmem:[%s3 + $0x1b4] sm:$0xf]
      %v537 = vld [vmem:[%s3 + $0x1b8] sm:$0xf]
      %v538 = vld [vmem:[%s3 + $0x1bc] sm:$0xf]
      %v539 = vld [vmem:[%s3 + $0x1c0] sm:$0xf]
      %v540 = vld [vmem:[%s3 + $0x1c4] sm:$0xf]
      %v541 = vld [vmem:[%s3 + $0x1c8] sm:$0xf]
      %v542 = vld [vmem:[%s3 + $0x1cc] sm:$0xf]
      %v543 = vld [vmem:[%s3 + $0x1d0] sm:$0xf]
      %v544 = vld [vmem:[%s3 + $0x1d4] sm:$0xf]
      %v545 = vld [vmem:[%s3 + $0x1d8] sm:$0xf]
      %v546 = vld [vmem:[%s3 + $0x1dc] sm:$0xf]
      %v547 = vld [vmem:[%s3 + $0x1e0] sm:$0xf]
      %v548 = vld [vmem:[%s3 + $0x1e4] sm:$0xf]
      %v549 = vld [vmem:[%s3 + $0x1e8] sm:$0xf]
      %v550 = vld [vmem:[%s3 + $0x1ec] sm:$0xf]
      %v551 = vld [vmem:[%s3 + $0x1f0] sm:$0xf]
      %v552 = vld [vmem:[%s3 + $0x1f4] sm:$0xf]
      %v553 = vld [vmem:[%s3 + $0x1f8] sm:$0xf]
      %v554 = vld [vmem:[%s3 + $0x1fc] sm:$0xf]
      %v555 = vld [vmem:[%s3 + $0x200] sm:$0xf]
      %v556 = vld [vmem:[%s3 + $0x204] sm:$0xf]
      %v557 = vld [vmem:[%s3 + $0x208] sm:$0xf]
      %v558 = vld [vmem:[%s3 + $0x20c] sm:$0xf]
      %v559 = vld [vmem:[%s3 + $0x210] sm:$0xf]
      %v560 = vld [vmem:[%s3 + $0x214] sm:$0xf]
      %v561 = vld [vmem:[%s3 + $0x218] sm:$0xf]
      %v562 = vld [vmem:[%s3 + $0x21c] sm:$0xf]
      %v563 = vld [vmem:[%s3 + $0x220] sm:$0xf]
      %v564 = vld [vmem:[%s3 + $0x224] sm:$0xf]
      %v565 = vld [vmem:[%s3 + $0x228] sm:$0xf]
      %v566 = vld [vmem:[%s3 + $0x22c] sm:$0xf]
      %v567 = vld [vmem:[%s3 + $0x230] sm:$0xf]
      %v568 = vld [vmem:[%s3 + $0x234] sm:$0xf]
      %v569 = vld [vmem:[%s3 + $0x238] sm:$0xf]
      %v570 = vld [vmem:[%s3 + $0x23c] sm:$0xf]
      %571 = vst [vmem:[#allocation2] sm:$0xf] 0
      %572 = vst [vmem:[#allocation2 + $0x4] sm:$0xf] 0
      %573 = vst [vmem:[#allocation2 + $0x8] sm:$0x1] 0
      %s574 = scalar_lea.vmem [#allocation2], 204
      %575 = vst [vmem:[%s574] sm:$0xf] 0
      %576 = vst [vmem:[%s574 + $0x4] sm:$0xf] 0
      %577 = vst [vmem:[%s574 + $0x8] sm:$0x1] 0
      %vm578 = vcmask 1040384
      %vm579 = vsmask.f32 256
      %vm580 = vmand %vm578, %vm579
      %v581 = vld [vmem:[#allocation2] sm:$0x1]
      %v582 = vsel %vm580, 0, %v581
      %583 = vst [vmem:[#allocation2] sm:$0x1] %v582
      %v584 = vld [vmem:[#allocation2 + $0xc] sm:$0x1]
      %v585 = vsel %vm580, 0, %v584
      %586 = vst [vmem:[#allocation2 + $0xc] sm:$0x1] %v585
      %v587 = vld [vmem:[#allocation2 + $0x18] sm:$0x1]
      %v588 = vsel %vm580, 0, %v587
      %589 = vst [vmem:[#allocation2 + $0x18] sm:$0x1] %v588
      %v590 = vld [vmem:[#allocation2 + $0x24] sm:$0x1]
      %v591 = vsel %vm580, 0, %v590
      %592 = vst [vmem:[#allocation2 + $0x24] sm:$0x1] %v591
      %v593 = vld [vmem:[#allocation2 + $0x30] sm:$0x1]
      %v594 = vsel %vm580, 0, %v593
      %595 = vst [vmem:[#allocation2 + $0x30] sm:$0x1] %v594
      %v596 = vld [vmem:[#allocation2 + $0x3c] sm:$0x1]
      %v597 = vsel %vm580, 0, %v596
      %598 = vst [vmem:[#allocation2 + $0x3c] sm:$0x1] %v597
      %v599 = vld [vmem:[#allocation2 + $0x48] sm:$0x1]
      %v600 = vsel %vm580, 0, %v599
      %601 = vst [vmem:[#allocation2 + $0x48] sm:$0x1] %v600
      %v602 = vld [vmem:[#allocation2 + $0x54] sm:$0x1]
      %v603 = vsel %vm580, 0, %v602
      %604 = vst [vmem:[#allocation2 + $0x54] sm:$0x1] %v603
      %v605 = vld [vmem:[#allocation2 + $0x60] sm:$0x1]
      %v606 = vsel %vm580, 0, %v605
      %607 = vst [vmem:[#allocation2 + $0x60] sm:$0x1] %v606
      %v608 = vld [vmem:[#allocation2 + $0x6c] sm:$0x1]
      %v609 = vsel %vm580, 0, %v608
      %610 = vst [vmem:[#allocation2 + $0x6c] sm:$0x1] %v609
      %v611 = vld [vmem:[#allocation2 + $0x78] sm:$0x1]
      %v612 = vsel %vm580, 0, %v611
      %613 = vst [vmem:[#allocation2 + $0x78] sm:$0x1] %v612
      %v614 = vld [vmem:[#allocation2 + $0x84] sm:$0x1]
      %v615 = vsel %vm580, 0, %v614
      %616 = vst [vmem:[#allocation2 + $0x84] sm:$0x1] %v615
      %v617 = vld [vmem:[#allocation2 + $0x90] sm:$0x1]
      %v618 = vsel %vm580, 0, %v617
      %619 = vst [vmem:[#allocation2 + $0x90] sm:$0x1] %v618
      %v620 = vld [vmem:[#allocation2 + $0x9c] sm:$0x1]
      %v621 = vsel %vm580, 0, %v620
      %622 = vst [vmem:[#allocation2 + $0x9c] sm:$0x1] %v621
      %v623 = vld [vmem:[#allocation2 + $0xa8] sm:$0x1]
      %v624 = vsel %vm580, 0, %v623
      %625 = vst [vmem:[#allocation2 + $0xa8] sm:$0x1] %v624
      %v626 = vld [vmem:[#allocation2 + $0xb4] sm:$0x1]
      %v627 = vsel %vm580, 0, %v626
      %628 = vst [vmem:[#allocation2 + $0xb4] sm:$0x1] %v627
      %v629 = vld [vmem:[#allocation2 + $0xc0] sm:$0x1]
      %v630 = vsel %vm580, 0, %v629
      %631 = vst [vmem:[#allocation2 + $0xc0] sm:$0x1] %v630
      %v632 = vld [vmem:[#allocation2 + $0xcc] sm:$0x1]
      %v633 = vsel %vm580, 0, %v632
      %634 = vst [vmem:[#allocation2 + $0xcc] sm:$0x1] %v633
      %vm635 = vsmask.f32 7938
      %vm636 = vmand %vm578, %vm635
      %v637 = vld [vmem:[#allocation2 + $0x8] sm:$0x1]
      %v638 = vsel %vm636, 0, %v637
      %639 = vst [vmem:[#allocation2 + $0x8] sm:$0x1] %v638
      %v640 = vld [vmem:[#allocation2 + $0x14] sm:$0x1]
      %v641 = vsel %vm636, 0, %v640
      %642 = vst [vmem:[#allocation2 + $0x14] sm:$0x1] %v641
      %v643 = vld [vmem:[#allocation2 + $0x20] sm:$0x1]
      %v644 = vsel %vm636, 0, %v643
      %645 = vst [vmem:[#allocation2 + $0x20] sm:$0x1] %v644
      %v646 = vld [vmem:[#allocation2 + $0x2c] sm:$0x1]
      %v647 = vsel %vm636, 0, %v646
      %648 = vst [vmem:[#allocation2 + $0x2c] sm:$0x1] %v647
      %v649 = vld [vmem:[#allocation2 + $0x38] sm:$0x1]
      %v650 = vsel %vm636, 0, %v649
      %651 = vst [vmem:[#allocation2 + $0x38] sm:$0x1] %v650
      %v652 = vld [vmem:[#allocation2 + $0x44] sm:$0x1]
      %v653 = vsel %vm636, 0, %v652
      %654 = vst [vmem:[#allocation2 + $0x44] sm:$0x1] %v653
      %v655 = vld [vmem:[#allocation2 + $0x50] sm:$0x1]
      %v656 = vsel %vm636, 0, %v655
      %657 = vst [vmem:[#allocation2 + $0x50] sm:$0x1] %v656
      %v658 = vld [vmem:[#allocation2 + $0x5c] sm:$0x1]
      %v659 = vsel %vm636, 0, %v658
      %660 = vst [vmem:[#allocation2 + $0x5c] sm:$0x1] %v659
      %v661 = vld [vmem:[#allocation2 + $0x68] sm:$0x1]
      %v662 = vsel %vm636, 0, %v661
      %663 = vst [vmem:[#allocation2 + $0x68] sm:$0x1] %v662
      %v664 = vld [vmem:[#allocation2 + $0x74] sm:$0x1]
      %v665 = vsel %vm636, 0, %v664
      %666 = vst [vmem:[#allocation2 + $0x74] sm:$0x1] %v665
      %v667 = vld [vmem:[#allocation2 + $0x80] sm:$0x1]
      %v668 = vsel %vm636, 0, %v667
      %669 = vst [vmem:[#allocation2 + $0x80] sm:$0x1] %v668
      %v670 = vld [vmem:[#allocation2 + $0x8c] sm:$0x1]
      %v671 = vsel %vm636, 0, %v670
      %672 = vst [vmem:[#allocation2 + $0x8c] sm:$0x1] %v671
      %v673 = vld [vmem:[#allocation2 + $0x98] sm:$0x1]
      %v674 = vsel %vm636, 0, %v673
      %675 = vst [vmem:[#allocation2 + $0x98] sm:$0x1] %v674
      %v676 = vld [vmem:[#allocation2 + $0xa4] sm:$0x1]
      %v677 = vsel %vm636, 0, %v676
      %678 = vst [vmem:[#allocation2 + $0xa4] sm:$0x1] %v677
      %v679 = vld [vmem:[#allocation2 + $0xb0] sm:$0x1]
      %v680 = vsel %vm636, 0, %v679
      %681 = vst [vmem:[#allocation2 + $0xb0] sm:$0x1] %v680
      %v682 = vld [vmem:[#allocation2 + $0xbc] sm:$0x1]
      %v683 = vsel %vm636, 0, %v682
      %684 = vst [vmem:[#allocation2 + $0xbc] sm:$0x1] %v683
      %v685 = vld [vmem:[#allocation2 + $0xc8] sm:$0x1]
      %v686 = vsel %vm636, 0, %v685
      %687 = vst [vmem:[#allocation2 + $0xc8] sm:$0x1] %v686
      %v688 = vld [vmem:[#allocation2 + $0xd4] sm:$0x1]
      %v689 = vsel %vm636, 0, %v688
      %690 = vst [vmem:[#allocation2 + $0xd4] sm:$0x1] %v689
      %v707 = vunpack.c.l.b16 %v411
      %v708 = vunpack.c.h.b16 %v411
      %v709 = vunpack.c.l.b16 %v412
      %v710 = vunpack.c.h.b16 %v412
      %v711 = vunpack.c.l.b16 %v413
      %v712 = vunpack.c.h.b16 %v413
      %v713 = vunpack.c.l.b16 %v414
      %v714 = vunpack.c.h.b16 %v414
      %v715 = vunpack.c.l.b16 %v415
      %v716 = vunpack.c.h.b16 %v415
      %v717 = vunpack.c.l.b16 %v416
      %v718 = vunpack.c.h.b16 %v416
      %v719 = vunpack.c.l.b16 %v417
      %v720 = vunpack.c.h.b16 %v417
      %v721 = vunpack.c.l.b16 %v418
      %v722 = vunpack.c.h.b16 %v418
      %v723 = vunpack.c.l.b16 %v419
      %v724 = vunpack.c.h.b16 %v419
      %v725 = vunpack.c.l.b16 %v420
      %v726 = vunpack.c.h.b16 %v420
      %v727 = vunpack.c.l.b16 %v421
      %v728 = vunpack.c.h.b16 %v421
      %v729 = vunpack.c.l.b16 %v422
      %v730 = vunpack.c.h.b16 %v422
      %v731 = vunpack.c.l.b16 %v423
      %v732 = vunpack.c.h.b16 %v423
      %v733 = vunpack.c.l.b16 %v424
      %v734 = vunpack.c.h.b16 %v424
      %v735 = vunpack.c.l.b16 %v425
      %v736 = vunpack.c.h.b16 %v425
      %v737 = vunpack.c.l.b16 %v426
      %v738 = vunpack.c.h.b16 %v426
      %v739 = vpack.c.b16 %v707, %v707
      %v740 = vpack.c.b16 %v708, %v708
      %v741 = vpack.c.b16 %v709, %v709
      %v742 = vpack.c.b16 %v710, %v710
      %v743 = vpack.c.b16 %v711, %v711
      %v744 = vpack.c.b16 %v712, %v712
      %v745 = vpack.c.b16 %v713, %v713
      %v746 = vpack.c.b16 %v714, %v714
      %v747 = vpack.c.b16 %v715, %v715
      %v748 = vpack.c.b16 %v716, %v716
      %v749 = vpack.c.b16 %v717, %v717
      %v750 = vpack.c.b16 %v718, %v718
      %v751 = vpack.c.b16 %v719, %v719
      %v752 = vpack.c.b16 %v720, %v720
      %v753 = vpack.c.b16 %v721, %v721
      %v754 = vpack.c.b16 %v722, %v722
      %v755 = vpack.c.b16 %v723, %v723
      %v756 = vpack.c.b16 %v724, %v724
      %v757 = vpack.c.b16 %v725, %v725
      %v758 = vpack.c.b16 %v726, %v726
      %v759 = vpack.c.b16 %v727, %v727
      %v760 = vpack.c.b16 %v728, %v728
      %v761 = vpack.c.b16 %v729, %v729
      %v762 = vpack.c.b16 %v730, %v730
      %v763 = vpack.c.b16 %v731, %v731
      %v764 = vpack.c.b16 %v732, %v732
      %v765 = vpack.c.b16 %v733, %v733
      %v766 = vpack.c.b16 %v734, %v734
      %v767 = vpack.c.b16 %v735, %v735
      %v768 = vpack.c.b16 %v736, %v736
      %v769 = vpack.c.b16 %v737, %v737
      %v770 = vpack.c.b16 %v738, %v738
      %vm771 = vsmask.f32 4368
      %vm772 = vmor %vm579, %vm771
      %v774 = vshrl.u32 %v739, 16
      %v776 = vrot.slane %v774, 7
      %v777 = vshll.u32 %v739, 16
      %v779 = vor.u32 %v776, %v777
      %v780 = vrot.slane %v776, 4
      %v782 = vshrl.u32 %v740, 16
      %v784 = vrot.slane %v782, 7
      %v785 = vshll.u32 %v740, 16
      %v787 = vor.u32 %v784, %v785
      %v788 = vsel %vm772, %v780, %v787
      %v789 = vrot.slane %v784, 4
      %v791 = vshrl.u32 %v741, 16
      %v793 = vrot.slane %v791, 7
      %v794 = vshll.u32 %v741, 16
      %v796 = vor.u32 %v793, %v794
      %v797 = vrot.slane %v793, 4
      %v799 = vshrl.u32 %v742, 16
      %v801 = vrot.slane %v799, 7
      %v802 = vshll.u32 %v742, 16
      %v804 = vor.u32 %v801, %v802
      %v805 = vsel %vm772, %v797, %v804
      %v806 = vrot.slane %v801, 4
      %v808 = vshrl.u32 %v743, 16
      %v810 = vrot.slane %v808, 7
      %v811 = vshll.u32 %v743, 16
      %v813 = vor.u32 %v810, %v811
      %v814 = vrot.slane %v810, 4
      %v816 = vshrl.u32 %v744, 16
      %v818 = vrot.slane %v816, 7
      %v819 = vshll.u32 %v744, 16
      %v821 = vor.u32 %v818, %v819
      %v822 = vsel %vm772, %v814, %v821
      %v823 = vrot.slane %v818, 4
      %v825 = vshrl.u32 %v745, 16
      %v827 = vrot.slane %v825, 7
      %v828 = vshll.u32 %v745, 16
      %v830 = vor.u32 %v827, %v828
      %v831 = vrot.slane %v827, 4
      %v833 = vshrl.u32 %v746, 16
      %v835 = vrot.slane %v833, 7
      %v836 = vshll.u32 %v746, 16
      %v838 = vor.u32 %v835, %v836
      %v839 = vsel %vm772, %v831, %v838
      %v840 = vrot.slane %v835, 4
      %v842 = vshrl.u32 %v747, 16
      %v844 = vrot.slane %v842, 7
      %v845 = vshll.u32 %v747, 16
      %v847 = vor.u32 %v844, %v845
      %v848 = vrot.slane %v844, 4
      %v850 = vshrl.u32 %v748, 16
      %v852 = vrot.slane %v850, 7
      %v853 = vshll.u32 %v748, 16
      %v855 = vor.u32 %v852, %v853
      %v856 = vsel %vm772, %v848, %v855
      %v857 = vrot.slane %v852, 4
      %v859 = vshrl.u32 %v749, 16
      %v861 = vrot.slane %v859, 7
      %v862 = vshll.u32 %v749, 16
      %v864 = vor.u32 %v861, %v862
      %v865 = vrot.slane %v861, 4
      %v867 = vshrl.u32 %v750, 16
      %v869 = vrot.slane %v867, 7
      %v870 = vshll.u32 %v750, 16
      %v872 = vor.u32 %v869, %v870
      %v873 = vsel %vm772, %v865, %v872
      %v874 = vrot.slane %v869, 4
      %v876 = vshrl.u32 %v751, 16
      %v878 = vrot.slane %v876, 7
      %v879 = vshll.u32 %v751, 16
      %v881 = vor.u32 %v878, %v879
      %v882 = vrot.slane %v878, 4
      %v884 = vshrl.u32 %v752, 16
      %v886 = vrot.slane %v884, 7
      %v887 = vshll.u32 %v752, 16
      %v889 = vor.u32 %v886, %v887
      %v890 = vsel %vm772, %v882, %v889
      %v891 = vrot.slane %v886, 4
      %v893 = vshrl.u32 %v753, 16
      %v895 = vrot.slane %v893, 7
      %v896 = vshll.u32 %v753, 16
      %v898 = vor.u32 %v895, %v896
      %v899 = vrot.slane %v895, 4
      %v901 = vshrl.u32 %v754, 16
      %v903 = vrot.slane %v901, 7
      %v904 = vshll.u32 %v754, 16
      %v906 = vor.u32 %v903, %v904
      %v907 = vsel %vm772, %v899, %v906
      %v908 = vrot.slane %v903, 4
      %v910 = vshrl.u32 %v755, 16
      %v912 = vrot.slane %v910, 7
      %v913 = vshll.u32 %v755, 16
      %v915 = vor.u32 %v912, %v913
      %v916 = vrot.slane %v912, 4
      %v918 = vshrl.u32 %v756, 16
      %v920 = vrot.slane %v918, 7
      %v921 = vshll.u32 %v756, 16
      %v923 = vor.u32 %v920, %v921
      %v924 = vsel %vm772, %v916, %v923
      %v925 = vrot.slane %v920, 4
      %v927 = vshrl.u32 %v757, 16
      %v929 = vrot.slane %v927, 7
      %v930 = vshll.u32 %v757, 16
      %v932 = vor.u32 %v929, %v930
      %v933 = vrot.slane %v929, 4
      %v935 = vshrl.u32 %v758, 16
      %v937 = vrot.slane %v935, 7
      %v938 = vshll.u32 %v758, 16
      %v940 = vor.u32 %v937, %v938
      %v941 = vsel %vm772, %v933, %v940
      %v942 = vrot.slane %v937, 4
      %v944 = vshrl.u32 %v759, 16
      %v946 = vrot.slane %v944, 7
      %v947 = vshll.u32 %v759, 16
      %v949 = vor.u32 %v946, %v947
      %v950 = vrot.slane %v946, 4
      %v952 = vshrl.u32 %v760, 16
      %v954 = vrot.slane %v952, 7
      %v955 = vshll.u32 %v760, 16
      %v957 = vor.u32 %v954, %v955
      %v958 = vsel %vm772, %v950, %v957
      %v959 = vrot.slane %v954, 4
      %v961 = vshrl.u32 %v761, 16
      %v963 = vrot.slane %v961, 7
      %v964 = vshll.u32 %v761, 16
      %v966 = vor.u32 %v963, %v964
      %v967 = vrot.slane %v963, 4
      %v969 = vshrl.u32 %v762, 16
      %v971 = vrot.slane %v969, 7
      %v972 = vshll.u32 %v762, 16
      %v974 = vor.u32 %v971, %v972
      %v975 = vsel %vm772, %v967, %v974
      %v976 = vrot.slane %v971, 4
      %v978 = vshrl.u32 %v763, 16
      %v980 = vrot.slane %v978, 7
      %v981 = vshll.u32 %v763, 16
      %v983 = vor.u32 %v980, %v981
      %v984 = vrot.slane %v980, 4
      %v986 = vshrl.u32 %v764, 16
      %v988 = vrot.slane %v986, 7
      %v989 = vshll.u32 %v764, 16
      %v991 = vor.u32 %v988, %v989
      %v992 = vsel %vm772, %v984, %v991
      %v993 = vrot.slane %v988, 4
      %v995 = vshrl.u32 %v765, 16
      %v997 = vrot.slane %v995, 7
      %v998 = vshll.u32 %v765, 16
      %v1000 = vor.u32 %v997, %v998
      %v1001 = vrot.slane %v997, 4
      %v1003 = vshrl.u32 %v766, 16
      %v1005 = vrot.slane %v1003, 7
      %v1006 = vshll.u32 %v766, 16
      %v1008 = vor.u32 %v1005, %v1006
      %v1009 = vsel %vm772, %v1001, %v1008
      %v1010 = vrot.slane %v1005, 4
      %v1012 = vshrl.u32 %v767, 16
      %v1014 = vrot.slane %v1012, 7
      %v1015 = vshll.u32 %v767, 16
      %v1017 = vor.u32 %v1014, %v1015
      %v1018 = vrot.slane %v1014, 4
      %v1020 = vshrl.u32 %v768, 16
      %v1022 = vrot.slane %v1020, 7
      %v1023 = vshll.u32 %v768, 16
      %v1025 = vor.u32 %v1022, %v1023
      %v1026 = vsel %vm772, %v1018, %v1025
      %v1027 = vrot.slane %v1022, 4
      %v1029 = vshrl.u32 %v769, 16
      %v1031 = vrot.slane %v1029, 7
      %v1032 = vshll.u32 %v769, 16
      %v1034 = vor.u32 %v1031, %v1032
      %v1035 = vrot.slane %v1031, 4
      %v1037 = vshrl.u32 %v770, 16
      %v1039 = vrot.slane %v1037, 7
      %v1040 = vshll.u32 %v770, 16
      %v1042 = vor.u32 %v1039, %v1040
      %v1043 = vsel %vm772, %v1035, %v1042
      %v1044 = vrot.slane %v1039, 4
      %s1093 = scalar_lea.vmem [#allocation2], 12
      %vm1094 = vcmask 1043456
      %vm1095 = vmand %vm1094, %vm635
      %v1096 = vld [vmem:[%s1093] sm:$0xf]
      %v1097 = vsel %vm1095, %v779, %v1096
      %1098 = vst [vmem:[%s1093] sm:$0xf] %v1097
      %1099 = vst [vmem:[%s1093 + $0x4] sm:$0xf] %v788
      %v1100 = vld [vmem:[%s1093 + $0x8] sm:$0x1]
      %v1101 = vsel %vm580, %v789, %v1100
      %1102 = vst [vmem:[%s1093 + $0x8] sm:$0x1] %v1101
      %v1103 = vld [vmem:[%s1093 + $0xc] sm:$0xf]
      %v1104 = vsel %vm1095, %v796, %v1103
      %1105 = vst [vmem:[%s1093 + $0xc] sm:$0xf] %v1104
      %1106 = vst [vmem:[%s1093 + $0x10] sm:$0xf] %v805
      %v1107 = vld [vmem:[%s1093 + $0x14] sm:$0x1]
      %v1108 = vsel %vm580, %v806, %v1107
      %1109 = vst [vmem:[%s1093 + $0x14] sm:$0x1] %v1108
      %v1110 = vld [vmem:[%s1093 + $0x18] sm:$0xf]
      %v1111 = vsel %vm1095, %v813, %v1110
      %1112 = vst [vmem:[%s1093 + $0x18] sm:$0xf] %v1111
      %1113 = vst [vmem:[%s1093 + $0x1c] sm:$0xf] %v822
      %v1114 = vld [vmem:[%s1093 + $0x20] sm:$0x1]
      %v1115 = vsel %vm580, %v823, %v1114
      %1116 = vst [vmem:[%s1093 + $0x20] sm:$0x1] %v1115
      %v1117 = vld [vmem:[%s1093 + $0x24] sm:$0xf]
      %v1118 = vsel %vm1095, %v830, %v1117
      %1119 = vst [vmem:[%s1093 + $0x24] sm:$0xf] %v1118
      %1120 = vst [vmem:[%s1093 + $0x28] sm:$0xf] %v839
      %v1121 = vld [vmem:[%s1093 + $0x2c] sm:$0x1]
      %v1122 = vsel %vm580, %v840, %v1121
      %1123 = vst [vmem:[%s1093 + $0x2c] sm:$0x1] %v1122
      %v1124 = vld [vmem:[%s1093 + $0x30] sm:$0xf]
      %v1125 = vsel %vm1095, %v847, %v1124
      %1126 = vst [vmem:[%s1093 + $0x30] sm:$0xf] %v1125
      %1127 = vst [vmem:[%s1093 + $0x34] sm:$0xf] %v856
      %v1128 = vld [vmem:[%s1093 + $0x38] sm:$0x1]
      %v1129 = vsel %vm580, %v857, %v1128
      %1130 = vst [vmem:[%s1093 + $0x38] sm:$0x1] %v1129
      %v1131 = vld [vmem:[%s1093 + $0x3c] sm:$0xf]
      %v1132 = vsel %vm1095, %v864, %v1131
      %1133 = vst [vmem:[%s1093 + $0x3c] sm:$0xf] %v1132
      %1134 = vst [vmem:[%s1093 + $0x40] sm:$0xf] %v873
      %v1135 = vld [vmem:[%s1093 + $0x44] sm:$0x1]
      %v1136 = vsel %vm580, %v874, %v1135
      %1137 = vst [vmem:[%s1093 + $0x44] sm:$0x1] %v1136
      %v1138 = vld [vmem:[%s1093 + $0x48] sm:$0xf]
      %v1139 = vsel %vm1095, %v881, %v1138
      %1140 = vst [vmem:[%s1093 + $0x48] sm:$0xf] %v1139
      %1141 = vst [vmem:[%s1093 + $0x4c] sm:$0xf] %v890
      %v1142 = vld [vmem:[%s1093 + $0x50] sm:$0x1]
      %v1143 = vsel %vm580, %v891, %v1142
      %1144 = vst [vmem:[%s1093 + $0x50] sm:$0x1] %v1143
      %v1145 = vld [vmem:[%s1093 + $0x54] sm:$0xf]
      %v1146 = vsel %vm1095, %v898, %v1145
      %1147 = vst [vmem:[%s1093 + $0x54] sm:$0xf] %v1146
      %1148 = vst [vmem:[%s1093 + $0x58] sm:$0xf] %v907
      %v1149 = vld [vmem:[%s1093 + $0x5c] sm:$0x1]
      %v1150 = vsel %vm580, %v908, %v1149
      %1151 = vst [vmem:[%s1093 + $0x5c] sm:$0x1] %v1150
      %v1152 = vld [vmem:[%s1093 + $0x60] sm:$0xf]
      %v1153 = vsel %vm1095, %v915, %v1152
      %1154 = vst [vmem:[%s1093 + $0x60] sm:$0xf] %v1153
      %1155 = vst [vmem:[%s1093 + $0x64] sm:$0xf] %v924
      %v1156 = vld [vmem:[%s1093 + $0x68] sm:$0x1]
      %v1157 = vsel %vm580, %v925, %v1156
      %1158 = vst [vmem:[%s1093 + $0x68] sm:$0x1] %v1157
      %v1159 = vld [vmem:[%s1093 + $0x6c] sm:$0xf]
      %v1160 = vsel %vm1095, %v932, %v1159
      %1161 = vst [vmem:[%s1093 + $0x6c] sm:$0xf] %v1160
      %1162 = vst [vmem:[%s1093 + $0x70] sm:$0xf] %v941
      %v1163 = vld [vmem:[%s1093 + $0x74] sm:$0x1]
      %v1164 = vsel %vm580, %v942, %v1163
      %1165 = vst [vmem:[%s1093 + $0x74] sm:$0x1] %v1164
      %v1166 = vld [vmem:[%s1093 + $0x78] sm:$0xf]
      %v1167 = vsel %vm1095, %v949, %v1166
      %1168 = vst [vmem:[%s1093 + $0x78] sm:$0xf] %v1167
      %1169 = vst [vmem:[%s1093 + $0x7c] sm:$0xf] %v958
      %v1170 = vld [vmem:[%s1093 + $0x80] sm:$0x1]
      %v1171 = vsel %vm580, %v959, %v1170
      %1172 = vst [vmem:[%s1093 + $0x80] sm:$0x1] %v1171
      %v1173 = vld [vmem:[%s1093 + $0x84] sm:$0xf]
      %v1174 = vsel %vm1095, %v966, %v1173
      %1175 = vst [vmem:[%s1093 + $0x84] sm:$0xf] %v1174
      %1176 = vst [vmem:[%s1093 + $0x88] sm:$0xf] %v975
      %v1177 = vld [vmem:[%s1093 + $0x8c] sm:$0x1]
      %v1178 = vsel %vm580, %v976, %v1177
      %1179 = vst [vmem:[%s1093 + $0x8c] sm:$0x1] %v1178
      %v1180 = vld [vmem:[%s1093 + $0x90] sm:$0xf]
      %v1181 = vsel %vm1095, %v983, %v1180
      %1182 = vst [vmem:[%s1093 + $0x90] sm:$0xf] %v1181
      %1183 = vst [vmem:[%s1093 + $0x94] sm:$0xf] %v992
      %v1184 = vld [vmem:[%s1093 + $0x98] sm:$0x1]
      %v1185 = vsel %vm580, %v993, %v1184
      %1186 = vst [vmem:[%s1093 + $0x98] sm:$0x1] %v1185
      %v1187 = vld [vmem:[%s1093 + $0x9c] sm:$0xf]
      %v1188 = vsel %vm1095, %v1000, %v1187
      %1189 = vst [vmem:[%s1093 + $0x9c] sm:$0xf] %v1188
      %1190 = vst [vmem:[%s1093 + $0xa0] sm:$0xf] %v1009
      %v1191 = vld [vmem:[%s1093 + $0xa4] sm:$0x1]
      %v1192 = vsel %vm580, %v1010, %v1191
      %1193 = vst [vmem:[%s1093 + $0xa4] sm:$0x1] %v1192
      %v1194 = vld [vmem:[%s1093 + $0xa8] sm:$0xf]
      %v1195 = vsel %vm1095, %v1017, %v1194
      %1196 = vst [vmem:[%s1093 + $0xa8] sm:$0xf] %v1195
      %1197 = vst [vmem:[%s1093 + $0xac] sm:$0xf] %v1026
      %v1198 = vld [vmem:[%s1093 + $0xb0] sm:$0x1]
      %v1199 = vsel %vm580, %v1027, %v1198
      %1200 = vst [vmem:[%s1093 + $0xb0] sm:$0x1] %v1199
      %v1201 = vld [vmem:[%s1093 + $0xb4] sm:$0xf]
      %v1202 = vsel %vm1095, %v1034, %v1201
      %1203 = vst [vmem:[%s1093 + $0xb4] sm:$0xf] %v1202
      %1204 = vst [vmem:[%s1093 + $0xb8] sm:$0xf] %v1043
      %v1205 = vld [vmem:[%s1093 + $0xbc] sm:$0x1]
      %v1206 = vsel %vm580, %v1044, %v1205
      %1207 = vst [vmem:[%s1093 + $0xbc] sm:$0x1] %v1206
      %v1208 = vld [vmem:[#allocation2] sm:$0xf]
      %v1209 = vld [vmem:[#allocation2 + $0x4] sm:$0xf]
      %v1210 = vld [vmem:[#allocation2 + $0x8] sm:$0x1]
      %v1211 = vld [vmem:[#allocation2 + $0xc] sm:$0xf]
      %v1212 = vld [vmem:[#allocation2 + $0x10] sm:$0xf]
      %v1213 = vld [vmem:[#allocation2 + $0x14] sm:$0x1]
      %v1214 = vld [vmem:[#allocation2 + $0x18] sm:$0xf]
      %v1215 = vld [vmem:[#allocation2 + $0x1c] sm:$0xf]
      %v1216 = vld [vmem:[#allocation2 + $0x20] sm:$0x1]
      %v1217 = vld [vmem:[#allocation2 + $0x24] sm:$0xf]
      %v1218 = vld [vmem:[#allocation2 + $0x28] sm:$0xf]
      %v1219 = vld [vmem:[#allocation2 + $0x2c] sm:$0x1]
      %v1220 = vld [vmem:[#allocation2 + $0x30] sm:$0xf]
      %v1221 = vld [vmem:[#allocation2 + $0x34] sm:$0xf]
      %v1222 = vld [vmem:[#allocation2 + $0x38] sm:$0x1]
      %v1223 = vld [vmem:[#allocation2 + $0x3c] sm:$0xf]
      %v1224 = vld [vmem:[#allocation2 + $0x40] sm:$0xf]
      %v1225 = vld [vmem:[#allocation2 + $0x44] sm:$0x1]
      %v1226 = vld [vmem:[#allocation2 + $0x48] sm:$0xf]
      %v1227 = vld [vmem:[#allocation2 + $0x4c] sm:$0xf]
      %v1228 = vld [vmem:[#allocation2 + $0x50] sm:$0x1]
      %v1229 = vld [vmem:[#allocation2 + $0x54] sm:$0xf]
      %v1230 = vld [vmem:[#allocation2 + $0x58] sm:$0xf]
      %v1231 = vld [vmem:[#allocation2 + $0x5c] sm:$0x1]
      %v1232 = vld [vmem:[#allocation2 + $0x60] sm:$0xf]
      %v1233 = vld [vmem:[#allocation2 + $0x64] sm:$0xf]
      %v1234 = vld [vmem:[#allocation2 + $0x68] sm:$0x1]
      %v1235 = vld [vmem:[#allocation2 + $0x6c] sm:$0xf]
      %v1236 = vld [vmem:[#allocation2 + $0x70] sm:$0xf]
      %v1237 = vld [vmem:[#allocation2 + $0x74] sm:$0x1]
      %v1238 = vld [vmem:[#allocation2 + $0x78] sm:$0xf]
      %v1239 = vld [vmem:[#allocation2 + $0x7c] sm:$0xf]
      %v1240 = vld [vmem:[#allocation2 + $0x80] sm:$0x1]
      %v1241 = vld [vmem:[#allocation2 + $0x84] sm:$0xf]
      %v1242 = vld [vmem:[#allocation2 + $0x88] sm:$0xf]
      %v1243 = vld [vmem:[#allocation2 + $0x8c] sm:$0x1]
      %v1244 = vld [vmem:[#allocation2 + $0x90] sm:$0xf]
      %v1245 = vld [vmem:[#allocation2 + $0x94] sm:$0xf]
      %v1246 = vld [vmem:[#allocation2 + $0x98] sm:$0x1]
      %v1247 = vld [vmem:[#allocation2 + $0x9c] sm:$0xf]
      %v1248 = vld [vmem:[#allocation2 + $0xa0] sm:$0xf]
      %v1249 = vld [vmem:[#allocation2 + $0xa4] sm:$0x1]
      %v1250 = vld [vmem:[#allocation2 + $0xa8] sm:$0xf]
      %v1251 = vld [vmem:[#allocation2 + $0xac] sm:$0xf]
      %v1252 = vld [vmem:[#allocation2 + $0xb0] sm:$0x1]
      %v1253 = vld [vmem:[#allocation2 + $0xb4] sm:$0xf]
      %v1254 = vld [vmem:[#allocation2 + $0xb8] sm:$0xf]
      %v1255 = vld [vmem:[#allocation2 + $0xbc] sm:$0x1]
      %v1256 = vld [vmem:[#allocation2 + $0xc0] sm:$0xf]
      %v1257 = vld [vmem:[#allocation2 + $0xc4] sm:$0xf]
      %v1258 = vld [vmem:[#allocation2 + $0xc8] sm:$0x1]
      %v1259 = vld [vmem:[#allocation2 + $0xcc] sm:$0xf]
      %v1260 = vld [vmem:[#allocation2 + $0xd0] sm:$0xf]
      %v1261 = vld [vmem:[#allocation2 + $0xd4] sm:$0x1]
      %v1294 = vunpack.c.l.b16 %v1208
      %v1295 = vunpack.c.l.b16 %v1209
      %v1296 = vunpack.c.l.b16 %v1211
      %v1297 = vunpack.c.l.b16 %v1212
      %v1298 = vunpack.c.l.b16 %v1214
      %v1299 = vunpack.c.l.b16 %v1215
      %v1300 = vunpack.c.l.b16 %v1217
      %v1301 = vunpack.c.l.b16 %v1218
      %v1302 = vunpack.c.l.b16 %v1220
      %v1303 = vunpack.c.l.b16 %v1221
      %v1304 = vunpack.c.l.b16 %v1223
      %v1305 = vunpack.c.l.b16 %v1224
      %v1306 = vunpack.c.l.b16 %v1226
      %v1307 = vunpack.c.l.b16 %v1227
      %v1308 = vunpack.c.l.b16 %v1229
      %v1309 = vunpack.c.l.b16 %v1230
      %v1310 = vunpack.c.l.b16 %v1232
      %v1311 = vunpack.c.l.b16 %v1233
      %v1312 = vunpack.c.l.b16 %v1235
      %v1313 = vunpack.c.l.b16 %v1236
      %v1314 = vunpack.c.l.b16 %v1238
      %v1315 = vunpack.c.l.b16 %v1239
      %v1316 = vunpack.c.l.b16 %v1241
      %v1317 = vunpack.c.l.b16 %v1242
      %v1318 = vunpack.c.l.b16 %v1244
      %v1319 = vunpack.c.l.b16 %v1245
      %v1320 = vunpack.c.l.b16 %v1247
      %v1321 = vunpack.c.l.b16 %v1248
      %v1322 = vunpack.c.l.b16 %v1250
      %v1323 = vunpack.c.l.b16 %v1251
      %v1324 = vunpack.c.l.b16 %v1253
      %v1325 = vunpack.c.l.b16 %v1254
      %v1326 = vpack.c.b16 %v1295, %v1294
      %v1327 = vpack.c.b16 %v1297, %v1296
      %v1328 = vpack.c.b16 %v1299, %v1298
      %v1329 = vpack.c.b16 %v1301, %v1300
      %v1330 = vpack.c.b16 %v1303, %v1302
      %v1331 = vpack.c.b16 %v1305, %v1304
      %v1332 = vpack.c.b16 %v1307, %v1306
      %v1333 = vpack.c.b16 %v1309, %v1308
      %v1334 = vpack.c.b16 %v1311, %v1310
      %v1335 = vpack.c.b16 %v1313, %v1312
      %v1336 = vpack.c.b16 %v1315, %v1314
      %v1337 = vpack.c.b16 %v1317, %v1316
      %v1338 = vpack.c.b16 %v1319, %v1318
      %v1339 = vpack.c.b16 %v1321, %v1320
      %v1340 = vpack.c.b16 %v1323, %v1322
      %v1341 = vpack.c.b16 %v1325, %v1324
      %v1374 = vunpack.c.l.b16 %v1210
      %v1375 = vunpack.c.l.b16 %v1213
      %v1376 = vunpack.c.l.b16 %v1216
      %v1377 = vunpack.c.l.b16 %v1219
      %v1378 = vunpack.c.l.b16 %v1222
      %v1379 = vunpack.c.l.b16 %v1225
      %v1380 = vunpack.c.l.b16 %v1228
      %v1381 = vunpack.c.l.b16 %v1231
      %v1382 = vunpack.c.l.b16 %v1234
      %v1383 = vunpack.c.l.b16 %v1237
      %v1384 = vunpack.c.l.b16 %v1240
      %v1385 = vunpack.c.l.b16 %v1243
      %v1386 = vunpack.c.l.b16 %v1246
      %v1387 = vunpack.c.l.b16 %v1249
      %v1388 = vunpack.c.l.b16 %v1252
      %v1389 = vunpack.c.l.b16 %v1255
      %v1390 = vpack.c.b16 %v1374, %v1374
      %v1391 = vpack.c.b16 %v1375, %v1375
      %v1392 = vpack.c.b16 %v1376, %v1376
      %v1393 = vpack.c.b16 %v1377, %v1377
      %v1394 = vpack.c.b16 %v1378, %v1378
      %v1395 = vpack.c.b16 %v1379, %v1379
      %v1396 = vpack.c.b16 %v1380, %v1380
      %v1397 = vpack.c.b16 %v1381, %v1381
      %v1398 = vpack.c.b16 %v1382, %v1382
      %v1399 = vpack.c.b16 %v1383, %v1383
      %v1400 = vpack.c.b16 %v1384, %v1384
      %v1401 = vpack.c.b16 %v1385, %v1385
      %v1402 = vpack.c.b16 %v1386, %v1386
      %v1403 = vpack.c.b16 %v1387, %v1387
      %v1404 = vpack.c.b16 %v1388, %v1388
      %v1405 = vpack.c.b16 %v1389, %v1389
      %vm1406 = vsmask.f32 7424
      %v1408 = vshrl.u32 %v1326, 16
      %v1410 = vshll.u32 %v1326, 16
      %v1412 = vrot.slane %v1410, 1
      %v1413 = vor.u32 %v1408, %v1412
      %v1415 = vshll.u32 %v1390, 16
      %v1417 = vrot.slane %v1415, 1
      %v1418 = vsel %vm1406, %v1413, %v1417
      %v1420 = vshrl.u32 %v1327, 16
      %v1422 = vshll.u32 %v1327, 16
      %v1424 = vrot.slane %v1422, 1
      %v1425 = vor.u32 %v1420, %v1424
      %v1427 = vshll.u32 %v1391, 16
      %v1429 = vrot.slane %v1427, 1
      %v1430 = vsel %vm1406, %v1425, %v1429
      %v1432 = vshrl.u32 %v1328, 16
      %v1434 = vshll.u32 %v1328, 16
      %v1436 = vrot.slane %v1434, 1
      %v1437 = vor.u32 %v1432, %v1436
      %v1439 = vshll.u32 %v1392, 16
      %v1441 = vrot.slane %v1439, 1
      %v1442 = vsel %vm1406, %v1437, %v1441
      %v1444 = vshrl.u32 %v1329, 16
      %v1446 = vshll.u32 %v1329, 16
      %v1448 = vrot.slane %v1446, 1
      %v1449 = vor.u32 %v1444, %v1448
      %v1451 = vshll.u32 %v1393, 16
      %v1453 = vrot.slane %v1451, 1
      %v1454 = vsel %vm1406, %v1449, %v1453
      %v1456 = vshrl.u32 %v1330, 16
      %v1458 = vshll.u32 %v1330, 16
      %v1460 = vrot.slane %v1458, 1
      %v1461 = vor.u32 %v1456, %v1460
      %v1463 = vshll.u32 %v1394, 16
      %v1465 = vrot.slane %v1463, 1
      %v1466 = vsel %vm1406, %v1461, %v1465
      %v1468 = vshrl.u32 %v1331, 16
      %v1470 = vshll.u32 %v1331, 16
      %v1472 = vrot.slane %v1470, 1
      %v1473 = vor.u32 %v1468, %v1472
      %v1475 = vshll.u32 %v1395, 16
      %v1477 = vrot.slane %v1475, 1
      %v1478 = vsel %vm1406, %v1473, %v1477
      %v1480 = vshrl.u32 %v1332, 16
      %v1482 = vshll.u32 %v1332, 16
      %v1484 = vrot.slane %v1482, 1
      %v1485 = vor.u32 %v1480, %v1484
      %v1487 = vshll.u32 %v1396, 16
      %v1489 = vrot.slane %v1487, 1
      %v1490 = vsel %vm1406, %v1485, %v1489
      %v1492 = vshrl.u32 %v1333, 16
      %v1494 = vshll.u32 %v1333, 16
      %v1496 = vrot.slane %v1494, 1
      %v1497 = vor.u32 %v1492, %v1496
      %v1499 = vshll.u32 %v1397, 16
      %v1501 = vrot.slane %v1499, 1
      %v1502 = vsel %vm1406, %v1497, %v1501
      %v1504 = vshrl.u32 %v1334, 16
      %v1506 = vshll.u32 %v1334, 16
      %v1508 = vrot.slane %v1506, 1
      %v1509 = vor.u32 %v1504, %v1508
      %v1511 = vshll.u32 %v1398, 16
      %v1513 = vrot.slane %v1511, 1
      %v1514 = vsel %vm1406, %v1509, %v1513
      %v1516 = vshrl.u32 %v1335, 16
      %v1518 = vshll.u32 %v1335, 16
      %v1520 = vrot.slane %v1518, 1
      %v1521 = vor.u32 %v1516, %v1520
      %v1523 = vshll.u32 %v1399, 16
      %v1525 = vrot.slane %v1523, 1
      %v1526 = vsel %vm1406, %v1521, %v1525
      %v1528 = vshrl.u32 %v1336, 16
      %v1530 = vshll.u32 %v1336, 16
      %v1532 = vrot.slane %v1530, 1
      %v1533 = vor.u32 %v1528, %v1532
      %v1535 = vshll.u32 %v1400, 16
      %v1537 = vrot.slane %v1535, 1
      %v1538 = vsel %vm1406, %v1533, %v1537
      %v1540 = vshrl.u32 %v1337, 16
      %v1542 = vshll.u32 %v1337, 16
      %v1544 = vrot.slane %v1542, 1
      %v1545 = vor.u32 %v1540, %v1544
      %v1547 = vshll.u32 %v1401, 16
      %v1549 = vrot.slane %v1547, 1
      %v1550 = vsel %vm1406, %v1545, %v1549
      %v1552 = vshrl.u32 %v1338, 16
      %v1554 = vshll.u32 %v1338, 16
      %v1556 = vrot.slane %v1554, 1
      %v1557 = vor.u32 %v1552, %v1556
      %v1559 = vshll.u32 %v1402, 16
      %v1561 = vrot.slane %v1559, 1
      %v1562 = vsel %vm1406, %v1557, %v1561
      %v1564 = vshrl.u32 %v1339, 16
      %v1566 = vshll.u32 %v1339, 16
      %v1568 = vrot.slane %v1566, 1
      %v1569 = vor.u32 %v1564, %v1568
      %v1571 = vshll.u32 %v1403, 16
      %v1573 = vrot.slane %v1571, 1
      %v1574 = vsel %vm1406, %v1569, %v1573
      %v1576 = vshrl.u32 %v1340, 16
      %v1578 = vshll.u32 %v1340, 16
      %v1580 = vrot.slane %v1578, 1
      %v1581 = vor.u32 %v1576, %v1580
      %v1583 = vshll.u32 %v1404, 16
      %v1585 = vrot.slane %v1583, 1
      %v1586 = vsel %vm1406, %v1581, %v1585
      %v1588 = vshrl.u32 %v1341, 16
      %v1590 = vshll.u32 %v1341, 16
      %v1592 = vrot.slane %v1590, 1
      %v1593 = vor.u32 %v1588, %v1592
      %v1595 = vshll.u32 %v1405, 16
      %v1597 = vrot.slane %v1595, 1
      %v1598 = vsel %vm1406, %v1593, %v1597
      %vm1615 = vcmask 1046528
      %v1616 = vrot.slane %v1326, 1
      %v1617 = vrot.slane %v1390, 1
      %v1618 = vsel %vm1615, %v1616, %v1617
      %v1619 = vrot.slane %v1327, 1
      %v1620 = vrot.slane %v1391, 1
      %v1621 = vsel %vm1615, %v1619, %v1620
      %v1622 = vrot.slane %v1328, 1
      %v1623 = vrot.slane %v1392, 1
      %v1624 = vsel %vm1615, %v1622, %v1623
      %v1625 = vrot.slane %v1329, 1
      %v1626 = vrot.slane %v1393, 1
      %v1627 = vsel %vm1615, %v1625, %v1626
      %v1628 = vrot.slane %v1330, 1
      %v1629 = vrot.slane %v1394, 1
      %v1630 = vsel %vm1615, %v1628, %v1629
      %v1631 = vrot.slane %v1331, 1
      %v1632 = vrot.slane %v1395, 1
      %v1633 = vsel %vm1615, %v1631, %v1632
      %v1634 = vrot.slane %v1332, 1
      %v1635 = vrot.slane %v1396, 1
      %v1636 = vsel %vm1615, %v1634, %v1635
      %v1637 = vrot.slane %v1333, 1
      %v1638 = vrot.slane %v1397, 1
      %v1639 = vsel %vm1615, %v1637, %v1638
      %v1640 = vrot.slane %v1334, 1
      %v1641 = vrot.slane %v1398, 1
      %v1642 = vsel %vm1615, %v1640, %v1641
      %v1643 = vrot.slane %v1335, 1
      %v1644 = vrot.slane %v1399, 1
      %v1645 = vsel %vm1615, %v1643, %v1644
      %v1646 = vrot.slane %v1336, 1
      %v1647 = vrot.slane %v1400, 1
      %v1648 = vsel %vm1615, %v1646, %v1647
      %v1649 = vrot.slane %v1337, 1
      %v1650 = vrot.slane %v1401, 1
      %v1651 = vsel %vm1615, %v1649, %v1650
      %v1652 = vrot.slane %v1338, 1
      %v1653 = vrot.slane %v1402, 1
      %v1654 = vsel %vm1615, %v1652, %v1653
      %v1655 = vrot.slane %v1339, 1
      %v1656 = vrot.slane %v1403, 1
      %v1657 = vsel %vm1615, %v1655, %v1656
      %v1658 = vrot.slane %v1340, 1
      %v1659 = vrot.slane %v1404, 1
      %v1660 = vsel %vm1615, %v1658, %v1659
      %v1661 = vrot.slane %v1341, 1
      %v1662 = vrot.slane %v1405, 1
      %v1663 = vsel %vm1615, %v1661, %v1662
      %v1682 = vunpack.c.l.b16 %v1256
      %v1683 = vunpack.c.l.b16 %v1257
      %v1684 = vpack.c.b16 %v1683, %v1682
      %v1687 = vunpack.c.l.b16 %v1258
      %v1688 = vpack.c.b16 %v1687, %v1687
      %v1690 = vshrl.u32 %v1684, 16
      %v1692 = vshll.u32 %v1684, 16
      %v1694 = vrot.slane %v1692, 1
      %v1695 = vor.u32 %v1690, %v1694
      %v1697 = vshll.u32 %v1688, 16
      %v1699 = vrot.slane %v1697, 1
      %v1700 = vsel %vm1406, %v1695, %v1699
      %v1702 = vrot.slane %v1684, 1
      %v1703 = vrot.slane %v1688, 1
      %v1704 = vsel %vm1615, %v1702, %v1703
      %v1708 = vunpack.c.l.b16 %v1259
      %v1709 = vunpack.c.l.b16 %v1260
      %v1710 = vpack.c.b16 %v1709, %v1708
      %v1713 = vunpack.c.l.b16 %v1261
      %v1714 = vpack.c.b16 %v1713, %v1713
      %v1716 = vshrl.u32 %v1710, 16
      %v1718 = vshll.u32 %v1710, 16
      %v1720 = vrot.slane %v1718, 1
      %v1721 = vor.u32 %v1716, %v1720
      %v1723 = vshll.u32 %v1714, 16
      %v1725 = vrot.slane %v1723, 1
      %v1726 = vsel %vm1406, %v1721, %v1725
      %v1728 = vrot.slane %v1710, 1
      %v1729 = vrot.slane %v1714, 1
      %v1730 = vsel %vm1615, %v1728, %v1729
      %v1876 = vunpack.c.l.b16 %v427
      %v1877 = vunpack.c.l.b16 %v428
      %v1878 = vunpack.c.l.b16 %v429
      %v1879 = vunpack.c.l.b16 %v430
      %v1880 = vunpack.c.l.b16 %v431
      %v1881 = vunpack.c.l.b16 %v432
      %v1882 = vunpack.c.l.b16 %v433
      %v1883 = vunpack.c.l.b16 %v434
      %v1884 = vunpack.c.l.b16 %v435
      %v1885 = vunpack.c.l.b16 %v436
      %v1886 = vunpack.c.l.b16 %v437
      %v1887 = vunpack.c.l.b16 %v438
      %v1888 = vunpack.c.l.b16 %v439
      %v1889 = vunpack.c.l.b16 %v440
      %v1890 = vunpack.c.l.b16 %v441
      %v1891 = vunpack.c.l.b16 %v442
      %v1892 = vunpack.c.l.b16 %v443
      %v1893 = vunpack.c.l.b16 %v444
      %v1894 = vunpack.c.l.b16 %v445
      %v1895 = vunpack.c.l.b16 %v446
      %v1896 = vunpack.c.l.b16 %v447
      %v1897 = vunpack.c.l.b16 %v448
      %v1898 = vunpack.c.l.b16 %v449
      %v1899 = vunpack.c.l.b16 %v450
      %v1900 = vunpack.c.l.b16 %v451
      %v1901 = vunpack.c.l.b16 %v452
      %v1902 = vunpack.c.l.b16 %v453
      %v1903 = vunpack.c.l.b16 %v454
      %v1904 = vunpack.c.l.b16 %v455
      %v1905 = vunpack.c.l.b16 %v456
      %v1906 = vunpack.c.l.b16 %v457
      %v1907 = vunpack.c.l.b16 %v458
      %v1908 = vunpack.c.l.b16 %v459
      %v1909 = vunpack.c.l.b16 %v460
      %v1910 = vunpack.c.l.b16 %v461
      %v1911 = vunpack.c.l.b16 %v462
      %v1912 = vunpack.c.l.b16 %v463
      %v1913 = vunpack.c.l.b16 %v464
      %v1914 = vunpack.c.l.b16 %v465
      %v1915 = vunpack.c.l.b16 %v466
      %v1916 = vunpack.c.l.b16 %v467
      %v1917 = vunpack.c.l.b16 %v468
      %v1918 = vunpack.c.l.b16 %v469
      %v1919 = vunpack.c.l.b16 %v470
      %v1920 = vunpack.c.l.b16 %v471
      %v1921 = vunpack.c.l.b16 %v472
      %v1922 = vunpack.c.l.b16 %v473
      %v1923 = vunpack.c.l.b16 %v474
      %v1924 = vunpack.c.l.b16 %v475
      %v1925 = vunpack.c.l.b16 %v476
      %v1926 = vunpack.c.l.b16 %v477
      %v1927 = vunpack.c.l.b16 %v478
      %v1928 = vunpack.c.l.b16 %v479
      %v1929 = vunpack.c.l.b16 %v480
      %v1930 = vunpack.c.l.b16 %v481
      %v1931 = vunpack.c.l.b16 %v482
      %v1932 = vunpack.c.l.b16 %v483
      %v1933 = vunpack.c.l.b16 %v484
      %v1934 = vunpack.c.l.b16 %v485
      %v1935 = vunpack.c.l.b16 %v486
      %v1936 = vunpack.c.l.b16 %v487
      %v1937 = vunpack.c.l.b16 %v488
      %v1938 = vunpack.c.l.b16 %v489
      %v1939 = vunpack.c.l.b16 %v490
      %v1940 = vunpack.c.l.b16 %v491
      %v1941 = vunpack.c.l.b16 %v492
      %v1942 = vunpack.c.l.b16 %v493
      %v1943 = vunpack.c.l.b16 %v494
      %v1944 = vunpack.c.l.b16 %v495
      %v1945 = vunpack.c.l.b16 %v496
      %v1946 = vunpack.c.l.b16 %v497
      %v1947 = vunpack.c.l.b16 %v498
      %v1948 = vunpack.c.l.b16 %v499
      %v1949 = vunpack.c.l.b16 %v500
      %v1950 = vunpack.c.l.b16 %v501
      %v1951 = vunpack.c.l.b16 %v502
      %v1952 = vunpack.c.l.b16 %v503
      %v1953 = vunpack.c.l.b16 %v504
      %v1954 = vunpack.c.l.b16 %v505
      %v1955 = vunpack.c.l.b16 %v506
      %v1956 = vunpack.c.l.b16 %v507
      %v1957 = vunpack.c.l.b16 %v508
      %v1958 = vunpack.c.l.b16 %v509
      %v1959 = vunpack.c.l.b16 %v510
      %v1960 = vunpack.c.l.b16 %v511
      %v1961 = vunpack.c.l.b16 %v512
      %v1962 = vunpack.c.l.b16 %v513
      %v1963 = vunpack.c.l.b16 %v514
      %v1964 = vunpack.c.l.b16 %v515
      %v1965 = vunpack.c.l.b16 %v516
      %v1966 = vunpack.c.l.b16 %v517
      %v1967 = vunpack.c.l.b16 %v518
      %v1968 = vunpack.c.l.b16 %v519
      %v1969 = vunpack.c.l.b16 %v520
      %v1970 = vunpack.c.l.b16 %v521
      %v1971 = vunpack.c.l.b16 %v522
      %v1972 = vunpack.c.l.b16 %v523
      %v1973 = vunpack.c.l.b16 %v524
      %v1974 = vunpack.c.l.b16 %v525
      %v1975 = vunpack.c.l.b16 %v526
      %v1976 = vunpack.c.l.b16 %v527
      %v1977 = vunpack.c.l.b16 %v528
      %v1978 = vunpack.c.l.b16 %v529
      %v1979 = vunpack.c.l.b16 %v530
      %v1980 = vunpack.c.l.b16 %v531
      %v1981 = vunpack.c.l.b16 %v532
      %v1982 = vunpack.c.l.b16 %v533
      %v1983 = vunpack.c.l.b16 %v534
      %v1984 = vunpack.c.l.b16 %v535
      %v1985 = vunpack.c.l.b16 %v536
      %v1986 = vunpack.c.l.b16 %v537
      %v1987 = vunpack.c.l.b16 %v538
      %v1988 = vunpack.c.l.b16 %v539
      %v1989 = vunpack.c.l.b16 %v540
      %v1990 = vunpack.c.l.b16 %v541
      %v1991 = vunpack.c.l.b16 %v542
      %v1992 = vunpack.c.l.b16 %v543
      %v1993 = vunpack.c.l.b16 %v544
      %v1994 = vunpack.c.l.b16 %v545
      %v1995 = vunpack.c.l.b16 %v546
      %v1996 = vunpack.c.l.b16 %v547
      %v1997 = vunpack.c.l.b16 %v548
      %v1998 = vunpack.c.l.b16 %v549
      %v1999 = vunpack.c.l.b16 %v550
      %v2000 = vunpack.c.l.b16 %v551
      %v2001 = vunpack.c.l.b16 %v552
      %v2002 = vunpack.c.l.b16 %v553
      %v2003 = vunpack.c.l.b16 %v554
      %v2004 = vunpack.c.l.b16 %v555
      %v2005 = vunpack.c.l.b16 %v556
      %v2006 = vunpack.c.l.b16 %v557
      %v2007 = vunpack.c.l.b16 %v558
      %v2008 = vunpack.c.l.b16 %v559
      %v2009 = vunpack.c.l.b16 %v560
      %v2010 = vunpack.c.l.b16 %v561
      %v2011 = vunpack.c.l.b16 %v562
      %v2012 = vunpack.c.l.b16 %v563
      %v2013 = vunpack.c.l.b16 %v564
      %v2014 = vunpack.c.l.b16 %v565
      %v2015 = vunpack.c.l.b16 %v566
      %v2016 = vunpack.c.l.b16 %v567
      %v2017 = vunpack.c.l.b16 %v568
      %v2018 = vunpack.c.l.b16 %v569
      %v2019 = vunpack.c.l.b16 %v570
      %v2020 = vpack.c.b16 %v1877, %v1876
      %v2021 = vpack.c.b16 %v1879, %v1878
      %v2022 = vpack.c.b16 %v1881, %v1880
      %v2023 = vpack.c.b16 %v1883, %v1882
      %v2024 = vpack.c.b16 %v1885, %v1884
      %v2025 = vpack.c.b16 %v1887, %v1886
      %v2026 = vpack.c.b16 %v1889, %v1888
      %v2027 = vpack.c.b16 %v1891, %v1890
      %v2028 = vpack.c.b16 %v1893, %v1892
      %v2029 = vpack.c.b16 %v1895, %v1894
      %v2030 = vpack.c.b16 %v1897, %v1896
      %v2031 = vpack.c.b16 %v1899, %v1898
      %v2032 = vpack.c.b16 %v1901, %v1900
      %v2033 = vpack.c.b16 %v1903, %v1902
      %v2034 = vpack.c.b16 %v1905, %v1904
      %v2035 = vpack.c.b16 %v1907, %v1906
      %v2036 = vpack.c.b16 %v1909, %v1908
      %v2037 = vpack.c.b16 %v1911, %v1910
      %v2038 = vpack.c.b16 %v1913, %v1912
      %v2039 = vpack.c.b16 %v1915, %v1914
      %v2040 = vpack.c.b16 %v1917, %v1916
      %v2041 = vpack.c.b16 %v1919, %v1918
      %v2042 = vpack.c.b16 %v1921, %v1920
      %v2043 = vpack.c.b16 %v1923, %v1922
      %v2044 = vpack.c.b16 %v1925, %v1924
      %v2045 = vpack.c.b16 %v1927, %v1926
      %v2046 = vpack.c.b16 %v1929, %v1928
      %v2047 = vpack.c.b16 %v1931, %v1930
      %v2048 = vpack.c.b16 %v1933, %v1932
      %v2049 = vpack.c.b16 %v1935, %v1934
      %v2050 = vpack.c.b16 %v1937, %v1936
      %v2051 = vpack.c.b16 %v1939, %v1938
      %v2052 = vpack.c.b16 %v1941, %v1940
      %v2053 = vpack.c.b16 %v1943, %v1942
      %v2054 = vpack.c.b16 %v1945, %v1944
      %v2055 = vpack.c.b16 %v1947, %v1946
      %v2056 = vpack.c.b16 %v1949, %v1948
      %v2057 = vpack.c.b16 %v1951, %v1950
      %v2058 = vpack.c.b16 %v1953, %v1952
      %v2059 = vpack.c.b16 %v1955, %v1954
      %v2060 = vpack.c.b16 %v1957, %v1956
      %v2061 = vpack.c.b16 %v1959, %v1958
      %v2062 = vpack.c.b16 %v1961, %v1960
      %v2063 = vpack.c.b16 %v1963, %v1962
      %v2064 = vpack.c.b16 %v1965, %v1964
      %v2065 = vpack.c.b16 %v1967, %v1966
      %v2066 = vpack.c.b16 %v1969, %v1968
      %v2067 = vpack.c.b16 %v1971, %v1970
      %v2068 = vpack.c.b16 %v1973, %v1972
      %v2069 = vpack.c.b16 %v1975, %v1974
      %v2070 = vpack.c.b16 %v1977, %v1976
      %v2071 = vpack.c.b16 %v1979, %v1978
      %v2072 = vpack.c.b16 %v1981, %v1980
      %v2073 = vpack.c.b16 %v1983, %v1982
      %v2074 = vpack.c.b16 %v1985, %v1984
      %v2075 = vpack.c.b16 %v1987, %v1986
      %v2076 = vpack.c.b16 %v1989, %v1988
      %v2077 = vpack.c.b16 %v1991, %v1990
      %v2078 = vpack.c.b16 %v1993, %v1992
      %v2079 = vpack.c.b16 %v1995, %v1994
      %v2080 = vpack.c.b16 %v1997, %v1996
      %v2081 = vpack.c.b16 %v1999, %v1998
      %v2082 = vpack.c.b16 %v2001, %v2000
      %v2083 = vpack.c.b16 %v2003, %v2002
      %v2084 = vpack.c.b16 %v2005, %v2004
      %v2085 = vpack.c.b16 %v2007, %v2006
      %v2086 = vpack.c.b16 %v2009, %v2008
      %v2087 = vpack.c.b16 %v2011, %v2010
      %v2088 = vpack.c.b16 %v2013, %v2012
      %v2089 = vpack.c.b16 %v2015, %v2014
      %v2090 = vpack.c.b16 %v2017, %v2016
      %v2091 = vpack.c.b16 %v2019, %v2018
      %2164 = vmatprep.subr.bf16.mxu0 0
      %2165 = vmatpush1.bf16.msra.mxu0 %v2020
      %2166 = vmatprep.subr.bf16.mxu0 0
      %2167 = vmatpush1.bf16.msra.mxu0 %v2021
      %2168 = vmatprep.subr.bf16.mxu0 0
      %2169 = vmatpush1.bf16.msra.mxu0 %v2022
      %2170 = vmatprep.subr.bf16.mxu0 0
      %2171 = vmatpush1.bf16.msra.mxu0 %v2023
      %2172 = vmatprep.subr.bf16.mxu0 0
      %2173 = vmatpush1.bf16.msra.mxu0 %v2024
      %2174 = vmatprep.subr.bf16.mxu0 0
      %2175 = vmatpush1.bf16.msra.mxu0 %v2025
      %2176 = vmatprep.subr.bf16.mxu0 0
      %2177 = vmatpush1.bf16.msra.mxu0 %v2026
      %2178 = vmatprep.subr.bf16.mxu0 0
      %2179 = vmatpush1.bf16.msra.mxu0 %v2027
      %2180 = vmatprep.subr.bf16.mxu0 0
      %2181 = vmatpush1.bf16.msra.mxu0 %v2028
      %2182 = vmatprep.subr.bf16.mxu0 0
      %2183 = vmatpush1.bf16.msra.mxu0 %v2029
      %2184 = vmatprep.subr.bf16.mxu0 0
      %2185 = vmatpush1.bf16.msra.mxu0 %v2030
      %2186 = vmatprep.subr.bf16.mxu0 0
      %2187 = vmatpush1.bf16.msra.mxu0 %v2031
      %2188 = vmatprep.subr.bf16.mxu0 0
      %2189 = vmatpush1.bf16.msra.mxu0 %v2032
      %2190 = vmatprep.subr.bf16.mxu0 0
      %2191 = vmatpush1.bf16.msra.mxu0 %v2033
      %2192 = vmatprep.subr.bf16.mxu0 0
      %2193 = vmatpush1.bf16.msra.mxu0 %v2034
      %2194 = vmatprep.subr.bf16.mxu0 0
      %2195 = vmatpush1.bf16.msra.mxu0 %v2035
      %2196 = vmatprep.mubr.bf16.mxu0 %v1418
      %2197 = vmatmul.mubr.bf16.gmra.mrb[0].mxu0 %v1326
      %v2198 = vpop.f32.mrb[0].mxu0
      %v2199 = vadd.f32 0.0, %v2198
      %v2200 = vpop.f32.mrb[0].mxu0
      %v2201 = vpop.f32.mrb[0].mxu0
      %v2202 = vadd.f32 0.0, %v2201
      %v2203 = vpop.f32.mrb[0].mxu0
      %2204 = vmatprep.mubr.bf16.mxu0 %v1430
      %2205 = vmatmul.mubr.bf16.gmra.mrb[0].mxu0 %v1327
      %v2206 = vpop.f32.mrb[0].mxu0
      %v2207 = vadd.f32 0.0, %v2206
      %v2208 = vpop.f32.mrb[0].mxu0
      %v2209 = vpop.f32.mrb[0].mxu0
      %v2210 = vadd.f32 0.0, %v2209
      %v2211 = vpop.f32.mrb[0].mxu0
      %2212 = vmatprep.mubr.bf16.mxu0 %v1442
      %2213 = vmatmul.mubr.bf16.gmra.mrb[0].mxu0 %v1328
      %v2214 = vpop.f32.mrb[0].mxu0
      %v2215 = vadd.f32 0.0, %v2214
      %v2216 = vpop.f32.mrb[0].mxu0
      %v2217 = vpop.f32.mrb[0].mxu0
      %v2218 = vadd.f32 0.0, %v2217
      %v2219 = vpop.f32.mrb[0].mxu0
      %2220 = vmatprep.mubr.bf16.mxu0 %v1454
      %2221 = vmatmul.mubr.bf16.gmra.mrb[0].mxu0 %v1329
      %v2222 = vpop.f32.mrb[0].mxu0
      %v2223 = vadd.f32 0.0, %v2222
      %v2224 = vpop.f32.mrb[0].mxu0
      %v2225 = vpop.f32.mrb[0].mxu0
      %v2226 = vadd.f32 0.0, %v2225
      %v2227 = vpop.f32.mrb[0].mxu0
      %2228 = vmatprep.mubr.bf16.mxu0 %v1466
      %2229 = vmatmul.mubr.bf16.gmra.mrb[0].mxu0 %v1330
      %v2230 = vpop.f32.mrb[0].mxu0
      %v2231 = vadd.f32 0.0, %v2230
      %v2232 = vpop.f32.mrb[0].mxu0
      %v2233 = vpop.f32.mrb[0].mxu0
      %v2234 = vadd.f32 0.0, %v2233
      %v2235 = vpop.f32.mrb[0].mxu0
      %2236 = vmatprep.mubr.bf16.mxu0 %v1478
      %2237 = vmatmul.mubr.bf16.gmra.mrb[0].mxu0 %v1331
      %v2238 = vpop.f32.mrb[0].mxu0
      %v2239 = vadd.f32 0.0, %v2238
      %v2240 = vpop.f32.mrb[0].mxu0
      %v2241 = vpop.f32.mrb[0].mxu0
      %v2242 = vadd.f32 0.0, %v2241
      %v2243 = vpop.f32.mrb[0].mxu0
      %2244 = vmatprep.mubr.bf16.mxu0 %v1490
      %2245 = vmatmul.mubr.bf16.gmra.mrb[0].mxu0 %v1332
      %v2246 = vpop.f32.mrb[0].mxu0
      %v2247 = vadd.f32 0.0, %v2246
      %v2248 = vpop.f32.mrb[0].mxu0
      %v2249 = vpop.f32.mrb[0].mxu0
      %v2250 = vadd.f32 0.0, %v2249
      %v2251 = vpop.f32.mrb[0].mxu0
      %2252 = vmatprep.mubr.bf16.mxu0 %v1502
      %2253 = vmatmul.mubr.bf16.gmra.mrb[0].mxu0 %v1333
      %v2254 = vpop.f32.mrb[0].mxu0
      %v2255 = vadd.f32 0.0, %v2254
      %v2256 = vpop.f32.mrb[0].mxu0
      %v2257 = vpop.f32.mrb[0].mxu0
      %v2258 = vadd.f32 0.0, %v2257
      %v2259 = vpop.f32.mrb[0].mxu0
      %2260 = vmatprep.mubr.bf16.mxu0 %v1514
      %2261 = vmatmul.mubr.bf16.gmra.mrb[0].mxu0 %v1334
      %v2262 = vpop.f32.mrb[0].mxu0
      %v2263 = vadd.f32 0.0, %v2262
      %v2264 = vpop.f32.mrb[0].mxu0
      %v2265 = vpop.f32.mrb[0].mxu0
      %v2266 = vadd.f32 0.0, %v2265
      %v2267 = vpop.f32.mrb[0].mxu0
      %2268 = vmatprep.mubr.bf16.mxu0 %v1526
      %2269 = vmatmul.mubr.bf16.gmra.mrb[0].mxu0 %v1335
      %v2270 = vpop.f32.mrb[0].mxu0
      %v2271 = vadd.f32 0.0, %v2270
      %v2272 = vpop.f32.mrb[0].mxu0
      %v2273 = vpop.f32.mrb[0].mxu0
      %v2274 = vadd.f32 0.0, %v2273
      %v2275 = vpop.f32.mrb[0].mxu0
      %2276 = vmatprep.mubr.bf16.mxu0 %v1538
      %2277 = vmatmul.mubr.bf16.gmra.mrb[0].mxu0 %v1336
      %v2278 = vpop.f32.mrb[0].mxu0
      %v2279 = vadd.f32 0.0, %v2278
      %v2280 = vpop.f32.mrb[0].mxu0
      %v2281 = vpop.f32.mrb[0].mxu0
      %v2282 = vadd.f32 0.0, %v2281
      %v2283 = vpop.f32.mrb[0].mxu0
      %2284 = vmatprep.mubr.bf16.mxu0 %v1550
      %2285 = vmatmul.mubr.bf16.gmra.mrb[0].mxu0 %v1337
      %v2286 = vpop.f32.mrb[0].mxu0
      %v2287 = vadd.f32 0.0, %v2286
      %v2288 = vpop.f32.mrb[0].mxu0
      %v2289 = vpop.f32.mrb[0].mxu0
      %v2290 = vadd.f32 0.0, %v2289
      %v2291 = vpop.f32.mrb[0].mxu0
      %2292 = vmatprep.mubr.bf16.mxu0 %v1562
      %2293 = vmatmul.mubr.bf16.gmra.mrb[0].mxu0 %v1338
      %v2294 = vpop.f32.mrb[0].mxu0
      %v2295 = vadd.f32 0.0, %v2294
      %v2296 = vpop.f32.mrb[0].mxu0
      %v2297 = vpop.f32.mrb[0].mxu0
      %v2298 = vadd.f32 0.0, %v2297
      %v2299 = vpop.f32.mrb[0].mxu0
      %2300 = vmatprep.mubr.bf16.mxu0 %v1574
      %2301 = vmatmul.mubr.bf16.gmra.mrb[0].mxu0 %v1339
      %v2302 = vpop.f32.mrb[0].mxu0
      %v2303 = vadd.f32 0.0, %v2302
      %v2304 = vpop.f32.mrb[0].mxu0
      %v2305 = vpop.f32.mrb[0].mxu0
      %v2306 = vadd.f32 0.0, %v2305
      %v2307 = vpop.f32.mrb[0].mxu0
      %2308 = vmatprep.mubr.bf16.mxu0 %v1586
      %2309 = vmatmul.mubr.bf16.gmra.mrb[0].mxu0 %v1340
      %v2310 = vpop.f32.mrb[0].mxu0
      %v2311 = vadd.f32 0.0, %v2310
      %v2312 = vpop.f32.mrb[0].mxu0
      %v2313 = vpop.f32.mrb[0].mxu0
      %v2314 = vadd.f32 0.0, %v2313
      %v2315 = vpop.f32.mrb[0].mxu0
      %2316 = vmatprep.mubr.bf16.mxu0 %v1598
      %2317 = vmatmul.mubr.bf16.gmra.mrb[0].mxu0 %v1341
      %v2318 = vpop.f32.mrb[0].mxu0
      %v2319 = vadd.f32 0.0, %v2318
      %v2320 = vpop.f32.mrb[0].mxu0
      %v2321 = vpop.f32.mrb[0].mxu0
      %v2322 = vadd.f32 0.0, %v2321
      %v2323 = vpop.f32.mrb[0].mxu0
      %2324 = vdwg.mxu0
      %2325 = vmatprep.subr.bf16.mxu0 0
      %2326 = vmatpush1.bf16.msra.mxu0 %v2036
      %2327 = vmatprep.subr.bf16.mxu0 0
      %2328 = vmatpush1.bf16.msra.mxu0 %v2037
      %2329 = vmatprep.subr.bf16.mxu0 0
      %2330 = vmatpush1.bf16.msra.mxu0 %v2038
      %2331 = vmatprep.subr.bf16.mxu0 0
      %2332 = vmatpush1.bf16.msra.mxu0 %v2039
      %2333 = vmatprep.subr.bf16.mxu0 0
      %2334 = vmatpush1.bf16.msra.mxu0 %v2040
      %2335 = vmatprep.subr.bf16.mxu0 0
      %2336 = vmatpush1.bf16.msra.mxu0 %v2041
      %2337 = vmatprep.subr.bf16.mxu0 0
      %2338 = vmatpush1.bf16.msra.mxu0 %v2042
      %2339 = vmatprep.subr.bf16.mxu0 0
      %2340 = vmatpush1.bf16.msra.mxu0 %v2043
      %2341 = vmatprep.subr.bf16.mxu0 0
      %2342 = vmatpush1.bf16.msra.mxu0 %v2044
      %2343 = vmatprep.subr.bf16.mxu0 0
      %2344 = vmatpush1.bf16.msra.mxu0 %v2045
      %2345 = vmatprep.subr.bf16.mxu0 0
      %2346 = vmatpush1.bf16.msra.mxu0 %v2046
      %2347 = vmatprep.subr.bf16.mxu0 0
      %2348 = vmatpush1.bf16.msra.mxu0 %v2047
      %2349 = vmatprep.subr.bf16.mxu0 0
      %2350 = vmatpush1.bf16.msra.mxu0 %v2048
      %2351 = vmatprep.subr.bf16.mxu0 0
      %2352 = vmatpush1.bf16.msra.mxu0 %v2049
      %2353 = vmatprep.subr.bf16.mxu0 0
      %2354 = vmatpush1.bf16.msra.mxu0 %v2050
      %2355 = vmatprep.subr.bf16.mxu0 0
      %2356 = vmatpush1.bf16.msra.mxu0 %v2051
      %2357 = vmatprep.mubr.bf16.mxu0 %v1327
      %2358 = vmatmul.mubr.bf16.gmra.mrb[0].mxu0 %v1618
      %v2359 = vpop.f32.mrb[0].mxu0
      %v2360 = vadd.f32 %v2199, %v2359
      %v2361 = vpop.f32.mrb[0].mxu0
      %v2362 = vpop.f32.mrb[0].mxu0
      %v2363 = vadd.f32 %v2202, %v2362
      %v2364 = vpop.f32.mrb[0].mxu0
      %2365 = vmatprep.mubr.bf16.mxu0 %v1328
      %2366 = vmatmul.mubr.bf16.gmra.mrb[0].mxu0 %v1621
      %v2367 = vpop.f32.mrb[0].mxu0
      %v2368 = vadd.f32 %v2207, %v2367
      %v2369 = vpop.f32.mrb[0].mxu0
      %v2370 = vpop.f32.mrb[0].mxu0
      %v2371 = vadd.f32 %v2210, %v2370
      %v2372 = vpop.f32.mrb[0].mxu0
      %2373 = vmatprep.mubr.bf16.mxu0 %v1329
      %2374 = vmatmul.mubr.bf16.gmra.mrb[0].mxu0 %v1624
      %v2375 = vpop.f32.mrb[0].mxu0
      %v2376 = vadd.f32 %v2215, %v2375
      %v2377 = vpop.f32.mrb[0].mxu0
      %v2378 = vpop.f32.mrb[0].mxu0
      %v2379 = vadd.f32 %v2218, %v2378
      %v2380 = vpop.f32.mrb[0].mxu0
      %2381 = vmatprep.mubr.bf16.mxu0 %v1330
      %2382 = vmatmul.mubr.bf16.gmra.mrb[0].mxu0 %v1627
      %v2383 = vpop.f32.mrb[0].mxu0
      %v2384 = vadd.f32 %v2223, %v2383
      %v2385 = vpop.f32.mrb[0].mxu0
      %v2386 = vpop.f32.mrb[0].mxu0
      %v2387 = vadd.f32 %v2226, %v2386
      %v2388 = vpop.f32.mrb[0].mxu0
      %2389 = vmatprep.mubr.bf16.mxu0 %v1331
      %2390 = vmatmul.mubr.bf16.gmra.mrb[0].mxu0 %v1630
      %v2391 = vpop.f32.mrb[0].mxu0
      %v2392 = vadd.f32 %v2231, %v2391
      %v2393 = vpop.f32.mrb[0].mxu0
      %v2394 = vpop.f32.mrb[0].mxu0
      %v2395 = vadd.f32 %v2234, %v2394
      %v2396 = vpop.f32.mrb[0].mxu0
      %2397 = vmatprep.mubr.bf16.mxu0 %v1332
      %2398 = vmatmul.mubr.bf16.gmra.mrb[0].mxu0 %v1633
      %v2399 = vpop.f32.mrb[0].mxu0
      %v2400 = vadd.f32 %v2239, %v2399
      %v2401 = vpop.f32.mrb[0].mxu0
      %v2402 = vpop.f32.mrb[0].mxu0
      %v2403 = vadd.f32 %v2242, %v2402
      %v2404 = vpop.f32.mrb[0].mxu0
      %2405 = vmatprep.mubr.bf16.mxu0 %v1333
      %2406 = vmatmul.mubr.bf16.gmra.mrb[0].mxu0 %v1636
      %v2407 = vpop.f32.mrb[0].mxu0
      %v2408 = vadd.f32 %v2247, %v2407
      %v2409 = vpop.f32.mrb[0].mxu0
      %v2410 = vpop.f32.mrb[0].mxu0
      %v2411 = vadd.f32 %v2250, %v2410
      %v2412 = vpop.f32.mrb[0].mxu0
      %2413 = vmatprep.mubr.bf16.mxu0 %v1334
      %2414 = vmatmul.mubr.bf16.gmra.mrb[0].mxu0 %v1639
      %v2415 = vpop.f32.mrb[0].mxu0
      %v2416 = vadd.f32 %v2255, %v2415
      %v2417 = vpop.f32.mrb[0].mxu0
      %v2418 = vpop.f32.mrb[0].mxu0
      %v2419 = vadd.f32 %v2258, %v2418
      %v2420 = vpop.f32.mrb[0].mxu0
      %2421 = vmatprep.mubr.bf16.mxu0 %v1335
      %2422 = vmatmul.mubr.bf16.gmra.mrb[0].mxu0 %v1642
      %v2423 = vpop.f32.mrb[0].mxu0
      %v2424 = vadd.f32 %v2263, %v2423
      %v2425 = vpop.f32.mrb[0].mxu0
      %v2426 = vpop.f32.mrb[0].mxu0
      %v2427 = vadd.f32 %v2266, %v2426
      %v2428 = vpop.f32.mrb[0].mxu0
      %2429 = vmatprep.mubr.bf16.mxu0 %v1336
      %2430 = vmatmul.mubr.bf16.gmra.mrb[0].mxu0 %v1645
      %v2431 = vpop.f32.mrb[0].mxu0
      %v2432 = vadd.f32 %v2271, %v2431
      %v2433 = vpop.f32.mrb[0].mxu0
      %v2434 = vpop.f32.mrb[0].mxu0
      %v2435 = vadd.f32 %v2274, %v2434
      %v2436 = vpop.f32.mrb[0].mxu0
      %2437 = vmatprep.mubr.bf16.mxu0 %v1337
      %2438 = vmatmul.mubr.bf16.gmra.mrb[0].mxu0 %v1648
      %v2439 = vpop.f32.mrb[0].mxu0
      %v2440 = vadd.f32 %v2279, %v2439
      %v2441 = vpop.f32.mrb[0].mxu0
      %v2442 = vpop.f32.mrb[0].mxu0
      %v2443 = vadd.f32 %v2282, %v2442
      %v2444 = vpop.f32.mrb[0].mxu0
      %2445 = vmatprep.mubr.bf16.mxu0 %v1338
      %2446 = vmatmul.mubr.bf16.gmra.mrb[0].mxu0 %v1651
      %v2447 = vpop.f32.mrb[0].mxu0
      %v2448 = vadd.f32 %v2287, %v2447
      %v2449 = vpop.f32.mrb[0].mxu0
      %v2450 = vpop.f32.mrb[0].mxu0
      %v2451 = vadd.f32 %v2290, %v2450
      %v2452 = vpop.f32.mrb[0].mxu0
      %2453 = vmatprep.mubr.bf16.mxu0 %v1339
      %2454 = vmatmul.mubr.bf16.gmra.mrb[0].mxu0 %v1654
      %v2455 = vpop.f32.mrb[0].mxu0
      %v2456 = vadd.f32 %v2295, %v2455
      %v2457 = vpop.f32.mrb[0].mxu0
      %v2458 = vpop.f32.mrb[0].mxu0
      %v2459 = vadd.f32 %v2298, %v2458
      %v2460 = vpop.f32.mrb[0].mxu0
      %2461 = vmatprep.mubr.bf16.mxu0 %v1340
      %2462 = vmatmul.mubr.bf16.gmra.mrb[0].mxu0 %v1657
      %v2463 = vpop.f32.mrb[0].mxu0
      %v2464 = vadd.f32 %v2303, %v2463
      %v2465 = vpop.f32.mrb[0].mxu0
      %v2466 = vpop.f32.mrb[0].mxu0
      %v2467 = vadd.f32 %v2306, %v2466
      %v2468 = vpop.f32.mrb[0].mxu0
      %2469 = vmatprep.mubr.bf16.mxu0 %v1341
      %2470 = vmatmul.mubr.bf16.gmra.mrb[0].mxu0 %v1660
      %v2471 = vpop.f32.mrb[0].mxu0
      %v2472 = vadd.f32 %v2311, %v2471
      %v2473 = vpop.f32.mrb[0].mxu0
      %v2474 = vpop.f32.mrb[0].mxu0
      %v2475 = vadd.f32 %v2314, %v2474
      %v2476 = vpop.f32.mrb[0].mxu0
      %2477 = vmatprep.mubr.bf16.mxu0 %v1684
      %2478 = vmatmul.mubr.bf16.gmra.mrb[0].mxu0 %v1663
      %v2479 = vpop.f32.mrb[0].mxu0
      %v2480 = vadd.f32 %v2319, %v2479
      %v2481 = vpop.f32.mrb[0].mxu0
      %v2482 = vpop.f32.mrb[0].mxu0
      %v2483 = vadd.f32 %v2322, %v2482
      %v2484 = vpop.f32.mrb[0].mxu0
      %2485 = vdwg.mxu0
      %2486 = vmatprep.subr.bf16.mxu0 0
      %2487 = vmatpush1.bf16.msra.mxu0 %v2052
      %2488 = vmatprep.subr.bf16.mxu0 0
      %2489 = vmatpush1.bf16.msra.mxu0 %v2053
      %2490 = vmatprep.subr.bf16.mxu0 0
      %2491 = vmatpush1.bf16.msra.mxu0 %v2054
      %2492 = vmatprep.subr.bf16.mxu0 0
      %2493 = vmatpush1.bf16.msra.mxu0 %v2055
      %2494 = vmatprep.subr.bf16.mxu0 0
      %2495 = vmatpush1.bf16.msra.mxu0 %v2056
      %2496 = vmatprep.subr.bf16.mxu0 0
      %2497 = vmatpush1.bf16.msra.mxu0 %v2057
      %2498 = vmatprep.subr.bf16.mxu0 0
      %2499 = vmatpush1.bf16.msra.mxu0 %v2058
      %2500 = vmatprep.subr.bf16.mxu0 0
      %2501 = vmatpush1.bf16.msra.mxu0 %v2059
      %2502 = vmatprep.subr.bf16.mxu0 0
      %2503 = vmatpush1.bf16.msra.mxu0 %v2060
      %2504 = vmatprep.subr.bf16.mxu0 0
      %2505 = vmatpush1.bf16.msra.mxu0 %v2061
      %2506 = vmatprep.subr.bf16.mxu0 0
      %2507 = vmatpush1.bf16.msra.mxu0 %v2062
      %2508 = vmatprep.subr.bf16.mxu0 0
      %2509 = vmatpush1.bf16.msra.mxu0 %v2063
      %2510 = vmatprep.subr.bf16.mxu0 0
      %2511 = vmatpush1.bf16.msra.mxu0 %v2064
      %2512 = vmatprep.subr.bf16.mxu0 0
      %2513 = vmatpush1.bf16.msra.mxu0 %v2065
      %2514 = vmatprep.subr.bf16.mxu0 0
      %2515 = vmatpush1.bf16.msra.mxu0 %v2066
      %2516 = vmatprep.subr.bf16.mxu0 0
      %2517 = vmatpush1.bf16.msra.mxu0 %v2067
      %2518 = vmatprep.mubr.bf16.mxu0 %v1621
      %2519 = vmatmul.mubr.bf16.gmra.mrb[0].mxu0 %v1430
      %v2520 = vpop.f32.mrb[0].mxu0
      %v2521 = vadd.f32 %v2360, %v2520
      %v2522 = vpop.f32.mrb[0].mxu0
      %v2523 = vpop.f32.mrb[0].mxu0
      %v2524 = vadd.f32 %v2363, %v2523
      %v2525 = vpop.f32.mrb[0].mxu0
      %2526 = vmatprep.mubr.bf16.mxu0 %v1624
      %2527 = vmatmul.mubr.bf16.gmra.mrb[0].mxu0 %v1442
      %v2528 = vpop.f32.mrb[0].mxu0
      %v2529 = vadd.f32 %v2368, %v2528
      %v2530 = vpop.f32.mrb[0].mxu0
      %v2531 = vpop.f32.mrb[0].mxu0
      %v2532 = vadd.f32 %v2371, %v2531
      %v2533 = vpop.f32.mrb[0].mxu0
      %2534 = vmatprep.mubr.bf16.mxu0 %v1627
      %2535 = vmatmul.mubr.bf16.gmra.mrb[0].mxu0 %v1454
      %v2536 = vpop.f32.mrb[0].mxu0
      %v2537 = vadd.f32 %v2376, %v2536
      %v2538 = vpop.f32.mrb[0].mxu0
      %v2539 = vpop.f32.mrb[0].mxu0
      %v2540 = vadd.f32 %v2379, %v2539
      %v2541 = vpop.f32.mrb[0].mxu0
      %2542 = vmatprep.mubr.bf16.mxu0 %v1630
      %2543 = vmatmul.mubr.bf16.gmra.mrb[0].mxu0 %v1466
      %v2544 = vpop.f32.mrb[0].mxu0
      %v2545 = vadd.f32 %v2384, %v2544
      %v2546 = vpop.f32.mrb[0].mxu0
      %v2547 = vpop.f32.mrb[0].mxu0
      %v2548 = vadd.f32 %v2387, %v2547
      %v2549 = vpop.f32.mrb[0].mxu0
      %2550 = vmatprep.mubr.bf16.mxu0 %v1633
      %2551 = vmatmul.mubr.bf16.gmra.mrb[0].mxu0 %v1478
      %v2552 = vpop.f32.mrb[0].mxu0
      %v2553 = vadd.f32 %v2392, %v2552
      %v2554 = vpop.f32.mrb[0].mxu0
      %v2555 = vpop.f32.mrb[0].mxu0
      %v2556 = vadd.f32 %v2395, %v2555
      %v2557 = vpop.f32.mrb[0].mxu0
      %2558 = vmatprep.mubr.bf16.mxu0 %v1636
      %2559 = vmatmul.mubr.bf16.gmra.mrb[0].mxu0 %v1490
      %v2560 = vpop.f32.mrb[0].mxu0
      %v2561 = vadd.f32 %v2400, %v2560
      %v2562 = vpop.f32.mrb[0].mxu0
      %v2563 = vpop.f32.mrb[0].mxu0
      %v2564 = vadd.f32 %v2403, %v2563
      %v2565 = vpop.f32.mrb[0].mxu0
      %2566 = vmatprep.mubr.bf16.mxu0 %v1639
      %2567 = vmatmul.mubr.bf16.gmra.mrb[0].mxu0 %v1502
      %v2568 = vpop.f32.mrb[0].mxu0
      %v2569 = vadd.f32 %v2408, %v2568
      %v2570 = vpop.f32.mrb[0].mxu0
      %v2571 = vpop.f32.mrb[0].mxu0
      %v2572 = vadd.f32 %v2411, %v2571
      %v2573 = vpop.f32.mrb[0].mxu0
      %2574 = vmatprep.mubr.bf16.mxu0 %v1642
      %2575 = vmatmul.mubr.bf16.gmra.mrb[0].mxu0 %v1514
      %v2576 = vpop.f32.mrb[0].mxu0
      %v2577 = vadd.f32 %v2416, %v2576
      %v2578 = vpop.f32.mrb[0].mxu0
      %v2579 = vpop.f32.mrb[0].mxu0
      %v2580 = vadd.f32 %v2419, %v2579
      %v2581 = vpop.f32.mrb[0].mxu0
      %2582 = vmatprep.mubr.bf16.mxu0 %v1645
      %2583 = vmatmul.mubr.bf16.gmra.mrb[0].mxu0 %v1526
      %v2584 = vpop.f32.mrb[0].mxu0
      %v2585 = vadd.f32 %v2424, %v2584
      %v2586 = vpop.f32.mrb[0].mxu0
      %v2587 = vpop.f32.mrb[0].mxu0
      %v2588 = vadd.f32 %v2427, %v2587
      %v2589 = vpop.f32.mrb[0].mxu0
      %2590 = vmatprep.mubr.bf16.mxu0 %v1648
      %2591 = vmatmul.mubr.bf16.gmra.mrb[0].mxu0 %v1538
      %v2592 = vpop.f32.mrb[0].mxu0
      %v2593 = vadd.f32 %v2432, %v2592
      %v2594 = vpop.f32.mrb[0].mxu0
      %v2595 = vpop.f32.mrb[0].mxu0
      %v2596 = vadd.f32 %v2435, %v2595
      %v2597 = vpop.f32.mrb[0].mxu0
      %2598 = vmatprep.mubr.bf16.mxu0 %v1651
      %2599 = vmatmul.mubr.bf16.gmra.mrb[0].mxu0 %v1550
      %v2600 = vpop.f32.mrb[0].mxu0
      %v2601 = vadd.f32 %v2440, %v2600
      %v2602 = vpop.f32.mrb[0].mxu0
      %v2603 = vpop.f32.mrb[0].mxu0
      %v2604 = vadd.f32 %v2443, %v2603
      %v2605 = vpop.f32.mrb[0].mxu0
      %2606 = vmatprep.mubr.bf16.mxu0 %v1654
      %2607 = vmatmul.mubr.bf16.gmra.mrb[0].mxu0 %v1562
      %v2608 = vpop.f32.mrb[0].mxu0
      %v2609 = vadd.f32 %v2448, %v2608
      %v2610 = vpop.f32.mrb[0].mxu0
      %v2611 = vpop.f32.mrb[0].mxu0
      %v2612 = vadd.f32 %v2451, %v2611
      %v2613 = vpop.f32.mrb[0].mxu0
      %2614 = vmatprep.mubr.bf16.mxu0 %v1657
      %2615 = vmatmul.mubr.bf16.gmra.mrb[0].mxu0 %v1574
      %v2616 = vpop.f32.mrb[0].mxu0
      %v2617 = vadd.f32 %v2456, %v2616
      %v2618 = vpop.f32.mrb[0].mxu0
      %v2619 = vpop.f32.mrb[0].mxu0
      %v2620 = vadd.f32 %v2459, %v2619
      %v2621 = vpop.f32.mrb[0].mxu0
      %2622 = vmatprep.mubr.bf16.mxu0 %v1660
      %2623 = vmatmul.mubr.bf16.gmra.mrb[0].mxu0 %v1586
      %v2624 = vpop.f32.mrb[0].mxu0
      %v2625 = vadd.f32 %v2464, %v2624
      %v2626 = vpop.f32.mrb[0].mxu0
      %v2627 = vpop.f32.mrb[0].mxu0
      %v2628 = vadd.f32 %v2467, %v2627
      %v2629 = vpop.f32.mrb[0].mxu0
      %2630 = vmatprep.mubr.bf16.mxu0 %v1663
      %2631 = vmatmul.mubr.bf16.gmra.mrb[0].mxu0 %v1598
      %v2632 = vpop.f32.mrb[0].mxu0
      %v2633 = vadd.f32 %v2472, %v2632
      %v2634 = vpop.f32.mrb[0].mxu0
      %v2635 = vpop.f32.mrb[0].mxu0
      %v2636 = vadd.f32 %v2475, %v2635
      %v2637 = vpop.f32.mrb[0].mxu0
      %2638 = vmatprep.mubr.bf16.mxu0 %v1704
      %2639 = vmatmul.mubr.bf16.gmra.mrb[0].mxu0 %v1700
      %v2640 = vpop.f32.mrb[0].mxu0
      %v2641 = vadd.f32 %v2480, %v2640
      %v2642 = vpop.f32.mrb[0].mxu0
      %v2643 = vpop.f32.mrb[0].mxu0
      %v2644 = vadd.f32 %v2483, %v2643
      %v2645 = vpop.f32.mrb[0].mxu0
      %2646 = vdwg.mxu0
      %2647 = vmatprep.subr.bf16.mxu0 0
      %2648 = vmatpush1.bf16.msra.mxu0 %v2068
      %2649 = vmatprep.subr.bf16.mxu0 0
      %2650 = vmatpush1.bf16.msra.mxu0 %v2069
      %2651 = vmatprep.subr.bf16.mxu0 0
      %2652 = vmatpush1.bf16.msra.mxu0 %v2070
      %2653 = vmatprep.subr.bf16.mxu0 0
      %2654 = vmatpush1.bf16.msra.mxu0 %v2071
      %2655 = vmatprep.subr.bf16.mxu0 0
      %2656 = vmatpush1.bf16.msra.mxu0 %v2072
      %2657 = vmatprep.subr.bf16.mxu0 0
      %2658 = vmatpush1.bf16.msra.mxu0 %v2073
      %2659 = vmatprep.subr.bf16.mxu0 0
      %2660 = vmatpush1.bf16.msra.mxu0 %v2074
      %2661 = vmatprep.subr.bf16.mxu0 0
      %2662 = vmatpush1.bf16.msra.mxu0 %v2075
      %2663 = vmatprep.subr.bf16.mxu0 0
      %2664 = vmatpush1.bf16.msra.mxu0 %v2076
      %2665 = vmatprep.subr.bf16.mxu0 0
      %2666 = vmatpush1.bf16.msra.mxu0 %v2077
      %2667 = vmatprep.subr.bf16.mxu0 0
      %2668 = vmatpush1.bf16.msra.mxu0 %v2078
      %2669 = vmatprep.subr.bf16.mxu0 0
      %2670 = vmatpush1.bf16.msra.mxu0 %v2079
      %2671 = vmatprep.subr.bf16.mxu0 0
      %2672 = vmatpush1.bf16.msra.mxu0 %v2080
      %2673 = vmatprep.subr.bf16.mxu0 0
      %2674 = vmatpush1.bf16.msra.mxu0 %v2081
      %2675 = vmatprep.subr.bf16.mxu0 0
      %2676 = vmatpush1.bf16.msra.mxu0 %v2082
      %2677 = vmatprep.subr.bf16.mxu0 0
      %2678 = vmatpush1.bf16.msra.mxu0 %v2083
      %2679 = vmatprep.mubr.bf16.mxu0 %v1442
      %2680 = vmatmul.mubr.bf16.gmra.mrb[0].mxu0 %v1328
      %v2681 = vpop.f32.mrb[0].mxu0
      %v2682 = vadd.f32 %v2521, %v2681
      %v2683 = vpop.f32.mrb[0].mxu0
      %v2684 = vpop.f32.mrb[0].mxu0
      %v2685 = vadd.f32 %v2524, %v2684
      %v2686 = vpop.f32.mrb[0].mxu0
      %2687 = vmatprep.mubr.bf16.mxu0 %v1454
      %2688 = vmatmul.mubr.bf16.gmra.mrb[0].mxu0 %v1329
      %v2689 = vpop.f32.mrb[0].mxu0
      %v2690 = vadd.f32 %v2529, %v2689
      %v2691 = vpop.f32.mrb[0].mxu0
      %v2692 = vpop.f32.mrb[0].mxu0
      %v2693 = vadd.f32 %v2532, %v2692
      %v2694 = vpop.f32.mrb[0].mxu0
      %2695 = vmatprep.mubr.bf16.mxu0 %v1466
      %2696 = vmatmul.mubr.bf16.gmra.mrb[0].mxu0 %v1330
      %v2697 = vpop.f32.mrb[0].mxu0
      %v2698 = vadd.f32 %v2537, %v2697
      %v2699 = vpop.f32.mrb[0].mxu0
      %v2700 = vpop.f32.mrb[0].mxu0
      %v2701 = vadd.f32 %v2540, %v2700
      %v2702 = vpop.f32.mrb[0].mxu0
      %2703 = vmatprep.mubr.bf16.mxu0 %v1478
      %2704 = vmatmul.mubr.bf16.gmra.mrb[0].mxu0 %v1331
      %v2705 = vpop.f32.mrb[0].mxu0
      %v2706 = vadd.f32 %v2545, %v2705
      %v2707 = vpop.f32.mrb[0].mxu0
      %v2708 = vpop.f32.mrb[0].mxu0
      %v2709 = vadd.f32 %v2548, %v2708
      %v2710 = vpop.f32.mrb[0].mxu0
      %2711 = vmatprep.mubr.bf16.mxu0 %v1490
      %2712 = vmatmul.mubr.bf16.gmra.mrb[0].mxu0 %v1332
      %v2713 = vpop.f32.mrb[0].mxu0
      %v2714 = vadd.f32 %v2553, %v2713
      %v2715 = vpop.f32.mrb[0].mxu0
      %v2716 = vpop.f32.mrb[0].mxu0
      %v2717 = vadd.f32 %v2556, %v2716
      %v2718 = vpop.f32.mrb[0].mxu0
      %2719 = vmatprep.mubr.bf16.mxu0 %v1502
      %2720 = vmatmul.mubr.bf16.gmra.mrb[0].mxu0 %v1333
      %v2721 = vpop.f32.mrb[0].mxu0
      %v2722 = vadd.f32 %v2561, %v2721
      %v2723 = vpop.f32.mrb[0].mxu0
      %v2724 = vpop.f32.mrb[0].mxu0
      %v2725 = vadd.f32 %v2564, %v2724
      %v2726 = vpop.f32.mrb[0].mxu0
      %2727 = vmatprep.mubr.bf16.mxu0 %v1514
      %2728 = vmatmul.mubr.bf16.gmra.mrb[0].mxu0 %v1334
      %v2729 = vpop.f32.mrb[0].mxu0
      %v2730 = vadd.f32 %v2569, %v2729
      %v2731 = vpop.f32.mrb[0].mxu0
      %v2732 = vpop.f32.mrb[0].mxu0
      %v2733 = vadd.f32 %v2572, %v2732
      %v2734 = vpop.f32.mrb[0].mxu0
      %2735 = vmatprep.mubr.bf16.mxu0 %v1526
      %2736 = vmatmul.mubr.bf16.gmra.mrb[0].mxu0 %v1335
      %v2737 = vpop.f32.mrb[0].mxu0
      %v2738 = vadd.f32 %v2577, %v2737
      %v2739 = vpop.f32.mrb[0].mxu0
      %v2740 = vpop.f32.mrb[0].mxu0
      %v2741 = vadd.f32 %v2580, %v2740
      %v2742 = vpop.f32.mrb[0].mxu0
      %2743 = vmatprep.mubr.bf16.mxu0 %v1538
      %2744 = vmatmul.mubr.bf16.gmra.mrb[0].mxu0 %v1336
      %v2745 = vpop.f32.mrb[0].mxu0
      %v2746 = vadd.f32 %v2585, %v2745
      %v2747 = vpop.f32.mrb[0].mxu0
      %v2748 = vpop.f32.mrb[0].mxu0
      %v2749 = vadd.f32 %v2588, %v2748
      %v2750 = vpop.f32.mrb[0].mxu0
      %2751 = vmatprep.mubr.bf16.mxu0 %v1550
      %2752 = vmatmul.mubr.bf16.gmra.mrb[0].mxu0 %v1337
      %v2753 = vpop.f32.mrb[0].mxu0
      %v2754 = vadd.f32 %v2593, %v2753
      %v2755 = vpop.f32.mrb[0].mxu0
      %v2756 = vpop.f32.mrb[0].mxu0
      %v2757 = vadd.f32 %v2596, %v2756
      %v2758 = vpop.f32.mrb[0].mxu0
      %2759 = vmatprep.mubr.bf16.mxu0 %v1562
      %2760 = vmatmul.mubr.bf16.gmra.mrb[0].mxu0 %v1338
      %v2761 = vpop.f32.mrb[0].mxu0
      %v2762 = vadd.f32 %v2601, %v2761
      %v2763 = vpop.f32.mrb[0].mxu0
      %v2764 = vpop.f32.mrb[0].mxu0
      %v2765 = vadd.f32 %v2604, %v2764
      %v2766 = vpop.f32.mrb[0].mxu0
      %2767 = vmatprep.mubr.bf16.mxu0 %v1574
      %2768 = vmatmul.mubr.bf16.gmra.mrb[0].mxu0 %v1339
      %v2769 = vpop.f32.mrb[0].mxu0
      %v2770 = vadd.f32 %v2609, %v2769
      %v2771 = vpop.f32.mrb[0].mxu0
      %v2772 = vpop.f32.mrb[0].mxu0
      %v2773 = vadd.f32 %v2612, %v2772
      %v2774 = vpop.f32.mrb[0].mxu0
      %2775 = vmatprep.mubr.bf16.mxu0 %v1586
      %2776 = vmatmul.mubr.bf16.gmra.mrb[0].mxu0 %v1340
      %v2777 = vpop.f32.mrb[0].mxu0
      %v2778 = vadd.f32 %v2617, %v2777
      %v2779 = vpop.f32.mrb[0].mxu0
      %v2780 = vpop.f32.mrb[0].mxu0
      %v2781 = vadd.f32 %v2620, %v2780
      %v2782 = vpop.f32.mrb[0].mxu0
      %2783 = vmatprep.mubr.bf16.mxu0 %v1598
      %2784 = vmatmul.mubr.bf16.gmra.mrb[0].mxu0 %v1341
      %v2785 = vpop.f32.mrb[0].mxu0
      %v2786 = vadd.f32 %v2625, %v2785
      %v2787 = vpop.f32.mrb[0].mxu0
      %v2788 = vpop.f32.mrb[0].mxu0
      %v2789 = vadd.f32 %v2628, %v2788
      %v2790 = vpop.f32.mrb[0].mxu0
      %2791 = vmatprep.mubr.bf16.mxu0 %v1700
      %2792 = vmatmul.mubr.bf16.gmra.mrb[0].mxu0 %v1684
      %v2793 = vpop.f32.mrb[0].mxu0
      %v2794 = vadd.f32 %v2633, %v2793
      %v2795 = vpop.f32.mrb[0].mxu0
      %v2796 = vpop.f32.mrb[0].mxu0
      %v2797 = vadd.f32 %v2636, %v2796
      %v2798 = vpop.f32.mrb[0].mxu0
      %2799 = vmatprep.mubr.bf16.mxu0 %v1726
      %2800 = vmatmul.mubr.bf16.gmra.mrb[0].mxu0 %v1710
      %v2801 = vpop.f32.mrb[0].mxu0
      %v2802 = vadd.f32 %v2641, %v2801
      %v2803 = vpop.f32.mrb[0].mxu0
      %v2804 = vpop.f32.mrb[0].mxu0
      %v2805 = vadd.f32 %v2644, %v2804
      %v2806 = vpop.f32.mrb[0].mxu0
      %2807 = vdwg.mxu0
      %2808 = vmatprep.subr.bf16.mxu0 0
      %2809 = vmatpush1.bf16.msra.mxu0 %v2084
      %2810 = vmatprep.subr.bf16.mxu0 0
      %2811 = vmatpush1.bf16.msra.mxu0 %v2085
      %2812 = vmatprep.subr.bf16.mxu0 0
      %2813 = vmatpush1.bf16.msra.mxu0 %v2086
      %2814 = vmatprep.subr.bf16.mxu0 0
      %2815 = vmatpush1.bf16.msra.mxu0 %v2087
      %2816 = vmatprep.subr.bf16.mxu0 0
      %2817 = vmatpush1.bf16.msra.mxu0 %v2088
      %2818 = vmatprep.subr.bf16.mxu0 0
      %2819 = vmatpush1.bf16.msra.mxu0 %v2089
      %2820 = vmatprep.subr.bf16.mxu0 0
      %2821 = vmatpush1.bf16.msra.mxu0 %v2090
      %2822 = vmatprep.subr.bf16.mxu0 0
      %2823 = vmatpush1.bf16.msra.mxu0 %v2091
      %2824 = vmatprep.subr.bf16.mxu0 0
      %2825 = vmatpush1.bf16.msra.mxu0 0
      %2826 = vmatprep.subr.bf16.mxu0 0
      %2827 = vmatpush1.bf16.msra.mxu0 0
      %2828 = vmatprep.subr.bf16.mxu0 0
      %2829 = vmatpush1.bf16.msra.mxu0 0
      %2830 = vmatprep.subr.bf16.mxu0 0
      %2831 = vmatpush1.bf16.msra.mxu0 0
      %2832 = vmatprep.subr.bf16.mxu0 0
      %2833 = vmatpush1.bf16.msra.mxu0 0
      %2834 = vmatprep.subr.bf16.mxu0 0
      %2835 = vmatpush1.bf16.msra.mxu0 0
      %2836 = vmatprep.subr.bf16.mxu0 0
      %2837 = vmatpush1.bf16.msra.mxu0 0
      %2838 = vmatprep.subr.bf16.mxu0 0
      %2839 = vmatpush1.bf16.msra.mxu0 0
      %2840 = vmatprep.mubr.bf16.mxu0 0
      %2841 = vmatmul.mubr.bf16.gmra.mrb[0].mxu0 %v1624
      %v2842 = vpop.f32.mrb[0].mxu0
      %v2843 = vadd.f32 %v2682, %v2842
      %v2844 = vpop.f32.mrb[0].mxu0
      %v2845 = vpop.f32.mrb[0].mxu0
      %v2846 = vadd.f32 %v2685, %v2845
      %v2847 = vpop.f32.mrb[0].mxu0
      %2848 = vmatprep.mubr.bf16.mxu0 0
      %2849 = vmatmul.mubr.bf16.gmra.mrb[0].mxu0 %v1627
      %v2850 = vpop.f32.mrb[0].mxu0
      %v2851 = vadd.f32 %v2690, %v2850
      %v2852 = vpop.f32.mrb[0].mxu0
      %v2853 = vpop.f32.mrb[0].mxu0
      %v2854 = vadd.f32 %v2693, %v2853
      %v2855 = vpop.f32.mrb[0].mxu0
      %2856 = vmatprep.mubr.bf16.mxu0 0
      %2857 = vmatmul.mubr.bf16.gmra.mrb[0].mxu0 %v1630
      %v2858 = vpop.f32.mrb[0].mxu0
      %v2859 = vadd.f32 %v2698, %v2858
      %v2860 = vpop.f32.mrb[0].mxu0
      %v2861 = vpop.f32.mrb[0].mxu0
      %v2862 = vadd.f32 %v2701, %v2861
      %v2863 = vpop.f32.mrb[0].mxu0
      %2864 = vmatprep.mubr.bf16.mxu0 0
      %2865 = vmatmul.mubr.bf16.gmra.mrb[0].mxu0 %v1633
      %v2866 = vpop.f32.mrb[0].mxu0
      %v2867 = vadd.f32 %v2706, %v2866
      %v2868 = vpop.f32.mrb[0].mxu0
      %v2869 = vpop.f32.mrb[0].mxu0
      %v2870 = vadd.f32 %v2709, %v2869
      %v2871 = vpop.f32.mrb[0].mxu0
      %2872 = vmatprep.mubr.bf16.mxu0 0
      %2873 = vmatmul.mubr.bf16.gmra.mrb[0].mxu0 %v1636
      %v2874 = vpop.f32.mrb[0].mxu0
      %v2875 = vadd.f32 %v2714, %v2874
      %v2876 = vpop.f32.mrb[0].mxu0
      %v2877 = vpop.f32.mrb[0].mxu0
      %v2878 = vadd.f32 %v2717, %v2877
      %v2879 = vpop.f32.mrb[0].mxu0
      %2880 = vmatprep.mubr.bf16.mxu0 0
      %2881 = vmatmul.mubr.bf16.gmra.mrb[0].mxu0 %v1639
      %v2882 = vpop.f32.mrb[0].mxu0
      %v2883 = vadd.f32 %v2722, %v2882
      %v2884 = vpop.f32.mrb[0].mxu0
      %v2885 = vpop.f32.mrb[0].mxu0
      %v2886 = vadd.f32 %v2725, %v2885
      %v2887 = vpop.f32.mrb[0].mxu0
      %2888 = vmatprep.mubr.bf16.mxu0 0
      %2889 = vmatmul.mubr.bf16.gmra.mrb[0].mxu0 %v1642
      %v2890 = vpop.f32.mrb[0].mxu0
      %v2891 = vadd.f32 %v2730, %v2890
      %v2892 = vpop.f32.mrb[0].mxu0
      %v2893 = vpop.f32.mrb[0].mxu0
      %v2894 = vadd.f32 %v2733, %v2893
      %v2895 = vpop.f32.mrb[0].mxu0
      %2896 = vmatprep.mubr.bf16.mxu0 0
      %2897 = vmatmul.mubr.bf16.gmra.mrb[0].mxu0 %v1645
      %v2898 = vpop.f32.mrb[0].mxu0
      %v2899 = vadd.f32 %v2738, %v2898
      %v2900 = vpop.f32.mrb[0].mxu0
      %v2901 = vpop.f32.mrb[0].mxu0
      %v2902 = vadd.f32 %v2741, %v2901
      %v2903 = vpop.f32.mrb[0].mxu0
      %2904 = vmatprep.mubr.bf16.mxu0 0
      %2905 = vmatmul.mubr.bf16.gmra.mrb[0].mxu0 %v1648
      %v2906 = vpop.f32.mrb[0].mxu0
      %v2907 = vadd.f32 %v2746, %v2906
      %v2908 = vpop.f32.mrb[0].mxu0
      %v2909 = vpop.f32.mrb[0].mxu0
      %v2910 = vadd.f32 %v2749, %v2909
      %v2911 = vpop.f32.mrb[0].mxu0
      %2912 = vmatprep.mubr.bf16.mxu0 0
      %2913 = vmatmul.mubr.bf16.gmra.mrb[0].mxu0 %v1651
      %v2914 = vpop.f32.mrb[0].mxu0
      %v2915 = vadd.f32 %v2754, %v2914
      %v2916 = vpop.f32.mrb[0].mxu0
      %v2917 = vpop.f32.mrb[0].mxu0
      %v2918 = vadd.f32 %v2757, %v2917
      %v2919 = vpop.f32.mrb[0].mxu0
      %2920 = vmatprep.mubr.bf16.mxu0 0
      %2921 = vmatmul.mubr.bf16.gmra.mrb[0].mxu0 %v1654
      %v2922 = vpop.f32.mrb[0].mxu0
      %v2923 = vadd.f32 %v2762, %v2922
      %v2924 = vpop.f32.mrb[0].mxu0
      %v2925 = vpop.f32.mrb[0].mxu0
      %v2926 = vadd.f32 %v2765, %v2925
      %v2927 = vpop.f32.mrb[0].mxu0
      %2928 = vmatprep.mubr.bf16.mxu0 0
      %2929 = vmatmul.mubr.bf16.gmra.mrb[0].mxu0 %v1657
      %v2930 = vpop.f32.mrb[0].mxu0
      %v2931 = vadd.f32 %v2770, %v2930
      %v2932 = vpop.f32.mrb[0].mxu0
      %v2933 = vpop.f32.mrb[0].mxu0
      %v2934 = vadd.f32 %v2773, %v2933
      %v2935 = vpop.f32.mrb[0].mxu0
      %2936 = vmatprep.mubr.bf16.mxu0 0
      %2937 = vmatmul.mubr.bf16.gmra.mrb[0].mxu0 %v1660
      %v2938 = vpop.f32.mrb[0].mxu0
      %v2939 = vadd.f32 %v2778, %v2938
      %v2940 = vpop.f32.mrb[0].mxu0
      %v2941 = vpop.f32.mrb[0].mxu0
      %v2942 = vadd.f32 %v2781, %v2941
      %v2943 = vpop.f32.mrb[0].mxu0
      %2944 = vmatprep.mubr.bf16.mxu0 0
      %2945 = vmatmul.mubr.bf16.gmra.mrb[0].mxu0 %v1663
      %v2946 = vpop.f32.mrb[0].mxu0
      %v2947 = vadd.f32 %v2786, %v2946
      %v2948 = vpop.f32.mrb[0].mxu0
      %v2949 = vpop.f32.mrb[0].mxu0
      %v2950 = vadd.f32 %v2789, %v2949
      %v2951 = vpop.f32.mrb[0].mxu0
      %2952 = vmatprep.mubr.bf16.mxu0 0
      %2953 = vmatmul.mubr.bf16.gmra.mrb[0].mxu0 %v1704
      %v2954 = vpop.f32.mrb[0].mxu0
      %v2955 = vadd.f32 %v2794, %v2954
      %v2956 = vpop.f32.mrb[0].mxu0
      %v2957 = vpop.f32.mrb[0].mxu0
      %v2958 = vadd.f32 %v2797, %v2957
      %v2959 = vpop.f32.mrb[0].mxu0
      %2960 = vmatprep.mubr.bf16.mxu0 0
      %2961 = vmatmul.mubr.bf16.gmra.mrb[0].mxu0 %v1730
      %v2962 = vpop.f32.mrb[0].mxu0
      %v2963 = vadd.f32 %v2802, %v2962
      %v2964 = vpop.f32.mrb[0].mxu0
      %v2965 = vpop.f32.mrb[0].mxu0
      %v2966 = vadd.f32 %v2805, %v2965
      %v2967 = vpop.f32.mrb[0].mxu0
      %2968 = vdwg.mxu0
      %v2969 = vadd.f32 %v2843, %v2846
      %v2970 = vadd.f32 %v2969, %v2851
      %v2971 = vadd.f32 %v2970, %v2854
      %v2972 = vadd.f32 %v2971, %v2859
      %v2973 = vadd.f32 %v2972, %v2862
      %v2974 = vadd.f32 %v2973, %v2867
      %v2975 = vadd.f32 %v2974, %v2870
      %v2976 = vadd.f32 %v2975, %v2875
      %v2977 = vadd.f32 %v2976, %v2878
      %v2978 = vadd.f32 %v2977, %v2883
      %v2979 = vadd.f32 %v2978, %v2886
      %v2980 = vadd.f32 %v2979, %v2891
      %v2981 = vadd.f32 %v2980, %v2894
      %v2982 = vadd.f32 %v2981, %v2899
      %v2983 = vadd.f32 %v2982, %v2902
      %v2984 = vadd.f32 %v2983, %v2907
      %v2985 = vadd.f32 %v2984, %v2910
      %v2986 = vadd.f32 %v2985, %v2915
      %v2987 = vadd.f32 %v2986, %v2918
      %v2988 = vadd.f32 %v2987, %v2923
      %v2989 = vadd.f32 %v2988, %v2926
      %v2990 = vadd.f32 %v2989, %v2931
      %v2991 = vadd.f32 %v2990, %v2934
      %v2992 = vadd.f32 %v2991, %v2939
      %v2993 = vadd.f32 %v2992, %v2942
      %v2994 = vadd.f32 %v2993, %v2947
      %v2995 = vadd.f32 %v2994, %v2950
      %v2996 = vadd.f32 %v2995, %v2955
      %v2997 = vadd.f32 %v2996, %v2958
      %v2998 = vadd.f32 %v2997, %v2963
      %v2999 = vadd.f32 %v2998, %v2966
      %v3000 = vrot.slane %v2999, 4
      %v3001 = vadd.f32 %v2999, %v3000
      %v3002 = vrot.slane %v3001, 2
      %v3003 = vadd.f32 %v3001, %v3002
      %v3004 = vrot.slane %v3003, 1
      %v3005 = vadd.f32 %v3003, %v3004
      %3006 = vst [vmem:[%s235] sm:$0x1] %v3005
      %v3007 = vmul.f32 %v2843, %v2843
      %v3008 = vmul.f32 %v2846, %v2846
      %v3009 = vmul.f32 %v2851, %v2851
      %v3010 = vmul.f32 %v2854, %v2854
      %v3011 = vmul.f32 %v2859, %v2859
      %v3012 = vmul.f32 %v2862, %v2862
      %v3013 = vmul.f32 %v2867, %v2867
      %v3014 = vmul.f32 %v2870, %v2870
      %v3015 = vmul.f32 %v2875, %v2875
      %v3016 = vmul.f32 %v2878, %v2878
      %v3017 = vmul.f32 %v2883, %v2883
      %v3018 = vmul.f32 %v2886, %v2886
      %v3019 = vmul.f32 %v2891, %v2891
      %v3020 = vmul.f32 %v2894, %v2894
      %v3021 = vmul.f32 %v2899, %v2899
      %v3022 = vmul.f32 %v2902, %v2902
      %v3023 = vmul.f32 %v2907, %v2907
      %v3024 = vmul.f32 %v2910, %v2910
      %v3025 = vmul.f32 %v2915, %v2915
      %v3026 = vmul.f32 %v2918, %v2918
      %v3027 = vmul.f32 %v2923, %v2923
      %v3028 = vmul.f32 %v2926, %v2926
      %v3029 = vmul.f32 %v2931, %v2931
      %v3030 = vmul.f32 %v2934, %v2934
      %v3031 = vmul.f32 %v2939, %v2939
      %v3032 = vmul.f32 %v2942, %v2942
      %v3033 = vmul.f32 %v2947, %v2947
      %v3034 = vmul.f32 %v2950, %v2950
      %v3035 = vmul.f32 %v2955, %v2955
      %v3036 = vmul.f32 %v2958, %v2958
      %v3037 = vmul.f32 %v2963, %v2963
      %v3038 = vmul.f32 %v2966, %v2966
      %v3039 = vadd.f32 %v3007, %v3008
      %v3040 = vadd.f32 %v3039, %v3009
      %v3041 = vadd.f32 %v3040, %v3010
      %v3042 = vadd.f32 %v3041, %v3011
      %v3043 = vadd.f32 %v3042, %v3012
      %v3044 = vadd.f32 %v3043, %v3013
      %v3045 = vadd.f32 %v3044, %v3014
      %v3046 = vadd.f32 %v3045, %v3015
      %v3047 = vadd.f32 %v3046, %v3016
      %v3048 = vadd.f32 %v3047, %v3017
      %v3049 = vadd.f32 %v3048, %v3018
      %v3050 = vadd.f32 %v3049, %v3019
      %v3051 = vadd.f32 %v3050, %v3020
      %v3052 = vadd.f32 %v3051, %v3021
      %v3053 = vadd.f32 %v3052, %v3022
      %v3054 = vadd.f32 %v3053, %v3023
      %v3055 = vadd.f32 %v3054, %v3024
      %v3056 = vadd.f32 %v3055, %v3025
      %v3057 = vadd.f32 %v3056, %v3026
      %v3058 = vadd.f32 %v3057, %v3027
      %v3059 = vadd.f32 %v3058, %v3028
      %v3060 = vadd.f32 %v3059, %v3029
      %v3061 = vadd.f32 %v3060, %v3030
      %v3062 = vadd.f32 %v3061, %v3031
      %v3063 = vadd.f32 %v3062, %v3032
      %v3064 = vadd.f32 %v3063, %v3033
      %v3065 = vadd.f32 %v3064, %v3034
      %v3066 = vadd.f32 %v3065, %v3035
      %v3067 = vadd.f32 %v3066, %v3036
      %v3068 = vadd.f32 %v3067, %v3037
      %v3069 = vadd.f32 %v3068, %v3038
      %v3070 = vrot.slane %v3069, 4
      %v3071 = vadd.f32 %v3069, %v3070
      %v3072 = vrot.slane %v3071, 2
      %v3073 = vadd.f32 %v3071, %v3072
      %v3074 = vrot.slane %v3073, 1
      %v3075 = vadd.f32 %v3073, %v3074
      %3076 = vst [vmem:[%s235 + $0x1] sm:$0x1] %v3075
      %v3077 = vpack.c.bf16 %v2846, %v2843
      %v3078 = vpack.c.bf16 %v2854, %v2851
      %v3079 = vpack.c.bf16 %v2862, %v2859
      %v3080 = vpack.c.bf16 %v2870, %v2867
      %v3081 = vpack.c.bf16 %v2878, %v2875
      %v3082 = vpack.c.bf16 %v2886, %v2883
      %v3083 = vpack.c.bf16 %v2894, %v2891
      %v3084 = vpack.c.bf16 %v2902, %v2899
      %v3085 = vpack.c.bf16 %v2910, %v2907
      %v3086 = vpack.c.bf16 %v2918, %v2915
      %v3087 = vpack.c.bf16 %v2926, %v2923
      %v3088 = vpack.c.bf16 %v2934, %v2931
      %v3089 = vpack.c.bf16 %v2942, %v2939
      %v3090 = vpack.c.bf16 %v2950, %v2947
      %v3091 = vpack.c.bf16 %v2958, %v2955
      %v3092 = vpack.c.bf16 %v2966, %v2963
      %v3109 = vunpack.c.l.b16 %v3077
      %v3110 = vunpack.c.h.b16 %v3077
      %v3111 = vunpack.c.l.b16 %v3078
      %v3112 = vunpack.c.h.b16 %v3078
      %v3113 = vunpack.c.l.b16 %v3079
      %v3114 = vunpack.c.h.b16 %v3079
      %v3115 = vunpack.c.l.b16 %v3080
      %v3116 = vunpack.c.h.b16 %v3080
      %v3117 = vunpack.c.l.b16 %v3081
      %v3118 = vunpack.c.h.b16 %v3081
      %v3119 = vunpack.c.l.b16 %v3082
      %v3120 = vunpack.c.h.b16 %v3082
      %v3121 = vunpack.c.l.b16 %v3083
      %v3122 = vunpack.c.h.b16 %v3083
      %v3123 = vunpack.c.l.b16 %v3084
      %v3124 = vunpack.c.h.b16 %v3084
      %v3125 = vunpack.c.l.b16 %v3085
      %v3126 = vunpack.c.h.b16 %v3085
      %v3127 = vunpack.c.l.b16 %v3086
      %v3128 = vunpack.c.h.b16 %v3086
      %v3129 = vunpack.c.l.b16 %v3087
      %v3130 = vunpack.c.h.b16 %v3087
      %v3131 = vunpack.c.l.b16 %v3088
      %v3132 = vunpack.c.h.b16 %v3088
      %v3133 = vunpack.c.l.b16 %v3089
      %v3134 = vunpack.c.h.b16 %v3089
      %v3135 = vunpack.c.l.b16 %v3090
      %v3136 = vunpack.c.h.b16 %v3090
      %v3137 = vunpack.c.l.b16 %v3091
      %v3138 = vunpack.c.h.b16 %v3091
      %v3139 = vunpack.c.l.b16 %v3092
      %v3140 = vunpack.c.h.b16 %v3092
      %v3141 = vpack.c.b16 %v3109, %v3109
      %v3142 = vpack.c.b16 %v3110, %v3110
      %v3143 = vpack.c.b16 %v3111, %v3111
      %v3144 = vpack.c.b16 %v3112, %v3112
      %v3145 = vpack.c.b16 %v3113, %v3113
      %v3146 = vpack.c.b16 %v3114, %v3114
      %v3147 = vpack.c.b16 %v3115, %v3115
      %v3148 = vpack.c.b16 %v3116, %v3116
      %v3149 = vpack.c.b16 %v3117, %v3117
      %v3150 = vpack.c.b16 %v3118, %v3118
      %v3151 = vpack.c.b16 %v3119, %v3119
      %v3152 = vpack.c.b16 %v3120, %v3120
      %v3153 = vpack.c.b16 %v3121, %v3121
      %v3154 = vpack.c.b16 %v3122, %v3122
      %v3155 = vpack.c.b16 %v3123, %v3123
      %v3156 = vpack.c.b16 %v3124, %v3124
      %v3157 = vpack.c.b16 %v3125, %v3125
      %v3158 = vpack.c.b16 %v3126, %v3126
      %v3159 = vpack.c.b16 %v3127, %v3127
      %v3160 = vpack.c.b16 %v3128, %v3128
      %v3161 = vpack.c.b16 %v3129, %v3129
      %v3162 = vpack.c.b16 %v3130, %v3130
      %v3163 = vpack.c.b16 %v3131, %v3131
      %v3164 = vpack.c.b16 %v3132, %v3132
      %v3165 = vpack.c.b16 %v3133, %v3133
      %v3166 = vpack.c.b16 %v3134, %v3134
      %v3167 = vpack.c.b16 %v3135, %v3135
      %v3168 = vpack.c.b16 %v3136, %v3136
      %v3169 = vpack.c.b16 %v3137, %v3137
      %v3170 = vpack.c.b16 %v3138, %v3138
      %v3171 = vpack.c.b16 %v3139, %v3139
      %v3172 = vpack.c.b16 %v3140, %v3140
      %3205 = vst [vmem:[%s231] sm:$0xf] %v3141
      %3206 = vst [vmem:[%s231 + $0x4] sm:$0xf] %v3142
      %3207 = vst [vmem:[%s231 + $0x8] sm:$0xf] %v3143
      %3208 = vst [vmem:[%s231 + $0xc] sm:$0xf] %v3144
      %3209 = vst [vmem:[%s231 + $0x10] sm:$0xf] %v3145
      %3210 = vst [vmem:[%s231 + $0x14] sm:$0xf] %v3146
      %3211 = vst [vmem:[%s231 + $0x18] sm:$0xf] %v3147
      %3212 = vst [vmem:[%s231 + $0x1c] sm:$0xf] %v3148
      %3213 = vst [vmem:[%s231 + $0x20] sm:$0xf] %v3149
      %3214 = vst [vmem:[%s231 + $0x24] sm:$0xf] %v3150
      %3215 = vst [vmem:[%s231 + $0x28] sm:$0xf] %v3151
      %3216 = vst [vmem:[%s231 + $0x2c] sm:$0xf] %v3152
      %3217 = vst [vmem:[%s231 + $0x30] sm:$0xf] %v3153
      %3218 = vst [vmem:[%s231 + $0x34] sm:$0xf] %v3154
      %3219 = vst [vmem:[%s231 + $0x38] sm:$0xf] %v3155
      %3220 = vst [vmem:[%s231 + $0x3c] sm:$0xf] %v3156
      %3221 = vst [vmem:[%s231 + $0x40] sm:$0xf] %v3157
      %3222 = vst [vmem:[%s231 + $0x44] sm:$0xf] %v3158
      %3223 = vst [vmem:[%s231 + $0x48] sm:$0xf] %v3159
      %3224 = vst [vmem:[%s231 + $0x4c] sm:$0xf] %v3160
      %3225 = vst [vmem:[%s231 + $0x50] sm:$0xf] %v3161
      %3226 = vst [vmem:[%s231 + $0x54] sm:$0xf] %v3162
      %3227 = vst [vmem:[%s231 + $0x58] sm:$0xf] %v3163
      %3228 = vst [vmem:[%s231 + $0x5c] sm:$0xf] %v3164
      %3229 = vst [vmem:[%s231 + $0x60] sm:$0xf] %v3165
      %3230 = vst [vmem:[%s231 + $0x64] sm:$0xf] %v3166
      %3231 = vst [vmem:[%s231 + $0x68] sm:$0xf] %v3167
      %3232 = vst [vmem:[%s231 + $0x6c] sm:$0xf] %v3168
      %3233 = vst [vmem:[%s231 + $0x70] sm:$0xf] %v3169
      %3234 = vst [vmem:[%s231 + $0x74] sm:$0xf] %v3170
      %3235 = vst [vmem:[%s231 + $0x78] sm:$0xf] %v3171
      %3236 = vst [vmem:[%s231 + $0x7c] sm:$0xf] %v3172
      %p3237 = scmp.lt.s32.totalorder %s17, 1
      %s3238 = scalar_select %p3237, %s17, 1
      %s3239 = smul.addr %s3238, 32
      %s3240 = smul.addr %s3239, 4
      %s3241 = scalar_lea.vmem %s4, %s3240
      %p3242 = scmp.lt.s32.totalorder %s17, 1
      %s3243 = scalar_select %p3242, %s17, 1
      %s3244 = smul.addr %s3243, 2
      %s3245 = scalar_lea.vmem %s5, %s3244
      // Predicated region
      $region37: #{basic_block_forward.4} parent=35 // pred_check
        %p3246 = pneg %p124
      $region38: #{basic_block_forward.4} parent=35 // pred_check_branch
        %3248 = sbr.rel (%p3246) target = $region40
      $region39: #{basic_block_forward.4} parent=35 // pred_region
        _
      $region40: #{basic_block_forward.4} parent=35 // pred_fallthru
        _
      // Predicated region
      $region41: #{basic_block_forward.4} parent=35 // pred_check
        %p3249 = pneg %p150
      $region42: #{basic_block_forward.4} parent=35 // pred_check_branch
        %3251 = sbr.rel (%p3249) target = $region44
      $region43: #{basic_block_forward.4} parent=35 // pred_region
        _
      $region44: #{basic_block_forward.4} parent=35 // pred_fallthru
        _
    $region36: #{basic_block_forward.4} parent=5 // pred_fallthru
      _
    %p3252 = scmp.le.s32.totalorder 2, %s12
    // Predicated region
    $region45: #{basic_block_forward.4} parent=5 // pred_check
      %p3253 = pneg %p3252
    $region46: #{basic_block_forward.4} parent=5 // pred_check_branch
      %3255 = sbr.rel (%p3253) target = $region48
    $region47: #{basic_block_forward.4} parent=5 // pred_region
      %s3256 = ssub.s32 %s12, 2
      // Predicated region
      $region49: #{basic_block_forward.4} parent=47 // pred_check
        %p3257 = pneg %p130
      $region50: #{basic_block_forward.4} parent=47 // pred_check_branch
        %3259 = sbr.rel (%p3257) target = $region52
      $region51: #{basic_block_forward.4} parent=47 // pred_region
        %p3260 = scmp.lt.s32.totalorder %s18, 1
        %s3261 = scalar_select %p3260, %s18, 1
        %s3262 = smul.addr %s3261, 32
        %s3263 = smul.addr %s3262, 4
        %s3264 = scalar_lea.vmem %s4, %s3263
      $region52: #{basic_block_forward.4} parent=47 // pred_fallthru
        _
      // Predicated region
      $region53: #{basic_block_forward.4} parent=47 // pred_check
        %p3265 = pneg %p156
      $region54: #{basic_block_forward.4} parent=47 // pred_check_branch
        %3267 = sbr.rel (%p3265) target = $region56
      $region55: #{basic_block_forward.4} parent=47 // pred_region
        %p3268 = scmp.lt.s32.totalorder %s18, 1
        %s3269 = scalar_select %p3268, %s18, 1
        %s3270 = smul.addr %s3269, 2
        %s3271 = scalar_lea.vmem %s5, %s3270
      $region56: #{basic_block_forward.4} parent=47 // pred_fallthru
        _
    $region48: #{basic_block_forward.4} parent=5 // pred_fallthru
      _
  $region6: #{basic_block_forward.4} parent=0 // loop_footer
    %s16 = sadd.s32 1, %s12
  $region7: #{basic_block_forward.4} parent=0 // loop_footer_branch
    %11 = sbr.rel target = $region3
  $region8: #{basic_block_forward.4} parent=0 // loop_exit
    _

</llo_original>
